<compile_context>
chip_gen: v5e
topology: v5e:2x2
jax: 0.10.0
libtpu: 0.0.40
codegen_flags: <defaults>
</compile_context>

<pallas_src>
import numpy as np
import jax
import jax.numpy as jnp
from jax.experimental import pallas as pl
from jax.experimental.pallas import tpu as pltpu


TB = 8   # images per grid step; must be a multiple of 8 so that the qy pooling
         # halves (TB*Hp rows) and the fc ip halves (TB rows) stay sublane-aligned


# ----------------------------- Pallas kernel ------------------------------- #

def _stage(f, s_ref, g_ref, b_ref):
    """One fused conv + bias + 2x2-maxpool + relu stage for a block of TB images.

    f      : (TB*H, 128)         stacked input maps; rows=(image, row),
                                 lanes=(col, chan) zero-padded to 128
    s_ref  : (kh, 2*TB*Hp, TB*H) block-diagonal 0/1 row gather; folds the dy conv
                                 taps, the vertical zero padding and BOTH vertical
                                 pooling phases qy
    g_ref  : (kh*128, 256)       conv weights folded over dx + horizontal zero
                                 padding + BOTH horizontal pooling phases qx
                                 (cols = qx*128 + (jp, cout), 128-lane padded)
    b_ref  : (1, 128)            bias tiled over jp (zero in the padded lanes)
    returns: (TB*Hp, 128)        pooled+relu maps in the same layout as `f`
    """
    kh = s_ref.shape[0]
    hpb = s_ref.shape[1] // 2
    t = [jnp.dot(s_ref[dy], f, preferred_element_type=jnp.float32)
         for dy in range(kh)]                                   # kh x (2*hpb, 128)
    z = jnp.dot(jnp.concatenate(t, axis=1), g_ref[...],
                preferred_element_type=jnp.float32)             # (2*hpb, 256)
    zq = jnp.maximum(z[:hpb, :], z[hpb:, :])                    # pool over qy
    m = jnp.maximum(zq[:, :128], zq[:, 128:])                   # pool over qx
    return jnp.maximum(m + b_ref[...], 0.0)                     # bias once, relu


def _net_kernel(x_ref, s1, g1, b1, s2, g2, b2, s3, g3, b3,
                wfc, bfc, wfc2, bfc2, o_ref):
    tb = o_ref.shape[0]
    f1 = x_ref[...]                     # (tb*28, 128)  rows = (image, row)
    f2 = _stage(f1, s1, g1, b1)         # (tb*14, 128)  rows = (image, ip)
    f3 = _stage(f2, s2, g2, b2)         # (tb*5,  128)  rows = (image, ip)
    f4 = _stage(f3, s3, g3, b3)         # (2*tb,  128)  rows = (ip, image)  [s3 order]
    # fc head: the PyTorch x.view(B,-1) flatten is folded into wfc's layout;
    # NO relu between fc and fc2 (matches the module), relu applied at the end.
    h = (jnp.dot(f4[:tb, :], wfc[0], preferred_element_type=jnp.float32)
         + jnp.dot(f4[tb:, :], wfc[1], preferred_element_type=jnp.float32)
         + bfc[...])
    y = jnp.dot(h, wfc2[...], preferred_element_type=jnp.float32) + bfc2[...]
    o_ref[...] = jnp.maximum(y, 0.0)


# ------------------------------ JAX wrapper --------------------------------- #

@jax.jit
def net_forward(kp, x):
    """x: (B, 1, 28, 28) float32 -> (B, 10).  kp = prepare_params(...)."""
    B = x.shape[0]
    nb = -(-B // TB)                    # grid length (blocks of TB images)
    Bp = nb * TB
    x2 = x.reshape(B, 28, 28).astype(jnp.float32)
    if Bp != B:                         # pad a ragged batch with zero images
        x2 = jnp.pad(x2, ((0, Bp - B), (0, 0), (0, 0)))
    # Stack images along rows (contiguity-preserving reshape, done in XLA) and
    # zero-pad the lane axis to 128 so every in-kernel slice/concat is aligned.
    xr = jnp.pad(x2.reshape(Bp * 28, 28), ((0, 0), (0, 128 - 28)))

    def full(a):
        return pl.BlockSpec(a.shape, lambda i, _nd=a.ndim: (0,) * _nd)

    operands = (xr, kp["s1"], kp["g1"], kp["b1"], kp["s2"], kp["g2"], kp["b2"],
                kp["s3"], kp["g3"], kp["b3"], kp["wfc"], kp["bfc"],
                kp["wfc2"], kp["bfc2"])
    in_specs = [pl.BlockSpec((TB * 28, 128), lambda i: (i, 0))]
    in_specs += [full(a) for a in operands[1:]]

    out = pl.pallas_call(
        _net_kernel,
        out_shape=jax.ShapeDtypeStruct((Bp, 10), jnp.float32),
        grid=(nb,),
        in_specs=in_specs,
        out_specs=pl.BlockSpec((TB, 10), lambda i: (i, 0)),
        compiler_params=pltpu.CompilerParams(
            dimension_semantics=("parallel",)),   # batch blocks over cores (v7x)
    )(*operands)
    return out[:B]


# --------------------- one-time weight packing (host) ----------------------- #

def _block_row_gather(h_in, pad, kh, tb, ip_major=False):
    """Block-diagonal 0/1 row-gather matrices, shape (kh, 2*tb*hp, tb*h_in).

    Entry [dy, r, b*h_in + h] = 1 iff h == 2*ip + qy + dy - pad; the output row r
    encodes (qy, b, ip) by default or (qy, ip, b) when ip_major=True.  Source
    rows that fall into the vertical zero padding simply yield all-zero rows."""
    hp = (h_in + 2 * pad - kh + 1) // 2
    s = np.zeros((kh, 2 * tb * hp, tb * h_in), np.float32)
    for dy in range(kh):
        for qy in range(2):
            for ip in range(hp):
                src = 2 * ip + qy + dy - pad
                if not 0 <= src < h_in:
                    continue
                for b in range(tb):
                    r = qy * tb * hp + (ip * tb + b if ip_major else b * hp + ip)
                    s[dy, r, b * h_in + src] = 1.0
    return jnp.asarray(s)


def _folded_conv_weights(w, w_in, pad):
    """Folded conv weights G, shape (kh*128, 256).

    Row index = dy*128 + (col*cin + ci)   (matches the dy-concatenated, 128-lane
                                           padded row-gathered input)
    Col index = qx*128 + (jp*cout + co)   (both horizontal pooling phases, each
                                           zero-padded to 128 lanes)
    Folds the dx taps and the horizontal zero padding."""
    w = np.asarray(w, np.float32)
    cout, cin, kh, kw = w.shape
    wp = (w_in + 2 * pad - kw + 1) // 2
    col = np.arange(w_in)[:, None, None, None]
    qx = np.arange(2)[None, :, None, None]
    jp = np.arange(wp)[None, None, :, None]
    dx = np.arange(kw)[None, None, None, :]
    ind = (col == 2 * jp + qx + dx - pad).astype(np.float32)    # (w_in, 2, wp, kw)
    g = np.einsum("wqjx,ocdx->dwcqjo", ind, w)                  # (kh,w_in,cin,2,wp,cout)
    out = np.zeros((kh, 128, 2, 128), np.float32)
    out[:, :w_in * cin, :, :wp * cout] = g.reshape(kh, w_in * cin, 2, wp * cout)
    return jnp.asarray(out.reshape(kh * 128, 256))


def _tiled_bias(b, wp):
    b = np.asarray(b, np.float32)
    out = np.zeros((1, 128), np.float32)
    out[0, :wp * b.size] = np.tile(b, wp)       # lane order (jp, cout)
    return jnp.asarray(out)


def _packed_fc(fc_w):
    """fc.weight (24, 32) -> (2, 128, 24): [ip, (jp, cout) zero-padded, out].

    PyTorch flattens conv3's (cout=8, ip=2, jp=2) output channel-major; the
    kernel's conv3 output has rows (ip, image) and lanes (jp, cout)."""
    w = np.asarray(fc_w, np.float32).reshape(24, 8, 2, 2)       # (out, co, ip, jp)
    w = w.transpose(2, 3, 1, 0).reshape(2, 16, 24)              # (ip, (jp,co), out)
    out = np.zeros((2, 128, 24), np.float32)
    out[:, :16, :] = w
    return jnp.asarray(out)


def prepare_params(p, tb=TB):
    """One-time packing of PyTorch-layout weights into kernel operands.
    Deliberately kept in f32: default-precision dots already run as single bf16
    MXU passes, and all packed operands together are only ~3 MiB."""
    return {
        "s1": _block_row_gather(28, 2, 5, tb),                # (5, 28*tb, 28*tb)
        "g1": _folded_conv_weights(p["conv1_w"], 28, 2),      # (640, 256)
        "b1": _tiled_bias(p["conv1_b"], 14),                  # (1, 128)
        "s2": _block_row_gather(14, 0, 5, tb),                # (5, 10*tb, 14*tb)
        "g2": _folded_conv_weights(p["conv2_w"], 14, 0),      # (640, 256)
        "b2": _tiled_bias(p["conv2_b"], 5),                   # (1, 128)
        "s3": _block_row_gather(5, 1, 3, tb, ip_major=True),  # (3, 4*tb, 5*tb)
        "g3": _folded_conv_weights(p["conv3_w"], 5, 1),       # (384, 256)
        "b3": _tiled_bias(p["conv3_b"], 2),                   # (1, 128)
        "wfc": _packed_fc(p["fc_w"]),                         # (2, 128, 24)
        "bfc": jnp.asarray(np.asarray(p["fc_b"], np.float32).reshape(1, 24)),
        "wfc2": jnp.asarray(np.asarray(p["fc2_w"], np.float32).T),    # (24, 10)
        "bfc2": jnp.asarray(np.asarray(p["fc2_b"], np.float32).reshape(1, 10)),
    }


# ------------------------- params & reference ------------------------------- #

def init_params(key):
    """Synthetic init in PyTorch layouts: conv (Cout,Cin,kh,kw), linear (out,in)."""
    ks = jax.random.split(key, 10)

    def u(k, shape, fan_in):
        bound = 1.0 / np.sqrt(fan_in)
        return jax.random.uniform(k, shape, jnp.float32, -bound, bound)

    return {
        "conv1_w": u(ks[0], (8, 1, 5, 5), 25),
        "conv1_b": u(ks[1], (8,), 25),
        "conv2_w": u(ks[2], (16, 8, 5, 5), 200),
        "conv2_b": u(ks[3], (16,), 200),
        "conv3_w": u(ks[4], (8, 16, 3, 3), 144),
        "conv3_b": u(ks[5], (8,), 144),
        "fc_w": u(ks[6], (24, 32), 32),
        "fc_b": u(ks[7], (24,), 32),
        "fc2_w": u(ks[8], (10, 24), 24),
        "fc2_b": u(ks[9], (10,), 24),
        # fc3 (8->4) and sigmoid exist in __init__ but are unused in forward.
    }


def net_reference(p, x):
    """Pure-JAX reference of the PyTorch forward (numerical cross-check)."""
    def conv(x, w, b, pad):
        y = jax.lax.conv_general_dilated(
            x, w, (1, 1), [(pad, pad), (pad, pad)],
            dimension_numbers=("NCHW", "OIHW", "NCHW"))
        return y + b[None, :, None, None]

    def pool(x):
        return jax.lax.reduce_window(x, -jnp.inf, jax.lax.max,
                                     (1, 1, 2, 2), (1, 1, 2, 2), "VALID")

    x = jax.nn.relu(pool(conv(x, p["conv1_w"], p["conv1_b"], 2)))
    x = jax.nn.relu(pool(conv(x, p["conv2_w"], p["conv2_b"], 0)))
    x = jax.nn.relu(pool(conv(x, p["conv3_w"], p["conv3_b"], 1)))
    x = x.reshape(x.shape[0], -1)
    x = x @ p["fc_w"].T + p["fc_b"]
    x = x @ p["fc2_w"].T + p["fc2_b"]
    return jax.nn.relu(x)


if __name__ == "__main__":
    key = jax.random.PRNGKey(0)
    pkey, xkey = jax.random.split(key)
    params = init_params(pkey)
    kparams = prepare_params(params)    # one-time weight packing (off hot path)

    # 28x28 input is implied by the architecture (flatten -> Linear(32, 24)).
    B = 64                              # grid = 8 blocks of TB=8 images
    x = jax.random.normal(xkey, (B, 1, 28, 28), dtype=jnp.float32)

    out = jax.block_until_ready(net_forward(kparams, x))
    assert out.shape == (B, 10) and out.dtype == jnp.float32, out.shape
    ref = net_reference(params, x)
    err = float(jnp.max(jnp.abs(out - ref)))
    # loose tolerance: MXU f32 dots run single bf16 passes at default precision
    assert err < 5e-2, f"mismatch vs reference (B=64): max abs err = {err}"

    # ragged batch path (padded up to one TB=8 block inside the wrapper)
    out_small = jax.block_until_ready(net_forward(kparams, x[:2]))
    err_small = float(jnp.max(jnp.abs(out_small - ref[:2])))
    assert err_small < 5e-2, f"mismatch vs reference (B=2): max abs err = {err_small}"

    print("KERNEL_OK")
</pallas_src>

<mosaic_0001>
module attributes {stable_mosaic.version = 11 : i64} {
  func.func @_net_kernel(%arg0: i32, %arg1: memref<224x128xf32, #tpu.memory_space<vmem>>, %arg2: memref<5x224x224xf32, #tpu.memory_space<vmem>>, %arg3: memref<640x256xf32, #tpu.memory_space<vmem>>, %arg4: memref<1x128xf32, #tpu.memory_space<vmem>>, %arg5: memref<5x80x112xf32, #tpu.memory_space<vmem>>, %arg6: memref<640x256xf32, #tpu.memory_space<vmem>>, %arg7: memref<1x128xf32, #tpu.memory_space<vmem>>, %arg8: memref<3x32x40xf32, #tpu.memory_space<vmem>>, %arg9: memref<384x256xf32, #tpu.memory_space<vmem>>, %arg10: memref<1x128xf32, #tpu.memory_space<vmem>>, %arg11: memref<2x128x24xf32, #tpu.memory_space<vmem>>, %arg12: memref<1x24xf32, #tpu.memory_space<vmem>>, %arg13: memref<24x10xf32, #tpu.memory_space<vmem>>, %arg14: memref<1x10xf32, #tpu.memory_space<vmem>>, %arg15: memref<8x10xf32, #tpu.memory_space<vmem>>) attributes {dimension_semantics = [#tpu.dimension_semantics<parallel>], iteration_bounds = array<i64: 8>, scalar_prefetch = 0 : i64, scratch_operands = 0 : i64, tpu.core_type = #tpu.core_type<tc>, window_params = [{transform_indices = @transform_0, window_bounds = array<i64: 224, 128>}, {pipeline_mode = #tpu.pipeline_mode<synchronous>, transform_indices = @transform_1, window_bounds = array<i64: 5, 224, 224>}, {pipeline_mode = #tpu.pipeline_mode<synchronous>, transform_indices = @transform_2, window_bounds = array<i64: 640, 256>}, {pipeline_mode = #tpu.pipeline_mode<synchronous>, transform_indices = @transform_3, window_bounds = array<i64: 1, 128>}, {pipeline_mode = #tpu.pipeline_mode<synchronous>, transform_indices = @transform_4, window_bounds = array<i64: 5, 80, 112>}, {pipeline_mode = #tpu.pipeline_mode<synchronous>, transform_indices = @transform_5, window_bounds = array<i64: 640, 256>}, {pipeline_mode = #tpu.pipeline_mode<synchronous>, transform_indices = @transform_6, window_bounds = array<i64: 1, 128>}, {pipeline_mode = #tpu.pipeline_mode<synchronous>, transform_indices = @transform_7, window_bounds = array<i64: 3, 32, 40>}, {pipeline_mode = #tpu.pipeline_mode<synchronous>, transform_indices = @transform_8, window_bounds = array<i64: 384, 256>}, {pipeline_mode = #tpu.pipeline_mode<synchronous>, transform_indices = @transform_9, window_bounds = array<i64: 1, 128>}, {pipeline_mode = #tpu.pipeline_mode<synchronous>, transform_indices = @transform_10, window_bounds = array<i64: 2, 128, 24>}, {pipeline_mode = #tpu.pipeline_mode<synchronous>, transform_indices = @transform_11, window_bounds = array<i64: 1, 24>}, {pipeline_mode = #tpu.pipeline_mode<synchronous>, transform_indices = @transform_12, window_bounds = array<i64: 24, 10>}, {pipeline_mode = #tpu.pipeline_mode<synchronous>, transform_indices = @transform_13, window_bounds = array<i64: 1, 10>}, {transform_indices = @transform_14, window_bounds = array<i64: 8, 10>}]} {
    %c0 = arith.constant 0 : index
    %c0_0 = arith.constant 0 : index
    %0 = vector.load %arg1[%c0, %c0_0] : memref<224x128xf32, #tpu.memory_space<vmem>>, vector<224x128xf32>
    %c0_1 = arith.constant 0 : index
    %c0_2 = arith.constant 0 : index
    %c0_3 = arith.constant 0 : index
    %1 = vector.load %arg2[%c0_1, %c0_2, %c0_3] : memref<5x224x224xf32, #tpu.memory_space<vmem>>, vector<1x224x224xf32>
    %2 = vector.shape_cast %1 : vector<1x224x224xf32> to vector<224x224xf32>
    %cst = arith.constant dense<0.000000e+00> : vector<224x128xf32>
    %3 = tpu.matmul %2, %0, %cst {dimension_numbers = #tpu.dot_dimension_numbers<[1], [0], [0], [1], [0, 0, 1, 1], [], []>} : vector<224x224xf32>, vector<224x128xf32>, vector<224x128xf32> -> vector<224x128xf32>
    %c1 = arith.constant 1 : index
    %c0_4 = arith.constant 0 : index
    %c0_5 = arith.constant 0 : index
    %4 = vector.load %arg2[%c1, %c0_4, %c0_5] : memref<5x224x224xf32, #tpu.memory_space<vmem>>, vector<1x224x224xf32>
    %5 = vector.shape_cast %4 : vector<1x224x224xf32> to vector<224x224xf32>
    %cst_6 = arith.constant dense<0.000000e+00> : vector<224x128xf32>
    %6 = tpu.matmul %5, %0, %cst_6 {dimension_numbers = #tpu.dot_dimension_numbers<[1], [0], [0], [1], [0, 0, 1, 1], [], []>} : vector<224x224xf32>, vector<224x128xf32>, vector<224x128xf32> -> vector<224x128xf32>
    %c2 = arith.constant 2 : index
    %c0_7 = arith.constant 0 : index
    %c0_8 = arith.constant 0 : index
    %7 = vector.load %arg2[%c2, %c0_7, %c0_8] : memref<5x224x224xf32, #tpu.memory_space<vmem>>, vector<1x224x224xf32>
    %8 = vector.shape_cast %7 : vector<1x224x224xf32> to vector<224x224xf32>
    %cst_9 = arith.constant dense<0.000000e+00> : vector<224x128xf32>
    %9 = tpu.matmul %8, %0, %cst_9 {dimension_numbers = #tpu.dot_dimension_numbers<[1], [0], [0], [1], [0, 0, 1, 1], [], []>} : vector<224x224xf32>, vector<224x128xf32>, vector<224x128xf32> -> vector<224x128xf32>
    %c3 = arith.constant 3 : index
    %c0_10 = arith.constant 0 : index
    %c0_11 = arith.constant 0 : index
    %10 = vector.load %arg2[%c3, %c0_10, %c0_11] : memref<5x224x224xf32, #tpu.memory_space<vmem>>, vector<1x224x224xf32>
    %11 = vector.shape_cast %10 : vector<1x224x224xf32> to vector<224x224xf32>
    %cst_12 = arith.constant dense<0.000000e+00> : vector<224x128xf32>
    %12 = tpu.matmul %11, %0, %cst_12 {dimension_numbers = #tpu.dot_dimension_numbers<[1], [0], [0], [1], [0, 0, 1, 1], [], []>} : vector<224x224xf32>, vector<224x128xf32>, vector<224x128xf32> -> vector<224x128xf32>
    %c4 = arith.constant 4 : index
    %c0_13 = arith.constant 0 : index
    %c0_14 = arith.constant 0 : index
    %13 = vector.load %arg2[%c4, %c0_13, %c0_14] : memref<5x224x224xf32, #tpu.memory_space<vmem>>, vector<1x224x224xf32>
    %14 = vector.shape_cast %13 : vector<1x224x224xf32> to vector<224x224xf32>
    %cst_15 = arith.constant dense<0.000000e+00> : vector<224x128xf32>
    %15 = tpu.matmul %14, %0, %cst_15 {dimension_numbers = #tpu.dot_dimension_numbers<[1], [0], [0], [1], [0, 0, 1, 1], [], []>} : vector<224x224xf32>, vector<224x128xf32>, vector<224x128xf32> -> vector<224x128xf32>
    %16 = tpu.concatenate %3, %6, %9, %12, %15 in 1 : vector<224x128xf32>, vector<224x128xf32>, vector<224x128xf32>, vector<224x128xf32>, vector<224x128xf32> -> vector<224x640xf32>
    %c0_16 = arith.constant 0 : index
    %c0_17 = arith.constant 0 : index
    %17 = vector.load %arg3[%c0_16, %c0_17] : memref<640x256xf32, #tpu.memory_space<vmem>>, vector<640x256xf32>
    %cst_18 = arith.constant dense<0.000000e+00> : vector<224x256xf32>
    %18 = tpu.matmul %16, %17, %cst_18 {dimension_numbers = #tpu.dot_dimension_numbers<[1], [0], [0], [1], [0, 0, 1, 1], [], []>} : vector<224x640xf32>, vector<640x256xf32>, vector<224x256xf32> -> vector<224x256xf32>
    %19 = vector.extract_strided_slice %18 {offsets = [0, 0], sizes = [112, 256], strides = [1, 1]} : vector<224x256xf32> to vector<112x256xf32>
    %20 = vector.extract_strided_slice %18 {offsets = [112, 0], sizes = [112, 256], strides = [1, 1]} : vector<224x256xf32> to vector<112x256xf32>
    %21 = arith.maximumf %19, %20 : vector<112x256xf32>
    %22 = vector.extract_strided_slice %21 {offsets = [0, 0], sizes = [112, 128], strides = [1, 1]} : vector<112x256xf32> to vector<112x128xf32>
    %23 = vector.extract_strided_slice %21 {offsets = [0, 128], sizes = [112, 128], strides = [1, 1]} : vector<112x256xf32> to vector<112x128xf32>
    %24 = arith.maximumf %22, %23 : vector<112x128xf32>
    %c0_19 = arith.constant 0 : index
    %c0_20 = arith.constant 0 : index
    %25 = vector.load %arg4[%c0_19, %c0_20] : memref<1x128xf32, #tpu.memory_space<vmem>>, vector<1x128xf32>
    %26 = vector.broadcast %25 : vector<1x128xf32> to vector<112x128xf32>
    %27 = arith.addf %24, %26 : vector<112x128xf32>
    %cst_21 = arith.constant 0.000000e+00 : f32
    %28 = vector.broadcast %cst_21 : f32 to vector<112x128xf32>
    %29 = arith.maximumf %27, %28 : vector<112x128xf32>
    %c0_22 = arith.constant 0 : index
    %c0_23 = arith.constant 0 : index
    %c0_24 = arith.constant 0 : index
    %30 = vector.load %arg5[%c0_22, %c0_23, %c0_24] : memref<5x80x112xf32, #tpu.memory_space<vmem>>, vector<1x80x112xf32>
    %31 = vector.shape_cast %30 : vector<1x80x112xf32> to vector<80x112xf32>
    %cst_25 = arith.constant dense<0.000000e+00> : vector<80x128xf32>
    %32 = tpu.matmul %31, %29, %cst_25 {dimension_numbers = #tpu.dot_dimension_numbers<[1], [0], [0], [1], [0, 0, 1, 1], [], []>} : vector<80x112xf32>, vector<112x128xf32>, vector<80x128xf32> -> vector<80x128xf32>
    %c1_26 = arith.constant 1 : index
    %c0_27 = arith.constant 0 : index
    %c0_28 = arith.constant 0 : index
    %33 = vector.load %arg5[%c1_26, %c0_27, %c0_28] : memref<5x80x112xf32, #tpu.memory_space<vmem>>, vector<1x80x112xf32>
    %34 = vector.shape_cast %33 : vector<1x80x112xf32> to vector<80x112xf32>
    %cst_29 = arith.constant dense<0.000000e+00> : vector<80x128xf32>
    %35 = tpu.matmul %34, %29, %cst_29 {dimension_numbers = #tpu.dot_dimension_numbers<[1], [0], [0], [1], [0, 0, 1, 1], [], []>} : vector<80x112xf32>, vector<112x128xf32>, vector<80x128xf32> -> vector<80x128xf32>
    %c2_30 = arith.constant 2 : index
    %c0_31 = arith.constant 0 : index
    %c0_32 = arith.constant 0 : index
    %36 = vector.load %arg5[%c2_30, %c0_31, %c0_32] : memref<5x80x112xf32, #tpu.memory_space<vmem>>, vector<1x80x112xf32>
    %37 = vector.shape_cast %36 : vector<1x80x112xf32> to vector<80x112xf32>
    %cst_33 = arith.constant dense<0.000000e+00> : vector<80x128xf32>
    %38 = tpu.matmul %37, %29, %cst_33 {dimension_numbers = #tpu.dot_dimension_numbers<[1], [0], [0], [1], [0, 0, 1, 1], [], []>} : vector<80x112xf32>, vector<112x128xf32>, vector<80x128xf32> -> vector<80x128xf32>
    %c3_34 = arith.constant 3 : index
    %c0_35 = arith.constant 0 : index
    %c0_36 = arith.constant 0 : index
    %39 = vector.load %arg5[%c3_34, %c0_35, %c0_36] : memref<5x80x112xf32, #tpu.memory_space<vmem>>, vector<1x80x112xf32>
    %40 = vector.shape_cast %39 : vector<1x80x112xf32> to vector<80x112xf32>
    %cst_37 = arith.constant dense<0.000000e+00> : vector<80x128xf32>
    %41 = tpu.matmul %40, %29, %cst_37 {dimension_numbers = #tpu.dot_dimension_numbers<[1], [0], [0], [1], [0, 0, 1, 1], [], []>} : vector<80x112xf32>, vector<112x128xf32>, vector<80x128xf32> -> vector<80x128xf32>
    %c4_38 = arith.constant 4 : index
    %c0_39 = arith.constant 0 : index
    %c0_40 = arith.constant 0 : index
    %42 = vector.load %arg5[%c4_38, %c0_39, %c0_40] : memref<5x80x112xf32, #tpu.memory_space<vmem>>, vector<1x80x112xf32>
    %43 = vector.shape_cast %42 : vector<1x80x112xf32> to vector<80x112xf32>
    %cst_41 = arith.constant dense<0.000000e+00> : vector<80x128xf32>
    %44 = tpu.matmul %43, %29, %cst_41 {dimension_numbers = #tpu.dot_dimension_numbers<[1], [0], [0], [1], [0, 0, 1, 1], [], []>} : vector<80x112xf32>, vector<112x128xf32>, vector<80x128xf32> -> vector<80x128xf32>
    %45 = tpu.concatenate %32, %35, %38, %41, %44 in 1 : vector<80x128xf32>, vector<80x128xf32>, vector<80x128xf32>, vector<80x128xf32>, vector<80x128xf32> -> vector<80x640xf32>
    %c0_42 = arith.constant 0 : index
    %c0_43 = arith.constant 0 : index
    %46 = vector.load %arg6[%c0_42, %c0_43] : memref<640x256xf32, #tpu.memory_space<vmem>>, vector<640x256xf32>
    %cst_44 = arith.constant dense<0.000000e+00> : vector<80x256xf32>
    %47 = tpu.matmul %45, %46, %cst_44 {dimension_numbers = #tpu.dot_dimension_numbers<[1], [0], [0], [1], [0, 0, 1, 1], [], []>} : vector<80x640xf32>, vector<640x256xf32>, vector<80x256xf32> -> vector<80x256xf32>
    %48 = vector.extract_strided_slice %47 {offsets = [0, 0], sizes = [40, 256], strides = [1, 1]} : vector<80x256xf32> to vector<40x256xf32>
    %49 = vector.extract_strided_slice %47 {offsets = [40, 0], sizes = [40, 256], strides = [1, 1]} : vector<80x256xf32> to vector<40x256xf32>
    %50 = arith.maximumf %48, %49 : vector<40x256xf32>
    %51 = vector.extract_strided_slice %50 {offsets = [0, 0], sizes = [40, 128], strides = [1, 1]} : vector<40x256xf32> to vector<40x128xf32>
    %52 = vector.extract_strided_slice %50 {offsets = [0, 128], sizes = [40, 128], strides = [1, 1]} : vector<40x256xf32> to vector<40x128xf32>
    %53 = arith.maximumf %51, %52 : vector<40x128xf32>
    %c0_45 = arith.constant 0 : index
    %c0_46 = arith.constant 0 : index
    %54 = vector.load %arg7[%c0_45, %c0_46] : memref<1x128xf32, #tpu.memory_space<vmem>>, vector<1x128xf32>
    %55 = vector.broadcast %54 : vector<1x128xf32> to vector<40x128xf32>
    %56 = arith.addf %53, %55 : vector<40x128xf32>
    %cst_47 = arith.constant 0.000000e+00 : f32
    %57 = vector.broadcast %cst_47 : f32 to vector<40x128xf32>
    %58 = arith.maximumf %56, %57 : vector<40x128xf32>
    %c0_48 = arith.constant 0 : index
    %c0_49 = arith.constant 0 : index
    %c0_50 = arith.constant 0 : index
    %59 = vector.load %arg8[%c0_48, %c0_49, %c0_50] : memref<3x32x40xf32, #tpu.memory_space<vmem>>, vector<1x32x40xf32>
    %60 = vector.shape_cast %59 : vector<1x32x40xf32> to vector<32x40xf32>
    %cst_51 = arith.constant dense<0.000000e+00> : vector<32x128xf32>
    %61 = tpu.matmul %60, %58, %cst_51 {dimension_numbers = #tpu.dot_dimension_numbers<[1], [0], [0], [1], [0, 0, 1, 1], [], []>} : vector<32x40xf32>, vector<40x128xf32>, vector<32x128xf32> -> vector<32x128xf32>
    %c1_52 = arith.constant 1 : index
    %c0_53 = arith.constant 0 : index
    %c0_54 = arith.constant 0 : index
    %62 = vector.load %arg8[%c1_52, %c0_53, %c0_54] : memref<3x32x40xf32, #tpu.memory_space<vmem>>, vector<1x32x40xf32>
    %63 = vector.shape_cast %62 : vector<1x32x40xf32> to vector<32x40xf32>
    %cst_55 = arith.constant dense<0.000000e+00> : vector<32x128xf32>
    %64 = tpu.matmul %63, %58, %cst_55 {dimension_numbers = #tpu.dot_dimension_numbers<[1], [0], [0], [1], [0, 0, 1, 1], [], []>} : vector<32x40xf32>, vector<40x128xf32>, vector<32x128xf32> -> vector<32x128xf32>
    %c2_56 = arith.constant 2 : index
    %c0_57 = arith.constant 0 : index
    %c0_58 = arith.constant 0 : index
    %65 = vector.load %arg8[%c2_56, %c0_57, %c0_58] : memref<3x32x40xf32, #tpu.memory_space<vmem>>, vector<1x32x40xf32>
    %66 = vector.shape_cast %65 : vector<1x32x40xf32> to vector<32x40xf32>
    %cst_59 = arith.constant dense<0.000000e+00> : vector<32x128xf32>
    %67 = tpu.matmul %66, %58, %cst_59 {dimension_numbers = #tpu.dot_dimension_numbers<[1], [0], [0], [1], [0, 0, 1, 1], [], []>} : vector<32x40xf32>, vector<40x128xf32>, vector<32x128xf32> -> vector<32x128xf32>
    %68 = tpu.concatenate %61, %64, %67 in 1 : vector<32x128xf32>, vector<32x128xf32>, vector<32x128xf32> -> vector<32x384xf32>
    %c0_60 = arith.constant 0 : index
    %c0_61 = arith.constant 0 : index
    %69 = vector.load %arg9[%c0_60, %c0_61] : memref<384x256xf32, #tpu.memory_space<vmem>>, vector<384x256xf32>
    %cst_62 = arith.constant dense<0.000000e+00> : vector<32x256xf32>
    %70 = tpu.matmul %68, %69, %cst_62 {dimension_numbers = #tpu.dot_dimension_numbers<[1], [0], [0], [1], [0, 0, 1, 1], [], []>} : vector<32x384xf32>, vector<384x256xf32>, vector<32x256xf32> -> vector<32x256xf32>
    %71 = vector.extract_strided_slice %70 {offsets = [0, 0], sizes = [16, 256], strides = [1, 1]} : vector<32x256xf32> to vector<16x256xf32>
    %72 = vector.extract_strided_slice %70 {offsets = [16, 0], sizes = [16, 256], strides = [1, 1]} : vector<32x256xf32> to vector<16x256xf32>
    %73 = arith.maximumf %71, %72 : vector<16x256xf32>
    %74 = vector.extract_strided_slice %73 {offsets = [0, 0], sizes = [16, 128], strides = [1, 1]} : vector<16x256xf32> to vector<16x128xf32>
    %75 = vector.extract_strided_slice %73 {offsets = [0, 128], sizes = [16, 128], strides = [1, 1]} : vector<16x256xf32> to vector<16x128xf32>
    %76 = arith.maximumf %74, %75 : vector<16x128xf32>
    %c0_63 = arith.constant 0 : index
    %c0_64 = arith.constant 0 : index
    %77 = vector.load %arg10[%c0_63, %c0_64] : memref<1x128xf32, #tpu.memory_space<vmem>>, vector<1x128xf32>
    %78 = vector.broadcast %77 : vector<1x128xf32> to vector<16x128xf32>
    %79 = arith.addf %76, %78 : vector<16x128xf32>
    %cst_65 = arith.constant 0.000000e+00 : f32
    %80 = vector.broadcast %cst_65 : f32 to vector<16x128xf32>
    %81 = arith.maximumf %79, %80 : vector<16x128xf32>
    %82 = vector.extract_strided_slice %81 {offsets = [0, 0], sizes = [8, 128], strides = [1, 1]} : vector<16x128xf32> to vector<8x128xf32>
    %c0_66 = arith.constant 0 : index
    %c0_67 = arith.constant 0 : index
    %c0_68 = arith.constant 0 : index
    %83 = vector.load %arg11[%c0_66, %c0_67, %c0_68] : memref<2x128x24xf32, #tpu.memory_space<vmem>>, vector<1x128x24xf32>
    %84 = vector.shape_cast %83 : vector<1x128x24xf32> to vector<128x24xf32>
    %cst_69 = arith.constant dense<0.000000e+00> : vector<8x24xf32>
    %85 = tpu.matmul %82, %84, %cst_69 {dimension_numbers = #tpu.dot_dimension_numbers<[1], [0], [0], [1], [0, 0, 1, 1], [], []>} : vector<8x128xf32>, vector<128x24xf32>, vector<8x24xf32> -> vector<8x24xf32>
    %86 = vector.extract_strided_slice %81 {offsets = [8, 0], sizes = [8, 128], strides = [1, 1]} : vector<16x128xf32> to vector<8x128xf32>
    %c1_70 = arith.constant 1 : index
    %c0_71 = arith.constant 0 : index
    %c0_72 = arith.constant 0 : index
    %87 = vector.load %arg11[%c1_70, %c0_71, %c0_72] : memref<2x128x24xf32, #tpu.memory_space<vmem>>, vector<1x128x24xf32>
    %88 = vector.shape_cast %87 : vector<1x128x24xf32> to vector<128x24xf32>
    %cst_73 = arith.constant dense<0.000000e+00> : vector<8x24xf32>
    %89 = tpu.matmul %86, %88, %cst_73 {dimension_numbers = #tpu.dot_dimension_numbers<[1], [0], [0], [1], [0, 0, 1, 1], [], []>} : vector<8x128xf32>, vector<128x24xf32>, vector<8x24xf32> -> vector<8x24xf32>
    %90 = arith.addf %85, %89 : vector<8x24xf32>
    %c0_74 = arith.constant 0 : index
    %c0_75 = arith.constant 0 : index
    %91 = vector.load %arg12[%c0_74, %c0_75] : memref<1x24xf32, #tpu.memory_space<vmem>>, vector<1x24xf32>
    %92 = vector.broadcast %91 : vector<1x24xf32> to vector<8x24xf32>
    %93 = arith.addf %90, %92 : vector<8x24xf32>
    %c0_76 = arith.constant 0 : index
    %c0_77 = arith.constant 0 : index
    %94 = vector.load %arg13[%c0_76, %c0_77] : memref<24x10xf32, #tpu.memory_space<vmem>>, vector<24x10xf32>
    %cst_78 = arith.constant dense<0.000000e+00> : vector<8x10xf32>
    %95 = tpu.matmul %93, %94, %cst_78 {dimension_numbers = #tpu.dot_dimension_numbers<[1], [0], [0], [1], [0, 0, 1, 1], [], []>} : vector<8x24xf32>, vector<24x10xf32>, vector<8x10xf32> -> vector<8x10xf32>
    %c0_79 = arith.constant 0 : index
    %c0_80 = arith.constant 0 : index
    %96 = vector.load %arg14[%c0_79, %c0_80] : memref<1x10xf32, #tpu.memory_space<vmem>>, vector<1x10xf32>
    %97 = vector.broadcast %96 : vector<1x10xf32> to vector<8x10xf32>
    %98 = arith.addf %95, %97 : vector<8x10xf32>
    %cst_81 = arith.constant 0.000000e+00 : f32
    %99 = vector.broadcast %cst_81 : f32 to vector<8x10xf32>
    %100 = arith.maximumf %98, %99 : vector<8x10xf32>
    %c0_82 = arith.constant 0 : index
    %c0_83 = arith.constant 0 : index
    %101 = vector.load %arg15[%c0_82, %c0_83] : memref<8x10xf32, #tpu.memory_space<vmem>>, vector<8x10xf32>
    tpu.vector_store %arg15[%c0_82, %c0_83], %100 {strides = array<i32>} : memref<8x10xf32, #tpu.memory_space<vmem>>, vector<8x10xf32>,
    return
  }
  func.func @transform_0(%arg0: i32) -> (i32, i32) {
    %c0_i32 = arith.constant 0 : i32
    %c0_i32_0 = arith.constant 0 : i32
    return %arg0, %c0_i32 : i32, i32
  }
  func.func @transform_1(%arg0: i32) -> (i32, i32, i32) {
    %c0_i32 = arith.constant 0 : i32
    %c0_i32_0 = arith.constant 0 : i32
    %c0_i32_1 = arith.constant 0 : i32
    %c0_i32_2 = arith.constant 0 : i32
    return %c0_i32, %c0_i32_0, %c0_i32_1 : i32, i32, i32
  }
  func.func @transform_2(%arg0: i32) -> (i32, i32) {
    %c0_i32 = arith.constant 0 : i32
    %c0_i32_0 = arith.constant 0 : i32
    %c0_i32_1 = arith.constant 0 : i32
    return %c0_i32, %c0_i32_0 : i32, i32
  }
  func.func @transform_3(%arg0: i32) -> (i32, i32) {
    %c0_i32 = arith.constant 0 : i32
    %c0_i32_0 = arith.constant 0 : i32
    %c0_i32_1 = arith.constant 0 : i32
    return %c0_i32, %c0_i32_0 : i32, i32
  }
  func.func @transform_4(%arg0: i32) -> (i32, i32, i32) {
    %c0_i32 = arith.constant 0 : i32
    %c0_i32_0 = arith.constant 0 : i32
    %c0_i32_1 = arith.constant 0 : i32
    %c0_i32_2 = arith.constant 0 : i32
    return %c0_i32, %c0_i32_0, %c0_i32_1 : i32, i32, i32
  }
  func.func @transform_5(%arg0: i32) -> (i32, i32) {
    %c0_i32 = arith.constant 0 : i32
    %c0_i32_0 = arith.constant 0 : i32
    %c0_i32_1 = arith.constant 0 : i32
    return %c0_i32, %c0_i32_0 : i32, i32
  }
  func.func @transform_6(%arg0: i32) -> (i32, i32) {
    %c0_i32 = arith.constant 0 : i32
    %c0_i32_0 = arith.constant 0 : i32
    %c0_i32_1 = arith.constant 0 : i32
    return %c0_i32, %c0_i32_0 : i32, i32
  }
  func.func @transform_7(%arg0: i32) -> (i32, i32, i32) {
    %c0_i32 = arith.constant 0 : i32
    %c0_i32_0 = arith.constant 0 : i32
    %c0_i32_1 = arith.constant 0 : i32
    %c0_i32_2 = arith.constant 0 : i32
    return %c0_i32, %c0_i32_0, %c0_i32_1 : i32, i32, i32
  }
  func.func @transform_8(%arg0: i32) -> (i32, i32) {
    %c0_i32 = arith.constant 0 : i32
    %c0_i32_0 = arith.constant 0 : i32
    %c0_i32_1 = arith.constant 0 : i32
    return %c0_i32, %c0_i32_0 : i32, i32
  }
  func.func @transform_9(%arg0: i32) -> (i32, i32) {
    %c0_i32 = arith.constant 0 : i32
    %c0_i32_0 = arith.constant 0 : i32
    %c0_i32_1 = arith.constant 0 : i32
    return %c0_i32, %c0_i32_0 : i32, i32
  }
  func.func @transform_10(%arg0: i32) -> (i32, i32, i32) {
    %c0_i32 = arith.constant 0 : i32
    %c0_i32_0 = arith.constant 0 : i32
    %c0_i32_1 = arith.constant 0 : i32
    %c0_i32_2 = arith.constant 0 : i32
    return %c0_i32, %c0_i32_0, %c0_i32_1 : i32, i32, i32
  }
  func.func @transform_11(%arg0: i32) -> (i32, i32) {
    %c0_i32 = arith.constant 0 : i32
    %c0_i32_0 = arith.constant 0 : i32
    %c0_i32_1 = arith.constant 0 : i32
    return %c0_i32, %c0_i32_0 : i32, i32
  }
  func.func @transform_12(%arg0: i32) -> (i32, i32) {
    %c0_i32 = arith.constant 0 : i32
    %c0_i32_0 = arith.constant 0 : i32
    %c0_i32_1 = arith.constant 0 : i32
    return %c0_i32, %c0_i32_0 : i32, i32
  }
  func.func @transform_13(%arg0: i32) -> (i32, i32) {
    %c0_i32 = arith.constant 0 : i32
    %c0_i32_0 = arith.constant 0 : i32
    %c0_i32_1 = arith.constant 0 : i32
    return %c0_i32, %c0_i32_0 : i32, i32
  }
  func.func @transform_14(%arg0: i32) -> (i32, i32) {
    %c0_i32 = arith.constant 0 : i32
    %c0_i32_0 = arith.constant 0 : i32
    return %arg0, %c0_i32 : i32, i32
  }
}

</mosaic_0001>

<llo_original>
// kernel: net_forward.1
$region0: #{net_forward.1}
  #allocation0 [shape = 'u32[]', space=smem, size = 0x4, offset = 0x4, fixed_abs, tag = 'smem constant byte address 0x4 - core index']
  #allocation1 [shape = 'u32[72,128]{1,0:T(1,128)}', space=vmem, size = 0x9000, scoped, tag = 'internal scratch']
  %s0 = inlined_call_operand.vmem [shape: f32[1792,128], index: 0, kind: input, shape index: {}]
  %s1 = inlined_call_operand.vmem [shape: f32[5,224,224], index: 1, kind: input, shape index: {}]
  %s2 = inlined_call_operand.vmem [shape: f32[640,256], index: 2, kind: input, shape index: {}]
  %s3 = inlined_call_operand.vmem [shape: f32[1,128], index: 3, kind: input, shape index: {}]
  %s4 = inlined_call_operand.vmem [shape: f32[5,80,112], index: 4, kind: input, shape index: {}]
  %s5 = inlined_call_operand.vmem [shape: f32[640,256], index: 5, kind: input, shape index: {}]
  %s6 = inlined_call_operand.vmem [shape: f32[1,128], index: 6, kind: input, shape index: {}]
  %s7 = inlined_call_operand.vmem [shape: f32[3,32,40], index: 7, kind: input, shape index: {}]
  %s8 = inlined_call_operand.vmem [shape: f32[384,256], index: 8, kind: input, shape index: {}]
  %s9 = inlined_call_operand.vmem [shape: f32[1,128], index: 9, kind: input, shape index: {}]
  %s10 = inlined_call_operand.vmem [shape: f32[2,128,24], index: 10, kind: input, shape index: {}]
  %s11 = inlined_call_operand.vmem [shape: f32[1,24], index: 11, kind: input, shape index: {}]
  %s12 = inlined_call_operand.vmem [shape: f32[24,10], index: 12, kind: input, shape index: {}]
  %s13 = inlined_call_operand.vmem [shape: f32[1,10], index: 13, kind: input, shape index: {}]
  %s14 = inlined_call_operand.vmem [shape: f32[64,10], index: 14, kind: output, shape index: {}]
  %s15 = sld [smem:[#allocation0]]
  $region89: #{net_forward.1} parent=0
    _
  %s17 = ssub.s32 1, %s15
  %s18 = scalar_select 0, %s17, %s15
  loop: start=0, step=1, limit=10
  $region2: #{net_forward.1} parent=0 // loop_pre_header
    _
  $region3: #{net_forward.1} parent=0 // loop_header
    %s20 = sphi 0, %s24
    %p21 = scmp.ge.s32.totalorder %s20, 10
    %s30 = sphi 0, %s32
    %s33 = sphi 0, %s30
    %s34 = sphi 0, %s33
    %s50 = sphi 0, %s34
    %s54 = sphi 0, %s54
    %s56 = sphi 0, %s54
    %s57 = sphi 0, %s56
    %s71 = sphi 0, %s57
    %s75 = sphi 0, %s75
    %s77 = sphi 0, %s75
    %s78 = sphi 0, %s77
    %s92 = sphi 0, %s78
    %s96 = sphi 0, %s96
    %s98 = sphi 0, %s96
    %s99 = sphi 0, %s98
    %s113 = sphi 0, %s99
    %s117 = sphi 0, %s117
    %s119 = sphi 0, %s117
    %s120 = sphi 0, %s119
    %s134 = sphi 0, %s120
    %s138 = sphi 0, %s138
    %s140 = sphi 0, %s138
    %s141 = sphi 0, %s140
    %s155 = sphi 0, %s141
    %s159 = sphi 0, %s159
    %s161 = sphi 0, %s159
    %s162 = sphi 0, %s161
    %s176 = sphi 0, %s162
    %s180 = sphi 0, %s180
    %s182 = sphi 0, %s180
    %s183 = sphi 0, %s182
    %s197 = sphi 0, %s183
    %s201 = sphi 0, %s201
    %s203 = sphi 0, %s201
    %s204 = sphi 0, %s203
    %s218 = sphi 0, %s204
    %s222 = sphi 0, %s222
    %s224 = sphi 0, %s222
    %s225 = sphi 0, %s224
    %s239 = sphi 0, %s225
    %s243 = sphi 0, %s243
    %s245 = sphi 0, %s243
    %s246 = sphi 0, %s245
    %s260 = sphi 0, %s246
    %s264 = sphi 0, %s264
    %s266 = sphi 0, %s264
    %s267 = sphi 0, %s266
    %s281 = sphi 0, %s267
    %s285 = sphi 0, %s285
    %s287 = sphi 0, %s285
    %s288 = sphi 0, %s287
    %s302 = sphi 0, %s288
    %s306 = sphi 0, %s306
    %s308 = sphi 0, %s306
    %s309 = sphi 0, %s308
    %s323 = sphi 0, %s309
    %s329 = sphi 0, %s331
    %s332 = sphi 0, %s329
    %s333 = sphi 0, %s332
    %s349 = sphi 0, %s333
  $region4: #{net_forward.1} parent=0 // loop_header_branch
    %23 = sbr.rel (%p21) target = $region8
  $region5: #{net_forward.1} parent=0 // loop_body
    %s25 = ssub.s32 %s20, 1
    %s26 = ssub.s32 %s20, 2
    %s27 = sadd.s32 %s20, 1
    %s28 = ssub.s32 %s20, %s27
    %p29 = scmp.eq.s32.totalorder %s28, 0
    %s31 = sadd.s32 %s30, 1
    %s32 = scalar_select %p29, %s30, %s31
    %p35 = pneg %p29
    %p36 = scmp.eq.s32.totalorder %s20, 7
    %p37 = por %p35, %p36
    %p38 = scmp.ne.s32.totalorder %s30, %s33
    %p39 = scmp.eq.s32.totalorder %s20, 0
    %p40 = por %p38, %p39
    %p41 = scmp.ne.s32.totalorder %s30, %s33
    %p42 = scmp.eq.s32.totalorder %s25, 7
    %p43 = por %p41, %p42
    %p44 = scmp.ne.s32.totalorder %s33, %s34
    %p45 = scmp.eq.s32.totalorder %s25, 0
    %p46 = por %p44, %p45
    %p47 = scmp.ne.s32.totalorder %s33, %s34
    %p48 = scmp.eq.s32.totalorder %s26, 7
    %p49 = por %p47, %p48
    %p51 = scmp.ne.s32.totalorder %s34, %s50
    %p52 = scmp.eq.s32.totalorder %s26, 0
    %p53 = por %p51, %p52
    %s55 = sadd.s32 %s54, 1
    %p58 = scmp.eq.s32.totalorder %s20, 7
    %p59 = scmp.ne.s32.totalorder %s54, %s56
    %p60 = scmp.eq.s32.totalorder %s20, 0
    %p61 = por %p59, %p60
    %p62 = scmp.ne.s32.totalorder %s54, %s56
    %p63 = scmp.eq.s32.totalorder %s25, 7
    %p64 = por %p62, %p63
    %p65 = scmp.ne.s32.totalorder %s56, %s57
    %p66 = scmp.eq.s32.totalorder %s25, 0
    %p67 = por %p65, %p66
    %p68 = scmp.ne.s32.totalorder %s56, %s57
    %p69 = scmp.eq.s32.totalorder %s26, 7
    %p70 = por %p68, %p69
    %p72 = scmp.ne.s32.totalorder %s57, %s71
    %p73 = scmp.eq.s32.totalorder %s26, 0
    %p74 = por %p72, %p73
    %s76 = sadd.s32 %s75, 1
    %p79 = scmp.eq.s32.totalorder %s20, 7
    %p80 = scmp.ne.s32.totalorder %s75, %s77
    %p81 = scmp.eq.s32.totalorder %s20, 0
    %p82 = por %p80, %p81
    %p83 = scmp.ne.s32.totalorder %s75, %s77
    %p84 = scmp.eq.s32.totalorder %s25, 7
    %p85 = por %p83, %p84
    %p86 = scmp.ne.s32.totalorder %s77, %s78
    %p87 = scmp.eq.s32.totalorder %s25, 0
    %p88 = por %p86, %p87
    %p89 = scmp.ne.s32.totalorder %s77, %s78
    %p90 = scmp.eq.s32.totalorder %s26, 7
    %p91 = por %p89, %p90
    %p93 = scmp.ne.s32.totalorder %s78, %s92
    %p94 = scmp.eq.s32.totalorder %s26, 0
    %p95 = por %p93, %p94
    %s97 = sadd.s32 %s96, 1
    %p100 = scmp.eq.s32.totalorder %s20, 7
    %p101 = scmp.ne.s32.totalorder %s96, %s98
    %p102 = scmp.eq.s32.totalorder %s20, 0
    %p103 = por %p101, %p102
    %p104 = scmp.ne.s32.totalorder %s96, %s98
    %p105 = scmp.eq.s32.totalorder %s25, 7
    %p106 = por %p104, %p105
    %p107 = scmp.ne.s32.totalorder %s98, %s99
    %p108 = scmp.eq.s32.totalorder %s25, 0
    %p109 = por %p107, %p108
    %p110 = scmp.ne.s32.totalorder %s98, %s99
    %p111 = scmp.eq.s32.totalorder %s26, 7
    %p112 = por %p110, %p111
    %p114 = scmp.ne.s32.totalorder %s99, %s113
    %p115 = scmp.eq.s32.totalorder %s26, 0
    %p116 = por %p114, %p115
    %s118 = sadd.s32 %s117, 1
    %p121 = scmp.eq.s32.totalorder %s20, 7
    %p122 = scmp.ne.s32.totalorder %s117, %s119
    %p123 = scmp.eq.s32.totalorder %s20, 0
    %p124 = por %p122, %p123
    %p125 = scmp.ne.s32.totalorder %s117, %s119
    %p126 = scmp.eq.s32.totalorder %s25, 7
    %p127 = por %p125, %p126
    %p128 = scmp.ne.s32.totalorder %s119, %s120
    %p129 = scmp.eq.s32.totalorder %s25, 0
    %p130 = por %p128, %p129
    %p131 = scmp.ne.s32.totalorder %s119, %s120
    %p132 = scmp.eq.s32.totalorder %s26, 7
    %p133 = por %p131, %p132
    %p135 = scmp.ne.s32.totalorder %s120, %s134
    %p136 = scmp.eq.s32.totalorder %s26, 0
    %p137 = por %p135, %p136
    %s139 = sadd.s32 %s138, 1
    %p142 = scmp.eq.s32.totalorder %s20, 7
    %p143 = scmp.ne.s32.totalorder %s138, %s140
    %p144 = scmp.eq.s32.totalorder %s20, 0
    %p145 = por %p143, %p144
    %p146 = scmp.ne.s32.totalorder %s138, %s140
    %p147 = scmp.eq.s32.totalorder %s25, 7
    %p148 = por %p146, %p147
    %p149 = scmp.ne.s32.totalorder %s140, %s141
    %p150 = scmp.eq.s32.totalorder %s25, 0
    %p151 = por %p149, %p150
    %p152 = scmp.ne.s32.totalorder %s140, %s141
    %p153 = scmp.eq.s32.totalorder %s26, 7
    %p154 = por %p152, %p153
    %p156 = scmp.ne.s32.totalorder %s141, %s155
    %p157 = scmp.eq.s32.totalorder %s26, 0
    %p158 = por %p156, %p157
    %s160 = sadd.s32 %s159, 1
    %p163 = scmp.eq.s32.totalorder %s20, 7
    %p164 = scmp.ne.s32.totalorder %s159, %s161
    %p165 = scmp.eq.s32.totalorder %s20, 0
    %p166 = por %p164, %p165
    %p167 = scmp.ne.s32.totalorder %s159, %s161
    %p168 = scmp.eq.s32.totalorder %s25, 7
    %p169 = por %p167, %p168
    %p170 = scmp.ne.s32.totalorder %s161, %s162
    %p171 = scmp.eq.s32.totalorder %s25, 0
    %p172 = por %p170, %p171
    %p173 = scmp.ne.s32.totalorder %s161, %s162
    %p174 = scmp.eq.s32.totalorder %s26, 7
    %p175 = por %p173, %p174
    %p177 = scmp.ne.s32.totalorder %s162, %s176
    %p178 = scmp.eq.s32.totalorder %s26, 0
    %p179 = por %p177, %p178
    %s181 = sadd.s32 %s180, 1
    %p184 = scmp.eq.s32.totalorder %s20, 7
    %p185 = scmp.ne.s32.totalorder %s180, %s182
    %p186 = scmp.eq.s32.totalorder %s20, 0
    %p187 = por %p185, %p186
    %p188 = scmp.ne.s32.totalorder %s180, %s182
    %p189 = scmp.eq.s32.totalorder %s25, 7
    %p190 = por %p188, %p189
    %p191 = scmp.ne.s32.totalorder %s182, %s183
    %p192 = scmp.eq.s32.totalorder %s25, 0
    %p193 = por %p191, %p192
    %p194 = scmp.ne.s32.totalorder %s182, %s183
    %p195 = scmp.eq.s32.totalorder %s26, 7
    %p196 = por %p194, %p195
    %p198 = scmp.ne.s32.totalorder %s183, %s197
    %p199 = scmp.eq.s32.totalorder %s26, 0
    %p200 = por %p198, %p199
    %s202 = sadd.s32 %s201, 1
    %p205 = scmp.eq.s32.totalorder %s20, 7
    %p206 = scmp.ne.s32.totalorder %s201, %s203
    %p207 = scmp.eq.s32.totalorder %s20, 0
    %p208 = por %p206, %p207
    %p209 = scmp.ne.s32.totalorder %s201, %s203
    %p210 = scmp.eq.s32.totalorder %s25, 7
    %p211 = por %p209, %p210
    %p212 = scmp.ne.s32.totalorder %s203, %s204
    %p213 = scmp.eq.s32.totalorder %s25, 0
    %p214 = por %p212, %p213
    %p215 = scmp.ne.s32.totalorder %s203, %s204
    %p216 = scmp.eq.s32.totalorder %s26, 7
    %p217 = por %p215, %p216
    %p219 = scmp.ne.s32.totalorder %s204, %s218
    %p220 = scmp.eq.s32.totalorder %s26, 0
    %p221 = por %p219, %p220
    %s223 = sadd.s32 %s222, 1
    %p226 = scmp.eq.s32.totalorder %s20, 7
    %p227 = scmp.ne.s32.totalorder %s222, %s224
    %p228 = scmp.eq.s32.totalorder %s20, 0
    %p229 = por %p227, %p228
    %p230 = scmp.ne.s32.totalorder %s222, %s224
    %p231 = scmp.eq.s32.totalorder %s25, 7
    %p232 = por %p230, %p231
    %p233 = scmp.ne.s32.totalorder %s224, %s225
    %p234 = scmp.eq.s32.totalorder %s25, 0
    %p235 = por %p233, %p234
    %p236 = scmp.ne.s32.totalorder %s224, %s225
    %p237 = scmp.eq.s32.totalorder %s26, 7
    %p238 = por %p236, %p237
    %p240 = scmp.ne.s32.totalorder %s225, %s239
    %p241 = scmp.eq.s32.totalorder %s26, 0
    %p242 = por %p240, %p241
    %s244 = sadd.s32 %s243, 1
    %p247 = scmp.eq.s32.totalorder %s20, 7
    %p248 = scmp.ne.s32.totalorder %s243, %s245
    %p249 = scmp.eq.s32.totalorder %s20, 0
    %p250 = por %p248, %p249
    %p251 = scmp.ne.s32.totalorder %s243, %s245
    %p252 = scmp.eq.s32.totalorder %s25, 7
    %p253 = por %p251, %p252
    %p254 = scmp.ne.s32.totalorder %s245, %s246
    %p255 = scmp.eq.s32.totalorder %s25, 0
    %p256 = por %p254, %p255
    %p257 = scmp.ne.s32.totalorder %s245, %s246
    %p258 = scmp.eq.s32.totalorder %s26, 7
    %p259 = por %p257, %p258
    %p261 = scmp.ne.s32.totalorder %s246, %s260
    %p262 = scmp.eq.s32.totalorder %s26, 0
    %p263 = por %p261, %p262
    %s265 = sadd.s32 %s264, 1
    %p268 = scmp.eq.s32.totalorder %s20, 7
    %p269 = scmp.ne.s32.totalorder %s264, %s266
    %p270 = scmp.eq.s32.totalorder %s20, 0
    %p271 = por %p269, %p270
    %p272 = scmp.ne.s32.totalorder %s264, %s266
    %p273 = scmp.eq.s32.totalorder %s25, 7
    %p274 = por %p272, %p273
    %p275 = scmp.ne.s32.totalorder %s266, %s267
    %p276 = scmp.eq.s32.totalorder %s25, 0
    %p277 = por %p275, %p276
    %p278 = scmp.ne.s32.totalorder %s266, %s267
    %p279 = scmp.eq.s32.totalorder %s26, 7
    %p280 = por %p278, %p279
    %p282 = scmp.ne.s32.totalorder %s267, %s281
    %p283 = scmp.eq.s32.totalorder %s26, 0
    %p284 = por %p282, %p283
    %s286 = sadd.s32 %s285, 1
    %p289 = scmp.eq.s32.totalorder %s20, 7
    %p290 = scmp.ne.s32.totalorder %s285, %s287
    %p291 = scmp.eq.s32.totalorder %s20, 0
    %p292 = por %p290, %p291
    %p293 = scmp.ne.s32.totalorder %s285, %s287
    %p294 = scmp.eq.s32.totalorder %s25, 7
    %p295 = por %p293, %p294
    %p296 = scmp.ne.s32.totalorder %s287, %s288
    %p297 = scmp.eq.s32.totalorder %s25, 0
    %p298 = por %p296, %p297
    %p299 = scmp.ne.s32.totalorder %s287, %s288
    %p300 = scmp.eq.s32.totalorder %s26, 7
    %p301 = por %p299, %p300
    %p303 = scmp.ne.s32.totalorder %s288, %s302
    %p304 = scmp.eq.s32.totalorder %s26, 0
    %p305 = por %p303, %p304
    %s307 = sadd.s32 %s306, 1
    %p310 = scmp.eq.s32.totalorder %s20, 7
    %p311 = scmp.ne.s32.totalorder %s306, %s308
    %p312 = scmp.eq.s32.totalorder %s20, 0
    %p313 = por %p311, %p312
    %p314 = scmp.ne.s32.totalorder %s306, %s308
    %p315 = scmp.eq.s32.totalorder %s25, 7
    %p316 = por %p314, %p315
    %p317 = scmp.ne.s32.totalorder %s308, %s309
    %p318 = scmp.eq.s32.totalorder %s25, 0
    %p319 = por %p317, %p318
    %p320 = scmp.ne.s32.totalorder %s308, %s309
    %p321 = scmp.eq.s32.totalorder %s26, 7
    %p322 = por %p320, %p321
    %p324 = scmp.ne.s32.totalorder %s309, %s323
    %p325 = scmp.eq.s32.totalorder %s26, 0
    %p326 = por %p324, %p325
    %s327 = ssub.s32 %s20, %s27
    %p328 = scmp.eq.s32.totalorder %s327, 0
    %s330 = sadd.s32 %s329, 1
    %s331 = scalar_select %p328, %s329, %s330
    %p334 = pneg %p328
    %p335 = scmp.eq.s32.totalorder %s20, 7
    %p336 = por %p334, %p335
    %p337 = scmp.ne.s32.totalorder %s329, %s332
    %p338 = scmp.eq.s32.totalorder %s20, 0
    %p339 = por %p337, %p338
    %p340 = scmp.ne.s32.totalorder %s329, %s332
    %p341 = scmp.eq.s32.totalorder %s25, 7
    %p342 = por %p340, %p341
    %p343 = scmp.ne.s32.totalorder %s332, %s333
    %p344 = scmp.eq.s32.totalorder %s25, 0
    %p345 = por %p343, %p344
    %p346 = scmp.ne.s32.totalorder %s332, %s333
    %p347 = scmp.eq.s32.totalorder %s26, 7
    %p348 = por %p346, %p347
    %p350 = scmp.ne.s32.totalorder %s333, %s349
    %p351 = scmp.eq.s32.totalorder %s26, 0
    %p352 = por %p350, %p351
    %p353 = scmp.le.s32.totalorder 1, %s20
    %p354 = scmp.lt.s32.totalorder %s20, 9
    %p355 = pnand %p353, %p354
    %p356 = pneg %p355
    // Predicated region
    $region9: #{net_forward.1} parent=5 // pred_check
      _
    $region10: #{net_forward.1} parent=5 // pred_check_branch
      %358 = sbr.rel (%p355) target = $region12
    $region11: #{net_forward.1} parent=5 // pred_region
      %s359 = ssub.s32 %s20, 1
      // Predicated region
      $region13: #{net_forward.1} parent=11 // pred_check
        %p360 = pneg %p67
      $region14: #{net_forward.1} parent=11 // pred_check_branch
        %362 = sbr.rel (%p360) target = $region16
      $region15: #{net_forward.1} parent=11 // pred_region
        _
      $region16: #{net_forward.1} parent=11 // pred_fallthru
        _
      // Predicated region
      $region17: #{net_forward.1} parent=11 // pred_check
        %p363 = pneg %p88
      $region18: #{net_forward.1} parent=11 // pred_check_branch
        %365 = sbr.rel (%p363) target = $region20
      $region19: #{net_forward.1} parent=11 // pred_region
        _
      $region20: #{net_forward.1} parent=11 // pred_fallthru
        _
      // Predicated region
      $region21: #{net_forward.1} parent=11 // pred_check
        %p366 = pneg %p109
      $region22: #{net_forward.1} parent=11 // pred_check_branch
        %368 = sbr.rel (%p366) target = $region24
      $region23: #{net_forward.1} parent=11 // pred_region
        _
      $region24: #{net_forward.1} parent=11 // pred_fallthru
        _
      // Predicated region
      $region25: #{net_forward.1} parent=11 // pred_check
        %p369 = pneg %p130
      $region26: #{net_forward.1} parent=11 // pred_check_branch
        %371 = sbr.rel (%p369) target = $region28
      $region27: #{net_forward.1} parent=11 // pred_region
        _
      $region28: #{net_forward.1} parent=11 // pred_fallthru
        _
      // Predicated region
      $region29: #{net_forward.1} parent=11 // pred_check
        %p372 = pneg %p151
      $region30: #{net_forward.1} parent=11 // pred_check_branch
        %374 = sbr.rel (%p372) target = $region32
      $region31: #{net_forward.1} parent=11 // pred_region
        _
      $region32: #{net_forward.1} parent=11 // pred_fallthru
        _
      // Predicated region
      $region33: #{net_forward.1} parent=11 // pred_check
        %p375 = pneg %p172
      $region34: #{net_forward.1} parent=11 // pred_check_branch
        %377 = sbr.rel (%p375) target = $region36
      $region35: #{net_forward.1} parent=11 // pred_region
        _
      $region36: #{net_forward.1} parent=11 // pred_fallthru
        _
      // Predicated region
      $region37: #{net_forward.1} parent=11 // pred_check
        %p378 = pneg %p193
      $region38: #{net_forward.1} parent=11 // pred_check_branch
        %380 = sbr.rel (%p378) target = $region40
      $region39: #{net_forward.1} parent=11 // pred_region
        _
      $region40: #{net_forward.1} parent=11 // pred_fallthru
        _
      // Predicated region
      $region41: #{net_forward.1} parent=11 // pred_check
        %p381 = pneg %p214
      $region42: #{net_forward.1} parent=11 // pred_check_branch
        %383 = sbr.rel (%p381) target = $region44
      $region43: #{net_forward.1} parent=11 // pred_region
        _
      $region44: #{net_forward.1} parent=11 // pred_fallthru
        _
      // Predicated region
      $region45: #{net_forward.1} parent=11 // pred_check
        %p384 = pneg %p235
      $region46: #{net_forward.1} parent=11 // pred_check_branch
        %386 = sbr.rel (%p384) target = $region48
      $region47: #{net_forward.1} parent=11 // pred_region
        _
      $region48: #{net_forward.1} parent=11 // pred_fallthru
        _
      // Predicated region
      $region49: #{net_forward.1} parent=11 // pred_check
        %p387 = pneg %p256
      $region50: #{net_forward.1} parent=11 // pred_check_branch
        %389 = sbr.rel (%p387) target = $region52
      $region51: #{net_forward.1} parent=11 // pred_region
        _
      $region52: #{net_forward.1} parent=11 // pred_fallthru
        _
      // Predicated region
      $region53: #{net_forward.1} parent=11 // pred_check
        %p390 = pneg %p277
      $region54: #{net_forward.1} parent=11 // pred_check_branch
        %392 = sbr.rel (%p390) target = $region56
      $region55: #{net_forward.1} parent=11 // pred_region
        _
      $region56: #{net_forward.1} parent=11 // pred_fallthru
        _
      // Predicated region
      $region57: #{net_forward.1} parent=11 // pred_check
        %p393 = pneg %p298
      $region58: #{net_forward.1} parent=11 // pred_check_branch
        %395 = sbr.rel (%p393) target = $region60
      $region59: #{net_forward.1} parent=11 // pred_region
        _
      $region60: #{net_forward.1} parent=11 // pred_fallthru
        _
      // Predicated region
      $region61: #{net_forward.1} parent=11 // pred_check
        %p396 = pneg %p319
      $region62: #{net_forward.1} parent=11 // pred_check_branch
        %398 = sbr.rel (%p396) target = $region64
      $region63: #{net_forward.1} parent=11 // pred_region
        _
      $region64: #{net_forward.1} parent=11 // pred_fallthru
        _
    $region12: #{net_forward.1} parent=5 // pred_fallthru
      _
    %p399 = scmp.lt.s32.totalorder %s20, 8
    // Predicated region
    $region65: #{net_forward.1} parent=5 // pred_check
      %p400 = pneg %p399
    $region66: #{net_forward.1} parent=5 // pred_check_branch
      %402 = sbr.rel (%p400) target = $region68
    $region67: #{net_forward.1} parent=5 // pred_region
      // Predicated region
      $region69: #{net_forward.1} parent=67 // pred_check
        %p403 = pneg %p40
      $region70: #{net_forward.1} parent=67 // pred_check_branch
        %405 = sbr.rel (%p403) target = $region72
      $region71: #{net_forward.1} parent=67 // pred_region
        %s406 = smul.u32 28, %s20
        %p407 = scmp.lt.s32.totalorder %s406, 223
        %s408 = scalar_select %p407, %s406, 223
        %s409 = smul.addr %s408, 8
        %s410 = scalar_lea.vmem %s0, %s409
        %s411 = smul.u32 28, %s20
      $region72: #{net_forward.1} parent=67 // pred_fallthru
        _
    $region68: #{net_forward.1} parent=5 // pred_fallthru
      _
    %p412 = scmp.le.s32.totalorder 1, %s20
    %p413 = scmp.lt.s32.totalorder %s20, 9
    %p414 = pnand %p412, %p413
    %p415 = pneg %p414
    // Predicated region
    $region73: #{net_forward.1} parent=5 // pred_check
      _
    $region74: #{net_forward.1} parent=5 // pred_check_branch
      %417 = sbr.rel (%p414) target = $region76
    $region75: #{net_forward.1} parent=5 // pred_region
      %s418 = ssub.s32 %s20, 1
      %s419 = smul.u32 28, %s25
      %p420 = scmp.lt.s32.totalorder %s419, 223
      %s421 = scalar_select %p420, %s419, 223
      %s422 = smul.addr %s421, 8
      %s423 = scalar_lea.vmem %s0, %s422
      %p424 = pneg %p46
      %p425 = pneg %p43
      %p426 = pneg %p67
      %p427 = pneg %p64
      %p428 = pneg %p88
      %p429 = pneg %p85
      %p430 = pneg %p109
      %p431 = pneg %p106
      %p432 = pneg %p130
      %p433 = pneg %p127
      %p434 = pneg %p151
      %p435 = pneg %p148
      %p436 = pneg %p172
      %p437 = pneg %p169
      %p438 = pneg %p193
      %p439 = pneg %p190
      %p440 = pneg %p214
      %p441 = pneg %p211
      %p442 = pneg %p235
      %p443 = pneg %p232
      %p444 = pneg %p256
      %p445 = pneg %p253
      %p446 = pneg %p277
      %p447 = pneg %p274
      %p448 = pneg %p298
      %p449 = pneg %p295
      %p450 = pneg %p319
      %p451 = pneg %p316
      %p452 = pneg %p345
      %p453 = pneg %p342
      %p454 = scmp.lt.s32.totalorder %s25, 7
      %s455 = scalar_select %p454, %s25, 7
      %s456 = smul.addr %s455, 8
      %s457 = scalar_lea.vmem %s14, %s456
      %s458 = smul.u32 28, %s25
      %p459 = scmp.lt.s32.totalorder %s458, 223
      %s460 = scalar_select %p459, %s458, 223
      %s461 = smul.addr %s460, 8
      %s462 = scalar_lea.vmem %s0, %s461
      %s463 = smul.u32 28, %s25
      %p464 = scmp.lt.s32.totalorder %s25, 7
      %s465 = scalar_select %p464, %s25, 7
      %s466 = smul.addr %s465, 8
      %s467 = scalar_lea.vmem %s14, %s466
      %v468 = vld [vmem:[%s462] sm:$0xff]
      %v469 = vld [vmem:[%s462 + $0x8] sm:$0xff]
      %v470 = vld [vmem:[%s462 + $0x10] sm:$0xff]
      %v471 = vld [vmem:[%s462 + $0x18] sm:$0xff]
      %v472 = vld [vmem:[%s462 + $0x20] sm:$0xff]
      %v473 = vld [vmem:[%s462 + $0x28] sm:$0xff]
      %v474 = vld [vmem:[%s462 + $0x30] sm:$0xff]
      %v475 = vld [vmem:[%s462 + $0x38] sm:$0xff]
      %v476 = vld [vmem:[%s462 + $0x40] sm:$0xff]
      %v477 = vld [vmem:[%s462 + $0x48] sm:$0xff]
      %v478 = vld [vmem:[%s462 + $0x50] sm:$0xff]
      %v479 = vld [vmem:[%s462 + $0x58] sm:$0xff]
      %v480 = vld [vmem:[%s462 + $0x60] sm:$0xff]
      %v481 = vld [vmem:[%s462 + $0x68] sm:$0xff]
      %v482 = vld [vmem:[%s462 + $0x70] sm:$0xff]
      %v483 = vld [vmem:[%s462 + $0x78] sm:$0xff]
      %v484 = vld [vmem:[%s462 + $0x80] sm:$0xff]
      %v485 = vld [vmem:[%s462 + $0x88] sm:$0xff]
      %v486 = vld [vmem:[%s462 + $0x90] sm:$0xff]
      %v487 = vld [vmem:[%s462 + $0x98] sm:$0xff]
      %v488 = vld [vmem:[%s462 + $0xa0] sm:$0xff]
      %v489 = vld [vmem:[%s462 + $0xa8] sm:$0xff]
      %v490 = vld [vmem:[%s462 + $0xb0] sm:$0xff]
      %v491 = vld [vmem:[%s462 + $0xb8] sm:$0xff]
      %v492 = vld [vmem:[%s462 + $0xc0] sm:$0xff]
      %v493 = vld [vmem:[%s462 + $0xc8] sm:$0xff]
      %v494 = vld [vmem:[%s462 + $0xd0] sm:$0xff]
      %v495 = vld [vmem:[%s462 + $0xd8] sm:$0xff]
      %v496 = vld [vmem:[%s1] sm:$0xff]
      %v497 = vld [vmem:[%s1 + $0x8] sm:$0xff]
      %v498 = vld [vmem:[%s1 + $0x10] sm:$0xff]
      %v499 = vld [vmem:[%s1 + $0x18] sm:$0xff]
      %v500 = vld [vmem:[%s1 + $0x20] sm:$0xff]
      %v501 = vld [vmem:[%s1 + $0x28] sm:$0xff]
      %v502 = vld [vmem:[%s1 + $0x30] sm:$0xff]
      %v503 = vld [vmem:[%s1 + $0x38] sm:$0xff]
      %v504 = vld [vmem:[%s1 + $0x40] sm:$0xff]
      %v505 = vld [vmem:[%s1 + $0x48] sm:$0xff]
      %v506 = vld [vmem:[%s1 + $0x50] sm:$0xff]
      %v507 = vld [vmem:[%s1 + $0x58] sm:$0xff]
      %v508 = vld [vmem:[%s1 + $0x60] sm:$0xff]
      %v509 = vld [vmem:[%s1 + $0x68] sm:$0xff]
      %v510 = vld [vmem:[%s1 + $0x70] sm:$0xff]
      %v511 = vld [vmem:[%s1 + $0x78] sm:$0xff]
      %v512 = vld [vmem:[%s1 + $0x80] sm:$0xff]
      %v513 = vld [vmem:[%s1 + $0x88] sm:$0xff]
      %v514 = vld [vmem:[%s1 + $0x90] sm:$0xff]
      %v515 = vld [vmem:[%s1 + $0x98] sm:$0xff]
      %v516 = vld [vmem:[%s1 + $0xa0] sm:$0xff]
      %v517 = vld [vmem:[%s1 + $0xa8] sm:$0xff]
      %v518 = vld [vmem:[%s1 + $0xb0] sm:$0xff]
      %v519 = vld [vmem:[%s1 + $0xb8] sm:$0xff]
      %v520 = vld [vmem:[%s1 + $0xc0] sm:$0xff]
      %v521 = vld [vmem:[%s1 + $0xc8] sm:$0xff]
      %v522 = vld [vmem:[%s1 + $0xd0] sm:$0xff]
      %v523 = vld [vmem:[%s1 + $0xd8] sm:$0xff]
      %v524 = vld [vmem:[%s1 + $0xe0] sm:$0xff]
      %v525 = vld [vmem:[%s1 + $0xe8] sm:$0xff]
      %v526 = vld [vmem:[%s1 + $0xf0] sm:$0xff]
      %v527 = vld [vmem:[%s1 + $0xf8] sm:$0xff]
      %v528 = vld [vmem:[%s1 + $0x100] sm:$0xff]
      %v529 = vld [vmem:[%s1 + $0x108] sm:$0xff]
      %v530 = vld [vmem:[%s1 + $0x110] sm:$0xff]
      %v531 = vld [vmem:[%s1 + $0x118] sm:$0xff]
      %v532 = vld [vmem:[%s1 + $0x120] sm:$0xff]
      %v533 = vld [vmem:[%s1 + $0x128] sm:$0xff]
      %v534 = vld [vmem:[%s1 + $0x130] sm:$0xff]
      %v535 = vld [vmem:[%s1 + $0x138] sm:$0xff]
      %v536 = vld [vmem:[%s1 + $0x140] sm:$0xff]
      %v537 = vld [vmem:[%s1 + $0x148] sm:$0xff]
      %v538 = vld [vmem:[%s1 + $0x150] sm:$0xff]
      %v539 = vld [vmem:[%s1 + $0x158] sm:$0xff]
      %v540 = vld [vmem:[%s1 + $0x160] sm:$0xff]
      %v541 = vld [vmem:[%s1 + $0x168] sm:$0xff]
      %v542 = vld [vmem:[%s1 + $0x170] sm:$0xff]
      %v543 = vld [vmem:[%s1 + $0x178] sm:$0xff]
      %v544 = vld [vmem:[%s1 + $0x180] sm:$0xff]
      %v545 = vld [vmem:[%s1 + $0x188] sm:$0xff]
      %v546 = vld [vmem:[%s1 + $0x190] sm:$0xff]
      %v547 = vld [vmem:[%s1 + $0x198] sm:$0xff]
      %v548 = vld [vmem:[%s1 + $0x1a0] sm:$0xff]
      %v549 = vld [vmem:[%s1 + $0x1a8] sm:$0xff]
      %v550 = vld [vmem:[%s1 + $0x1b0] sm:$0xff]
      %v551 = vld [vmem:[%s1 + $0x1b8] sm:$0xff]
      %vm552 = vcmask 785408
      %v554 = vsel %vm552, %v497, 0
      %v557 = vsel %vm552, %v499, 0
      %v560 = vsel %vm552, %v501, 0
      %v563 = vsel %vm552, %v503, 0
      %v566 = vsel %vm552, %v505, 0
      %v569 = vsel %vm552, %v507, 0
      %v572 = vsel %vm552, %v509, 0
      %v575 = vsel %vm552, %v511, 0
      %v578 = vsel %vm552, %v513, 0
      %v581 = vsel %vm552, %v515, 0
      %v584 = vsel %vm552, %v517, 0
      %v587 = vsel %vm552, %v519, 0
      %v590 = vsel %vm552, %v521, 0
      %v593 = vsel %vm552, %v523, 0
      %v596 = vsel %vm552, %v525, 0
      %v599 = vsel %vm552, %v527, 0
      %v602 = vsel %vm552, %v529, 0
      %v605 = vsel %vm552, %v531, 0
      %v608 = vsel %vm552, %v533, 0
      %v611 = vsel %vm552, %v535, 0
      %v614 = vsel %vm552, %v537, 0
      %v617 = vsel %vm552, %v539, 0
      %v620 = vsel %vm552, %v541, 0
      %v623 = vsel %vm552, %v543, 0
      %v626 = vsel %vm552, %v545, 0
      %v629 = vsel %vm552, %v547, 0
      %v632 = vsel %vm552, %v549, 0
      %v635 = vsel %vm552, %v551, 0
      %637 = vmatpush.msra.mxu0 %v483
      %638 = vmatpush.msra.mxu0 %v482
      %639 = vmatpush.msra.mxu0 %v481
      %640 = vmatpush.msra.mxu0 %v480
      %641 = vmatpush.msra.mxu0 %v479
      %642 = vmatpush.msra.mxu0 %v478
      %643 = vmatpush.msra.mxu0 %v477
      %644 = vmatpush.msra.mxu0 %v476
      %645 = vmatpush.msra.mxu0 %v475
      %646 = vmatpush.msra.mxu0 %v474
      %647 = vmatpush.msra.mxu0 %v473
      %648 = vmatpush.msra.mxu0 %v472
      %649 = vmatpush.msra.mxu0 %v471
      %650 = vmatpush.msra.mxu0 %v470
      %651 = vmatpush.msra.mxu0 %v469
      %652 = vmatpush.msra.mxu0 %v468
      %653 = vmatmul.f32.gmra.mxu0 %v496
      %v654 = vpop.f32.mrf.mxu0
      %v655 = vadd.f32 0.0, %v654
      %656 = vmatmul.f32.gmra.mxu0 %v498
      %v657 = vpop.f32.mrf.mxu0
      %v658 = vadd.f32 0.0, %v657
      %659 = vmatmul.f32.gmra.mxu0 %v500
      %v660 = vpop.f32.mrf.mxu0
      %v661 = vadd.f32 0.0, %v660
      %662 = vmatmul.f32.gmra.mxu0 %v502
      %v663 = vpop.f32.mrf.mxu0
      %v664 = vadd.f32 0.0, %v663
      %665 = vmatmul.f32.gmra.mxu0 %v504
      %v666 = vpop.f32.mrf.mxu0
      %v667 = vadd.f32 0.0, %v666
      %668 = vmatmul.f32.gmra.mxu0 %v506
      %v669 = vpop.f32.mrf.mxu0
      %v670 = vadd.f32 0.0, %v669
      %671 = vmatmul.f32.gmra.mxu0 %v508
      %v672 = vpop.f32.mrf.mxu0
      %v673 = vadd.f32 0.0, %v672
      %674 = vmatmul.f32.gmra.mxu0 %v510
      %v675 = vpop.f32.mrf.mxu0
      %v676 = vadd.f32 0.0, %v675
      %677 = vmatmul.f32.gmra.mxu0 %v512
      %v678 = vpop.f32.mrf.mxu0
      %v679 = vadd.f32 0.0, %v678
      %680 = vmatmul.f32.gmra.mxu0 %v514
      %v681 = vpop.f32.mrf.mxu0
      %v682 = vadd.f32 0.0, %v681
      %683 = vmatmul.f32.gmra.mxu0 %v516
      %v684 = vpop.f32.mrf.mxu0
      %v685 = vadd.f32 0.0, %v684
      %686 = vmatmul.f32.gmra.mxu0 %v518
      %v687 = vpop.f32.mrf.mxu0
      %v688 = vadd.f32 0.0, %v687
      %689 = vmatmul.f32.gmra.mxu0 %v520
      %v690 = vpop.f32.mrf.mxu0
      %v691 = vadd.f32 0.0, %v690
      %692 = vmatmul.f32.gmra.mxu0 %v522
      %v693 = vpop.f32.mrf.mxu0
      %v694 = vadd.f32 0.0, %v693
      %695 = vmatmul.f32.gmra.mxu0 %v524
      %v696 = vpop.f32.mrf.mxu0
      %v697 = vadd.f32 0.0, %v696
      %698 = vmatmul.f32.gmra.mxu0 %v526
      %v699 = vpop.f32.mrf.mxu0
      %v700 = vadd.f32 0.0, %v699
      %701 = vmatmul.f32.gmra.mxu0 %v528
      %v702 = vpop.f32.mrf.mxu0
      %v703 = vadd.f32 0.0, %v702
      %704 = vmatmul.f32.gmra.mxu0 %v530
      %v705 = vpop.f32.mrf.mxu0
      %v706 = vadd.f32 0.0, %v705
      %707 = vmatmul.f32.gmra.mxu0 %v532
      %v708 = vpop.f32.mrf.mxu0
      %v709 = vadd.f32 0.0, %v708
      %710 = vmatmul.f32.gmra.mxu0 %v534
      %v711 = vpop.f32.mrf.mxu0
      %v712 = vadd.f32 0.0, %v711
      %713 = vmatmul.f32.gmra.mxu0 %v536
      %v714 = vpop.f32.mrf.mxu0
      %v715 = vadd.f32 0.0, %v714
      %716 = vmatmul.f32.gmra.mxu0 %v538
      %v717 = vpop.f32.mrf.mxu0
      %v718 = vadd.f32 0.0, %v717
      %719 = vmatmul.f32.gmra.mxu0 %v540
      %v720 = vpop.f32.mrf.mxu0
      %v721 = vadd.f32 0.0, %v720
      %722 = vmatmul.f32.gmra.mxu0 %v542
      %v723 = vpop.f32.mrf.mxu0
      %v724 = vadd.f32 0.0, %v723
      %725 = vmatmul.f32.gmra.mxu0 %v544
      %v726 = vpop.f32.mrf.mxu0
      %v727 = vadd.f32 0.0, %v726
      %728 = vmatmul.f32.gmra.mxu0 %v546
      %v729 = vpop.f32.mrf.mxu0
      %v730 = vadd.f32 0.0, %v729
      %731 = vmatmul.f32.gmra.mxu0 %v548
      %v732 = vpop.f32.mrf.mxu0
      %v733 = vadd.f32 0.0, %v732
      %734 = vmatmul.f32.gmra.mxu0 %v550
      %v735 = vpop.f32.mrf.mxu0
      %v736 = vadd.f32 0.0, %v735
      %737 = vdwg.mxu0
      %738 = vmatpush.msra.mxu0 0.0
      %739 = vmatpush.msra.mxu0 0.0
      %740 = vmatpush.msra.mxu0 0.0
      %741 = vmatpush.msra.mxu0 0.0
      %742 = vmatpush.msra.mxu0 %v495
      %743 = vmatpush.msra.mxu0 %v494
      %744 = vmatpush.msra.mxu0 %v493
      %745 = vmatpush.msra.mxu0 %v492
      %746 = vmatpush.msra.mxu0 %v491
      %747 = vmatpush.msra.mxu0 %v490
      %748 = vmatpush.msra.mxu0 %v489
      %749 = vmatpush.msra.mxu0 %v488
      %750 = vmatpush.msra.mxu0 %v487
      %751 = vmatpush.msra.mxu0 %v486
      %752 = vmatpush.msra.mxu0 %v485
      %753 = vmatpush.msra.mxu0 %v484
      %754 = vmatmul.f32.gmra.mxu0 %v554
      %v755 = vpop.f32.mrf.mxu0
      %v756 = vadd.f32 %v655, %v755
      %757 = vmatmul.f32.gmra.mxu0 %v557
      %v758 = vpop.f32.mrf.mxu0
      %v759 = vadd.f32 %v658, %v758
      %760 = vmatmul.f32.gmra.mxu0 %v560
      %v761 = vpop.f32.mrf.mxu0
      %v762 = vadd.f32 %v661, %v761
      %763 = vmatmul.f32.gmra.mxu0 %v563
      %v764 = vpop.f32.mrf.mxu0
      %v765 = vadd.f32 %v664, %v764
      %766 = vmatmul.f32.gmra.mxu0 %v566
      %v767 = vpop.f32.mrf.mxu0
      %v768 = vadd.f32 %v667, %v767
      %769 = vmatmul.f32.gmra.mxu0 %v569
      %v770 = vpop.f32.mrf.mxu0
      %v771 = vadd.f32 %v670, %v770
      %772 = vmatmul.f32.gmra.mxu0 %v572
      %v773 = vpop.f32.mrf.mxu0
      %v774 = vadd.f32 %v673, %v773
      %775 = vmatmul.f32.gmra.mxu0 %v575
      %v776 = vpop.f32.mrf.mxu0
      %v777 = vadd.f32 %v676, %v776
      %778 = vmatmul.f32.gmra.mxu0 %v578
      %v779 = vpop.f32.mrf.mxu0
      %v780 = vadd.f32 %v679, %v779
      %781 = vmatmul.f32.gmra.mxu0 %v581
      %v782 = vpop.f32.mrf.mxu0
      %v783 = vadd.f32 %v682, %v782
      %784 = vmatmul.f32.gmra.mxu0 %v584
      %v785 = vpop.f32.mrf.mxu0
      %v786 = vadd.f32 %v685, %v785
      %787 = vmatmul.f32.gmra.mxu0 %v587
      %v788 = vpop.f32.mrf.mxu0
      %v789 = vadd.f32 %v688, %v788
      %790 = vmatmul.f32.gmra.mxu0 %v590
      %v791 = vpop.f32.mrf.mxu0
      %v792 = vadd.f32 %v691, %v791
      %793 = vmatmul.f32.gmra.mxu0 %v593
      %v794 = vpop.f32.mrf.mxu0
      %v795 = vadd.f32 %v694, %v794
      %796 = vmatmul.f32.gmra.mxu0 %v596
      %v797 = vpop.f32.mrf.mxu0
      %v798 = vadd.f32 %v697, %v797
      %799 = vmatmul.f32.gmra.mxu0 %v599
      %v800 = vpop.f32.mrf.mxu0
      %v801 = vadd.f32 %v700, %v800
      %802 = vmatmul.f32.gmra.mxu0 %v602
      %v803 = vpop.f32.mrf.mxu0
      %v804 = vadd.f32 %v703, %v803
      %805 = vmatmul.f32.gmra.mxu0 %v605
      %v806 = vpop.f32.mrf.mxu0
      %v807 = vadd.f32 %v706, %v806
      %808 = vmatmul.f32.gmra.mxu0 %v608
      %v809 = vpop.f32.mrf.mxu0
      %v810 = vadd.f32 %v709, %v809
      %811 = vmatmul.f32.gmra.mxu0 %v611
      %v812 = vpop.f32.mrf.mxu0
      %v813 = vadd.f32 %v712, %v812
      %814 = vmatmul.f32.gmra.mxu0 %v614
      %v815 = vpop.f32.mrf.mxu0
      %v816 = vadd.f32 %v715, %v815
      %817 = vmatmul.f32.gmra.mxu0 %v617
      %v818 = vpop.f32.mrf.mxu0
      %v819 = vadd.f32 %v718, %v818
      %820 = vmatmul.f32.gmra.mxu0 %v620
      %v821 = vpop.f32.mrf.mxu0
      %v822 = vadd.f32 %v721, %v821
      %823 = vmatmul.f32.gmra.mxu0 %v623
      %v824 = vpop.f32.mrf.mxu0
      %v825 = vadd.f32 %v724, %v824
      %826 = vmatmul.f32.gmra.mxu0 %v626
      %v827 = vpop.f32.mrf.mxu0
      %v828 = vadd.f32 %v727, %v827
      %829 = vmatmul.f32.gmra.mxu0 %v629
      %v830 = vpop.f32.mrf.mxu0
      %v831 = vadd.f32 %v730, %v830
      %832 = vmatmul.f32.gmra.mxu0 %v632
      %v833 = vpop.f32.mrf.mxu0
      %v834 = vadd.f32 %v733, %v833
      %835 = vmatmul.f32.gmra.mxu0 %v635
      %v836 = vpop.f32.mrf.mxu0
      %v837 = vadd.f32 %v736, %v836
      %838 = vdwg.mxu0
      %s839 = scalar_lea.vmem %s1, 448
      %v840 = vld [vmem:[%s839] sm:$0xff]
      %v841 = vld [vmem:[%s839 + $0x8] sm:$0xff]
      %v842 = vld [vmem:[%s839 + $0x10] sm:$0xff]
      %v843 = vld [vmem:[%s839 + $0x18] sm:$0xff]
      %v844 = vld [vmem:[%s839 + $0x20] sm:$0xff]
      %v845 = vld [vmem:[%s839 + $0x28] sm:$0xff]
      %v846 = vld [vmem:[%s839 + $0x30] sm:$0xff]
      %v847 = vld [vmem:[%s839 + $0x38] sm:$0xff]
      %v848 = vld [vmem:[%s839 + $0x40] sm:$0xff]
      %v849 = vld [vmem:[%s839 + $0x48] sm:$0xff]
      %v850 = vld [vmem:[%s839 + $0x50] sm:$0xff]
      %v851 = vld [vmem:[%s839 + $0x58] sm:$0xff]
      %v852 = vld [vmem:[%s839 + $0x60] sm:$0xff]
      %v853 = vld [vmem:[%s839 + $0x68] sm:$0xff]
      %v854 = vld [vmem:[%s839 + $0x70] sm:$0xff]
      %v855 = vld [vmem:[%s839 + $0x78] sm:$0xff]
      %v856 = vld [vmem:[%s839 + $0x80] sm:$0xff]
      %v857 = vld [vmem:[%s839 + $0x88] sm:$0xff]
      %v858 = vld [vmem:[%s839 + $0x90] sm:$0xff]
      %v859 = vld [vmem:[%s839 + $0x98] sm:$0xff]
      %v860 = vld [vmem:[%s839 + $0xa0] sm:$0xff]
      %v861 = vld [vmem:[%s839 + $0xa8] sm:$0xff]
      %v862 = vld [vmem:[%s839 + $0xb0] sm:$0xff]
      %v863 = vld [vmem:[%s839 + $0xb8] sm:$0xff]
      %v864 = vld [vmem:[%s839 + $0xc0] sm:$0xff]
      %v865 = vld [vmem:[%s839 + $0xc8] sm:$0xff]
      %v866 = vld [vmem:[%s839 + $0xd0] sm:$0xff]
      %v867 = vld [vmem:[%s839 + $0xd8] sm:$0xff]
      %v868 = vld [vmem:[%s839 + $0xe0] sm:$0xff]
      %v869 = vld [vmem:[%s839 + $0xe8] sm:$0xff]
      %v870 = vld [vmem:[%s839 + $0xf0] sm:$0xff]
      %v871 = vld [vmem:[%s839 + $0xf8] sm:$0xff]
      %v872 = vld [vmem:[%s839 + $0x100] sm:$0xff]
      %v873 = vld [vmem:[%s839 + $0x108] sm:$0xff]
      %v874 = vld [vmem:[%s839 + $0x110] sm:$0xff]
      %v875 = vld [vmem:[%s839 + $0x118] sm:$0xff]
      %v876 = vld [vmem:[%s839 + $0x120] sm:$0xff]
      %v877 = vld [vmem:[%s839 + $0x128] sm:$0xff]
      %v878 = vld [vmem:[%s839 + $0x130] sm:$0xff]
      %v879 = vld [vmem:[%s839 + $0x138] sm:$0xff]
      %v880 = vld [vmem:[%s839 + $0x140] sm:$0xff]
      %v881 = vld [vmem:[%s839 + $0x148] sm:$0xff]
      %v882 = vld [vmem:[%s839 + $0x150] sm:$0xff]
      %v883 = vld [vmem:[%s839 + $0x158] sm:$0xff]
      %v884 = vld [vmem:[%s839 + $0x160] sm:$0xff]
      %v885 = vld [vmem:[%s839 + $0x168] sm:$0xff]
      %v886 = vld [vmem:[%s839 + $0x170] sm:$0xff]
      %v887 = vld [vmem:[%s839 + $0x178] sm:$0xff]
      %v888 = vld [vmem:[%s839 + $0x180] sm:$0xff]
      %v889 = vld [vmem:[%s839 + $0x188] sm:$0xff]
      %v890 = vld [vmem:[%s839 + $0x190] sm:$0xff]
      %v891 = vld [vmem:[%s839 + $0x198] sm:$0xff]
      %v892 = vld [vmem:[%s839 + $0x1a0] sm:$0xff]
      %v893 = vld [vmem:[%s839 + $0x1a8] sm:$0xff]
      %v894 = vld [vmem:[%s839 + $0x1b0] sm:$0xff]
      %v895 = vld [vmem:[%s839 + $0x1b8] sm:$0xff]
      %v897 = vsel %vm552, %v841, 0
      %v900 = vsel %vm552, %v843, 0
      %v903 = vsel %vm552, %v845, 0
      %v906 = vsel %vm552, %v847, 0
      %v909 = vsel %vm552, %v849, 0
      %v912 = vsel %vm552, %v851, 0
      %v915 = vsel %vm552, %v853, 0
      %v918 = vsel %vm552, %v855, 0
      %v921 = vsel %vm552, %v857, 0
      %v924 = vsel %vm552, %v859, 0
      %v927 = vsel %vm552, %v861, 0
      %v930 = vsel %vm552, %v863, 0
      %v933 = vsel %vm552, %v865, 0
      %v936 = vsel %vm552, %v867, 0
      %v939 = vsel %vm552, %v869, 0
      %v942 = vsel %vm552, %v871, 0
      %v945 = vsel %vm552, %v873, 0
      %v948 = vsel %vm552, %v875, 0
      %v951 = vsel %vm552, %v877, 0
      %v954 = vsel %vm552, %v879, 0
      %v957 = vsel %vm552, %v881, 0
      %v960 = vsel %vm552, %v883, 0
      %v963 = vsel %vm552, %v885, 0
      %v966 = vsel %vm552, %v887, 0
      %v969 = vsel %vm552, %v889, 0
      %v972 = vsel %vm552, %v891, 0
      %v975 = vsel %vm552, %v893, 0
      %v978 = vsel %vm552, %v895, 0
      %980 = vmatpush.msra.mxu0 %v483
      %981 = vmatpush.msra.mxu0 %v482
      %982 = vmatpush.msra.mxu0 %v481
      %983 = vmatpush.msra.mxu0 %v480
      %984 = vmatpush.msra.mxu0 %v479
      %985 = vmatpush.msra.mxu0 %v478
      %986 = vmatpush.msra.mxu0 %v477
      %987 = vmatpush.msra.mxu0 %v476
      %988 = vmatpush.msra.mxu0 %v475
      %989 = vmatpush.msra.mxu0 %v474
      %990 = vmatpush.msra.mxu0 %v473
      %991 = vmatpush.msra.mxu0 %v472
      %992 = vmatpush.msra.mxu0 %v471
      %993 = vmatpush.msra.mxu0 %v470
      %994 = vmatpush.msra.mxu0 %v469
      %995 = vmatpush.msra.mxu0 %v468
      %996 = vmatmul.f32.gmra.mxu0 %v840
      %v997 = vpop.f32.mrf.mxu0
      %v998 = vadd.f32 0.0, %v997
      %999 = vmatmul.f32.gmra.mxu0 %v842
      %v1000 = vpop.f32.mrf.mxu0
      %v1001 = vadd.f32 0.0, %v1000
      %1002 = vmatmul.f32.gmra.mxu0 %v844
      %v1003 = vpop.f32.mrf.mxu0
      %v1004 = vadd.f32 0.0, %v1003
      %1005 = vmatmul.f32.gmra.mxu0 %v846
      %v1006 = vpop.f32.mrf.mxu0
      %v1007 = vadd.f32 0.0, %v1006
      %1008 = vmatmul.f32.gmra.mxu0 %v848
      %v1009 = vpop.f32.mrf.mxu0
      %v1010 = vadd.f32 0.0, %v1009
      %1011 = vmatmul.f32.gmra.mxu0 %v850
      %v1012 = vpop.f32.mrf.mxu0
      %v1013 = vadd.f32 0.0, %v1012
      %1014 = vmatmul.f32.gmra.mxu0 %v852
      %v1015 = vpop.f32.mrf.mxu0
      %v1016 = vadd.f32 0.0, %v1015
      %1017 = vmatmul.f32.gmra.mxu0 %v854
      %v1018 = vpop.f32.mrf.mxu0
      %v1019 = vadd.f32 0.0, %v1018
      %1020 = vmatmul.f32.gmra.mxu0 %v856
      %v1021 = vpop.f32.mrf.mxu0
      %v1022 = vadd.f32 0.0, %v1021
      %1023 = vmatmul.f32.gmra.mxu0 %v858
      %v1024 = vpop.f32.mrf.mxu0
      %v1025 = vadd.f32 0.0, %v1024
      %1026 = vmatmul.f32.gmra.mxu0 %v860
      %v1027 = vpop.f32.mrf.mxu0
      %v1028 = vadd.f32 0.0, %v1027
      %1029 = vmatmul.f32.gmra.mxu0 %v862
      %v1030 = vpop.f32.mrf.mxu0
      %v1031 = vadd.f32 0.0, %v1030
      %1032 = vmatmul.f32.gmra.mxu0 %v864
      %v1033 = vpop.f32.mrf.mxu0
      %v1034 = vadd.f32 0.0, %v1033
      %1035 = vmatmul.f32.gmra.mxu0 %v866
      %v1036 = vpop.f32.mrf.mxu0
      %v1037 = vadd.f32 0.0, %v1036
      %1038 = vmatmul.f32.gmra.mxu0 %v868
      %v1039 = vpop.f32.mrf.mxu0
      %v1040 = vadd.f32 0.0, %v1039
      %1041 = vmatmul.f32.gmra.mxu0 %v870
      %v1042 = vpop.f32.mrf.mxu0
      %v1043 = vadd.f32 0.0, %v1042
      %1044 = vmatmul.f32.gmra.mxu0 %v872
      %v1045 = vpop.f32.mrf.mxu0
      %v1046 = vadd.f32 0.0, %v1045
      %1047 = vmatmul.f32.gmra.mxu0 %v874
      %v1048 = vpop.f32.mrf.mxu0
      %v1049 = vadd.f32 0.0, %v1048
      %1050 = vmatmul.f32.gmra.mxu0 %v876
      %v1051 = vpop.f32.mrf.mxu0
      %v1052 = vadd.f32 0.0, %v1051
      %1053 = vmatmul.f32.gmra.mxu0 %v878
      %v1054 = vpop.f32.mrf.mxu0
      %v1055 = vadd.f32 0.0, %v1054
      %1056 = vmatmul.f32.gmra.mxu0 %v880
      %v1057 = vpop.f32.mrf.mxu0
      %v1058 = vadd.f32 0.0, %v1057
      %1059 = vmatmul.f32.gmra.mxu0 %v882
      %v1060 = vpop.f32.mrf.mxu0
      %v1061 = vadd.f32 0.0, %v1060
      %1062 = vmatmul.f32.gmra.mxu0 %v884
      %v1063 = vpop.f32.mrf.mxu0
      %v1064 = vadd.f32 0.0, %v1063
      %1065 = vmatmul.f32.gmra.mxu0 %v886
      %v1066 = vpop.f32.mrf.mxu0
      %v1067 = vadd.f32 0.0, %v1066
      %1068 = vmatmul.f32.gmra.mxu0 %v888
      %v1069 = vpop.f32.mrf.mxu0
      %v1070 = vadd.f32 0.0, %v1069
      %1071 = vmatmul.f32.gmra.mxu0 %v890
      %v1072 = vpop.f32.mrf.mxu0
      %v1073 = vadd.f32 0.0, %v1072
      %1074 = vmatmul.f32.gmra.mxu0 %v892
      %v1075 = vpop.f32.mrf.mxu0
      %v1076 = vadd.f32 0.0, %v1075
      %1077 = vmatmul.f32.gmra.mxu0 %v894
      %v1078 = vpop.f32.mrf.mxu0
      %v1079 = vadd.f32 0.0, %v1078
      %1080 = vdwg.mxu0
      %1081 = vmatpush.msra.mxu0 0.0
      %1082 = vmatpush.msra.mxu0 0.0
      %1083 = vmatpush.msra.mxu0 0.0
      %1084 = vmatpush.msra.mxu0 0.0
      %1085 = vmatpush.msra.mxu0 %v495
      %1086 = vmatpush.msra.mxu0 %v494
      %1087 = vmatpush.msra.mxu0 %v493
      %1088 = vmatpush.msra.mxu0 %v492
      %1089 = vmatpush.msra.mxu0 %v491
      %1090 = vmatpush.msra.mxu0 %v490
      %1091 = vmatpush.msra.mxu0 %v489
      %1092 = vmatpush.msra.mxu0 %v488
      %1093 = vmatpush.msra.mxu0 %v487
      %1094 = vmatpush.msra.mxu0 %v486
      %1095 = vmatpush.msra.mxu0 %v485
      %1096 = vmatpush.msra.mxu0 %v484
      %1097 = vmatmul.f32.gmra.mxu0 %v897
      %v1098 = vpop.f32.mrf.mxu0
      %v1099 = vadd.f32 %v998, %v1098
      %1100 = vmatmul.f32.gmra.mxu0 %v900
      %v1101 = vpop.f32.mrf.mxu0
      %v1102 = vadd.f32 %v1001, %v1101
      %1103 = vmatmul.f32.gmra.mxu0 %v903
      %v1104 = vpop.f32.mrf.mxu0
      %v1105 = vadd.f32 %v1004, %v1104
      %1106 = vmatmul.f32.gmra.mxu0 %v906
      %v1107 = vpop.f32.mrf.mxu0
      %v1108 = vadd.f32 %v1007, %v1107
      %1109 = vmatmul.f32.gmra.mxu0 %v909
      %v1110 = vpop.f32.mrf.mxu0
      %v1111 = vadd.f32 %v1010, %v1110
      %1112 = vmatmul.f32.gmra.mxu0 %v912
      %v1113 = vpop.f32.mrf.mxu0
      %v1114 = vadd.f32 %v1013, %v1113
      %1115 = vmatmul.f32.gmra.mxu0 %v915
      %v1116 = vpop.f32.mrf.mxu0
      %v1117 = vadd.f32 %v1016, %v1116
      %1118 = vmatmul.f32.gmra.mxu0 %v918
      %v1119 = vpop.f32.mrf.mxu0
      %v1120 = vadd.f32 %v1019, %v1119
      %1121 = vmatmul.f32.gmra.mxu0 %v921
      %v1122 = vpop.f32.mrf.mxu0
      %v1123 = vadd.f32 %v1022, %v1122
      %1124 = vmatmul.f32.gmra.mxu0 %v924
      %v1125 = vpop.f32.mrf.mxu0
      %v1126 = vadd.f32 %v1025, %v1125
      %1127 = vmatmul.f32.gmra.mxu0 %v927
      %v1128 = vpop.f32.mrf.mxu0
      %v1129 = vadd.f32 %v1028, %v1128
      %1130 = vmatmul.f32.gmra.mxu0 %v930
      %v1131 = vpop.f32.mrf.mxu0
      %v1132 = vadd.f32 %v1031, %v1131
      %1133 = vmatmul.f32.gmra.mxu0 %v933
      %v1134 = vpop.f32.mrf.mxu0
      %v1135 = vadd.f32 %v1034, %v1134
      %1136 = vmatmul.f32.gmra.mxu0 %v936
      %v1137 = vpop.f32.mrf.mxu0
      %v1138 = vadd.f32 %v1037, %v1137
      %1139 = vmatmul.f32.gmra.mxu0 %v939
      %v1140 = vpop.f32.mrf.mxu0
      %v1141 = vadd.f32 %v1040, %v1140
      %1142 = vmatmul.f32.gmra.mxu0 %v942
      %v1143 = vpop.f32.mrf.mxu0
      %v1144 = vadd.f32 %v1043, %v1143
      %1145 = vmatmul.f32.gmra.mxu0 %v945
      %v1146 = vpop.f32.mrf.mxu0
      %v1147 = vadd.f32 %v1046, %v1146
      %1148 = vmatmul.f32.gmra.mxu0 %v948
      %v1149 = vpop.f32.mrf.mxu0
      %v1150 = vadd.f32 %v1049, %v1149
      %1151 = vmatmul.f32.gmra.mxu0 %v951
      %v1152 = vpop.f32.mrf.mxu0
      %v1153 = vadd.f32 %v1052, %v1152
      %1154 = vmatmul.f32.gmra.mxu0 %v954
      %v1155 = vpop.f32.mrf.mxu0
      %v1156 = vadd.f32 %v1055, %v1155
      %1157 = vmatmul.f32.gmra.mxu0 %v957
      %v1158 = vpop.f32.mrf.mxu0
      %v1159 = vadd.f32 %v1058, %v1158
      %1160 = vmatmul.f32.gmra.mxu0 %v960
      %v1161 = vpop.f32.mrf.mxu0
      %v1162 = vadd.f32 %v1061, %v1161
      %1163 = vmatmul.f32.gmra.mxu0 %v963
      %v1164 = vpop.f32.mrf.mxu0
      %v1165 = vadd.f32 %v1064, %v1164
      %1166 = vmatmul.f32.gmra.mxu0 %v966
      %v1167 = vpop.f32.mrf.mxu0
      %v1168 = vadd.f32 %v1067, %v1167
      %1169 = vmatmul.f32.gmra.mxu0 %v969
      %v1170 = vpop.f32.mrf.mxu0
      %v1171 = vadd.f32 %v1070, %v1170
      %1172 = vmatmul.f32.gmra.mxu0 %v972
      %v1173 = vpop.f32.mrf.mxu0
      %v1174 = vadd.f32 %v1073, %v1173
      %1175 = vmatmul.f32.gmra.mxu0 %v975
      %v1176 = vpop.f32.mrf.mxu0
      %v1177 = vadd.f32 %v1076, %v1176
      %1178 = vmatmul.f32.gmra.mxu0 %v978
      %v1179 = vpop.f32.mrf.mxu0
      %v1180 = vadd.f32 %v1079, %v1179
      %1181 = vdwg.mxu0
      %s1182 = scalar_lea.vmem %s1, 896
      %v1183 = vld [vmem:[%s1182] sm:$0xff]
      %v1184 = vld [vmem:[%s1182 + $0x8] sm:$0xff]
      %v1185 = vld [vmem:[%s1182 + $0x10] sm:$0xff]
      %v1186 = vld [vmem:[%s1182 + $0x18] sm:$0xff]
      %v1187 = vld [vmem:[%s1182 + $0x20] sm:$0xff]
      %v1188 = vld [vmem:[%s1182 + $0x28] sm:$0xff]
      %v1189 = vld [vmem:[%s1182 + $0x30] sm:$0xff]
      %v1190 = vld [vmem:[%s1182 + $0x38] sm:$0xff]
      %v1191 = vld [vmem:[%s1182 + $0x40] sm:$0xff]
      %v1192 = vld [vmem:[%s1182 + $0x48] sm:$0xff]
      %v1193 = vld [vmem:[%s1182 + $0x50] sm:$0xff]
      %v1194 = vld [vmem:[%s1182 + $0x58] sm:$0xff]
      %v1195 = vld [vmem:[%s1182 + $0x60] sm:$0xff]
      %v1196 = vld [vmem:[%s1182 + $0x68] sm:$0xff]
      %v1197 = vld [vmem:[%s1182 + $0x70] sm:$0xff]
      %v1198 = vld [vmem:[%s1182 + $0x78] sm:$0xff]
      %v1199 = vld [vmem:[%s1182 + $0x80] sm:$0xff]
      %v1200 = vld [vmem:[%s1182 + $0x88] sm:$0xff]
      %v1201 = vld [vmem:[%s1182 + $0x90] sm:$0xff]
      %v1202 = vld [vmem:[%s1182 + $0x98] sm:$0xff]
      %v1203 = vld [vmem:[%s1182 + $0xa0] sm:$0xff]
      %v1204 = vld [vmem:[%s1182 + $0xa8] sm:$0xff]
      %v1205 = vld [vmem:[%s1182 + $0xb0] sm:$0xff]
      %v1206 = vld [vmem:[%s1182 + $0xb8] sm:$0xff]
      %v1207 = vld [vmem:[%s1182 + $0xc0] sm:$0xff]
      %v1208 = vld [vmem:[%s1182 + $0xc8] sm:$0xff]
      %v1209 = vld [vmem:[%s1182 + $0xd0] sm:$0xff]
      %v1210 = vld [vmem:[%s1182 + $0xd8] sm:$0xff]
      %v1211 = vld [vmem:[%s1182 + $0xe0] sm:$0xff]
      %v1212 = vld [vmem:[%s1182 + $0xe8] sm:$0xff]
      %v1213 = vld [vmem:[%s1182 + $0xf0] sm:$0xff]
      %v1214 = vld [vmem:[%s1182 + $0xf8] sm:$0xff]
      %v1215 = vld [vmem:[%s1182 + $0x100] sm:$0xff]
      %v1216 = vld [vmem:[%s1182 + $0x108] sm:$0xff]
      %v1217 = vld [vmem:[%s1182 + $0x110] sm:$0xff]
      %v1218 = vld [vmem:[%s1182 + $0x118] sm:$0xff]
      %v1219 = vld [vmem:[%s1182 + $0x120] sm:$0xff]
      %v1220 = vld [vmem:[%s1182 + $0x128] sm:$0xff]
      %v1221 = vld [vmem:[%s1182 + $0x130] sm:$0xff]
      %v1222 = vld [vmem:[%s1182 + $0x138] sm:$0xff]
      %v1223 = vld [vmem:[%s1182 + $0x140] sm:$0xff]
      %v1224 = vld [vmem:[%s1182 + $0x148] sm:$0xff]
      %v1225 = vld [vmem:[%s1182 + $0x150] sm:$0xff]
      %v1226 = vld [vmem:[%s1182 + $0x158] sm:$0xff]
      %v1227 = vld [vmem:[%s1182 + $0x160] sm:$0xff]
      %v1228 = vld [vmem:[%s1182 + $0x168] sm:$0xff]
      %v1229 = vld [vmem:[%s1182 + $0x170] sm:$0xff]
      %v1230 = vld [vmem:[%s1182 + $0x178] sm:$0xff]
      %v1231 = vld [vmem:[%s1182 + $0x180] sm:$0xff]
      %v1232 = vld [vmem:[%s1182 + $0x188] sm:$0xff]
      %v1233 = vld [vmem:[%s1182 + $0x190] sm:$0xff]
      %v1234 = vld [vmem:[%s1182 + $0x198] sm:$0xff]
      %v1235 = vld [vmem:[%s1182 + $0x1a0] sm:$0xff]
      %v1236 = vld [vmem:[%s1182 + $0x1a8] sm:$0xff]
      %v1237 = vld [vmem:[%s1182 + $0x1b0] sm:$0xff]
      %v1238 = vld [vmem:[%s1182 + $0x1b8] sm:$0xff]
      %v1240 = vsel %vm552, %v1184, 0
      %v1243 = vsel %vm552, %v1186, 0
      %v1246 = vsel %vm552, %v1188, 0
      %v1249 = vsel %vm552, %v1190, 0
      %v1252 = vsel %vm552, %v1192, 0
      %v1255 = vsel %vm552, %v1194, 0
      %v1258 = vsel %vm552, %v1196, 0
      %v1261 = vsel %vm552, %v1198, 0
      %v1264 = vsel %vm552, %v1200, 0
      %v1267 = vsel %vm552, %v1202, 0
      %v1270 = vsel %vm552, %v1204, 0
      %v1273 = vsel %vm552, %v1206, 0
      %v1276 = vsel %vm552, %v1208, 0
      %v1279 = vsel %vm552, %v1210, 0
      %v1282 = vsel %vm552, %v1212, 0
      %v1285 = vsel %vm552, %v1214, 0
      %v1288 = vsel %vm552, %v1216, 0
      %v1291 = vsel %vm552, %v1218, 0
      %v1294 = vsel %vm552, %v1220, 0
      %v1297 = vsel %vm552, %v1222, 0
      %v1300 = vsel %vm552, %v1224, 0
      %v1303 = vsel %vm552, %v1226, 0
      %v1306 = vsel %vm552, %v1228, 0
      %v1309 = vsel %vm552, %v1230, 0
      %v1312 = vsel %vm552, %v1232, 0
      %v1315 = vsel %vm552, %v1234, 0
      %v1318 = vsel %vm552, %v1236, 0
      %v1321 = vsel %vm552, %v1238, 0
      %1323 = vmatpush.msra.mxu0 %v483
      %1324 = vmatpush.msra.mxu0 %v482
      %1325 = vmatpush.msra.mxu0 %v481
      %1326 = vmatpush.msra.mxu0 %v480
      %1327 = vmatpush.msra.mxu0 %v479
      %1328 = vmatpush.msra.mxu0 %v478
      %1329 = vmatpush.msra.mxu0 %v477
      %1330 = vmatpush.msra.mxu0 %v476
      %1331 = vmatpush.msra.mxu0 %v475
      %1332 = vmatpush.msra.mxu0 %v474
      %1333 = vmatpush.msra.mxu0 %v473
      %1334 = vmatpush.msra.mxu0 %v472
      %1335 = vmatpush.msra.mxu0 %v471
      %1336 = vmatpush.msra.mxu0 %v470
      %1337 = vmatpush.msra.mxu0 %v469
      %1338 = vmatpush.msra.mxu0 %v468
      %1339 = vmatmul.f32.gmra.mxu0 %v1183
      %v1340 = vpop.f32.mrf.mxu0
      %v1341 = vadd.f32 0.0, %v1340
      %1342 = vmatmul.f32.gmra.mxu0 %v1185
      %v1343 = vpop.f32.mrf.mxu0
      %v1344 = vadd.f32 0.0, %v1343
      %1345 = vmatmul.f32.gmra.mxu0 %v1187
      %v1346 = vpop.f32.mrf.mxu0
      %v1347 = vadd.f32 0.0, %v1346
      %1348 = vmatmul.f32.gmra.mxu0 %v1189
      %v1349 = vpop.f32.mrf.mxu0
      %v1350 = vadd.f32 0.0, %v1349
      %1351 = vmatmul.f32.gmra.mxu0 %v1191
      %v1352 = vpop.f32.mrf.mxu0
      %v1353 = vadd.f32 0.0, %v1352
      %1354 = vmatmul.f32.gmra.mxu0 %v1193
      %v1355 = vpop.f32.mrf.mxu0
      %v1356 = vadd.f32 0.0, %v1355
      %1357 = vmatmul.f32.gmra.mxu0 %v1195
      %v1358 = vpop.f32.mrf.mxu0
      %v1359 = vadd.f32 0.0, %v1358
      %1360 = vmatmul.f32.gmra.mxu0 %v1197
      %v1361 = vpop.f32.mrf.mxu0
      %v1362 = vadd.f32 0.0, %v1361
      %1363 = vmatmul.f32.gmra.mxu0 %v1199
      %v1364 = vpop.f32.mrf.mxu0
      %v1365 = vadd.f32 0.0, %v1364
      %1366 = vmatmul.f32.gmra.mxu0 %v1201
      %v1367 = vpop.f32.mrf.mxu0
      %v1368 = vadd.f32 0.0, %v1367
      %1369 = vmatmul.f32.gmra.mxu0 %v1203
      %v1370 = vpop.f32.mrf.mxu0
      %v1371 = vadd.f32 0.0, %v1370
      %1372 = vmatmul.f32.gmra.mxu0 %v1205
      %v1373 = vpop.f32.mrf.mxu0
      %v1374 = vadd.f32 0.0, %v1373
      %1375 = vmatmul.f32.gmra.mxu0 %v1207
      %v1376 = vpop.f32.mrf.mxu0
      %v1377 = vadd.f32 0.0, %v1376
      %1378 = vmatmul.f32.gmra.mxu0 %v1209
      %v1379 = vpop.f32.mrf.mxu0
      %v1380 = vadd.f32 0.0, %v1379
      %1381 = vmatmul.f32.gmra.mxu0 %v1211
      %v1382 = vpop.f32.mrf.mxu0
      %v1383 = vadd.f32 0.0, %v1382
      %1384 = vmatmul.f32.gmra.mxu0 %v1213
      %v1385 = vpop.f32.mrf.mxu0
      %v1386 = vadd.f32 0.0, %v1385
      %1387 = vmatmul.f32.gmra.mxu0 %v1215
      %v1388 = vpop.f32.mrf.mxu0
      %v1389 = vadd.f32 0.0, %v1388
      %1390 = vmatmul.f32.gmra.mxu0 %v1217
      %v1391 = vpop.f32.mrf.mxu0
      %v1392 = vadd.f32 0.0, %v1391
      %1393 = vmatmul.f32.gmra.mxu0 %v1219
      %v1394 = vpop.f32.mrf.mxu0
      %v1395 = vadd.f32 0.0, %v1394
      %1396 = vmatmul.f32.gmra.mxu0 %v1221
      %v1397 = vpop.f32.mrf.mxu0
      %v1398 = vadd.f32 0.0, %v1397
      %1399 = vmatmul.f32.gmra.mxu0 %v1223
      %v1400 = vpop.f32.mrf.mxu0
      %v1401 = vadd.f32 0.0, %v1400
      %1402 = vmatmul.f32.gmra.mxu0 %v1225
      %v1403 = vpop.f32.mrf.mxu0
      %v1404 = vadd.f32 0.0, %v1403
      %1405 = vmatmul.f32.gmra.mxu0 %v1227
      %v1406 = vpop.f32.mrf.mxu0
      %v1407 = vadd.f32 0.0, %v1406
      %1408 = vmatmul.f32.gmra.mxu0 %v1229
      %v1409 = vpop.f32.mrf.mxu0
      %v1410 = vadd.f32 0.0, %v1409
      %1411 = vmatmul.f32.gmra.mxu0 %v1231
      %v1412 = vpop.f32.mrf.mxu0
      %v1413 = vadd.f32 0.0, %v1412
      %1414 = vmatmul.f32.gmra.mxu0 %v1233
      %v1415 = vpop.f32.mrf.mxu0
      %v1416 = vadd.f32 0.0, %v1415
      %1417 = vmatmul.f32.gmra.mxu0 %v1235
      %v1418 = vpop.f32.mrf.mxu0
      %v1419 = vadd.f32 0.0, %v1418
      %1420 = vmatmul.f32.gmra.mxu0 %v1237
      %v1421 = vpop.f32.mrf.mxu0
      %v1422 = vadd.f32 0.0, %v1421
      %1423 = vdwg.mxu0
      %1424 = vmatpush.msra.mxu0 0.0
      %1425 = vmatpush.msra.mxu0 0.0
      %1426 = vmatpush.msra.mxu0 0.0
      %1427 = vmatpush.msra.mxu0 0.0
      %1428 = vmatpush.msra.mxu0 %v495
      %1429 = vmatpush.msra.mxu0 %v494
      %1430 = vmatpush.msra.mxu0 %v493
      %1431 = vmatpush.msra.mxu0 %v492
      %1432 = vmatpush.msra.mxu0 %v491
      %1433 = vmatpush.msra.mxu0 %v490
      %1434 = vmatpush.msra.mxu0 %v489
      %1435 = vmatpush.msra.mxu0 %v488
      %1436 = vmatpush.msra.mxu0 %v487
      %1437 = vmatpush.msra.mxu0 %v486
      %1438 = vmatpush.msra.mxu0 %v485
      %1439 = vmatpush.msra.mxu0 %v484
      %1440 = vmatmul.f32.gmra.mxu0 %v1240
      %v1441 = vpop.f32.mrf.mxu0
      %v1442 = vadd.f32 %v1341, %v1441
      %1443 = vmatmul.f32.gmra.mxu0 %v1243
      %v1444 = vpop.f32.mrf.mxu0
      %v1445 = vadd.f32 %v1344, %v1444
      %1446 = vmatmul.f32.gmra.mxu0 %v1246
      %v1447 = vpop.f32.mrf.mxu0
      %v1448 = vadd.f32 %v1347, %v1447
      %1449 = vmatmul.f32.gmra.mxu0 %v1249
      %v1450 = vpop.f32.mrf.mxu0
      %v1451 = vadd.f32 %v1350, %v1450
      %1452 = vmatmul.f32.gmra.mxu0 %v1252
      %v1453 = vpop.f32.mrf.mxu0
      %v1454 = vadd.f32 %v1353, %v1453
      %1455 = vmatmul.f32.gmra.mxu0 %v1255
      %v1456 = vpop.f32.mrf.mxu0
      %v1457 = vadd.f32 %v1356, %v1456
      %1458 = vmatmul.f32.gmra.mxu0 %v1258
      %v1459 = vpop.f32.mrf.mxu0
      %v1460 = vadd.f32 %v1359, %v1459
      %1461 = vmatmul.f32.gmra.mxu0 %v1261
      %v1462 = vpop.f32.mrf.mxu0
      %v1463 = vadd.f32 %v1362, %v1462
      %1464 = vmatmul.f32.gmra.mxu0 %v1264
      %v1465 = vpop.f32.mrf.mxu0
      %v1466 = vadd.f32 %v1365, %v1465
      %1467 = vmatmul.f32.gmra.mxu0 %v1267
      %v1468 = vpop.f32.mrf.mxu0
      %v1469 = vadd.f32 %v1368, %v1468
      %1470 = vmatmul.f32.gmra.mxu0 %v1270
      %v1471 = vpop.f32.mrf.mxu0
      %v1472 = vadd.f32 %v1371, %v1471
      %1473 = vmatmul.f32.gmra.mxu0 %v1273
      %v1474 = vpop.f32.mrf.mxu0
      %v1475 = vadd.f32 %v1374, %v1474
      %1476 = vmatmul.f32.gmra.mxu0 %v1276
      %v1477 = vpop.f32.mrf.mxu0
      %v1478 = vadd.f32 %v1377, %v1477
      %1479 = vmatmul.f32.gmra.mxu0 %v1279
      %v1480 = vpop.f32.mrf.mxu0
      %v1481 = vadd.f32 %v1380, %v1480
      %1482 = vmatmul.f32.gmra.mxu0 %v1282
      %v1483 = vpop.f32.mrf.mxu0
      %v1484 = vadd.f32 %v1383, %v1483
      %1485 = vmatmul.f32.gmra.mxu0 %v1285
      %v1486 = vpop.f32.mrf.mxu0
      %v1487 = vadd.f32 %v1386, %v1486
      %1488 = vmatmul.f32.gmra.mxu0 %v1288
      %v1489 = vpop.f32.mrf.mxu0
      %v1490 = vadd.f32 %v1389, %v1489
      %1491 = vmatmul.f32.gmra.mxu0 %v1291
      %v1492 = vpop.f32.mrf.mxu0
      %v1493 = vadd.f32 %v1392, %v1492
      %1494 = vmatmul.f32.gmra.mxu0 %v1294
      %v1495 = vpop.f32.mrf.mxu0
      %v1496 = vadd.f32 %v1395, %v1495
      %1497 = vmatmul.f32.gmra.mxu0 %v1297
      %v1498 = vpop.f32.mrf.mxu0
      %v1499 = vadd.f32 %v1398, %v1498
      %1500 = vmatmul.f32.gmra.mxu0 %v1300
      %v1501 = vpop.f32.mrf.mxu0
      %v1502 = vadd.f32 %v1401, %v1501
      %1503 = vmatmul.f32.gmra.mxu0 %v1303
      %v1504 = vpop.f32.mrf.mxu0
      %v1505 = vadd.f32 %v1404, %v1504
      %1506 = vmatmul.f32.gmra.mxu0 %v1306
      %v1507 = vpop.f32.mrf.mxu0
      %v1508 = vadd.f32 %v1407, %v1507
      %1509 = vmatmul.f32.gmra.mxu0 %v1309
      %v1510 = vpop.f32.mrf.mxu0
      %v1511 = vadd.f32 %v1410, %v1510
      %1512 = vmatmul.f32.gmra.mxu0 %v1312
      %v1513 = vpop.f32.mrf.mxu0
      %v1514 = vadd.f32 %v1413, %v1513
      %1515 = vmatmul.f32.gmra.mxu0 %v1315
      %v1516 = vpop.f32.mrf.mxu0
      %v1517 = vadd.f32 %v1416, %v1516
      %1518 = vmatmul.f32.gmra.mxu0 %v1318
      %v1519 = vpop.f32.mrf.mxu0
      %v1520 = vadd.f32 %v1419, %v1519
      %1521 = vmatmul.f32.gmra.mxu0 %v1321
      %v1522 = vpop.f32.mrf.mxu0
      %v1523 = vadd.f32 %v1422, %v1522
      %1524 = vdwg.mxu0
      %s1525 = scalar_lea.vmem %s1, 1344
      %v1526 = vld [vmem:[%s1525] sm:$0xff]
      %v1527 = vld [vmem:[%s1525 + $0x8] sm:$0xff]
      %v1528 = vld [vmem:[%s1525 + $0x10] sm:$0xff]
      %v1529 = vld [vmem:[%s1525 + $0x18] sm:$0xff]
      %v1530 = vld [vmem:[%s1525 + $0x20] sm:$0xff]
      %v1531 = vld [vmem:[%s1525 + $0x28] sm:$0xff]
      %v1532 = vld [vmem:[%s1525 + $0x30] sm:$0xff]
      %v1533 = vld [vmem:[%s1525 + $0x38] sm:$0xff]
      %v1534 = vld [vmem:[%s1525 + $0x40] sm:$0xff]
      %v1535 = vld [vmem:[%s1525 + $0x48] sm:$0xff]
      %v1536 = vld [vmem:[%s1525 + $0x50] sm:$0xff]
      %v1537 = vld [vmem:[%s1525 + $0x58] sm:$0xff]
      %v1538 = vld [vmem:[%s1525 + $0x60] sm:$0xff]
      %v1539 = vld [vmem:[%s1525 + $0x68] sm:$0xff]
      %v1540 = vld [vmem:[%s1525 + $0x70] sm:$0xff]
      %v1541 = vld [vmem:[%s1525 + $0x78] sm:$0xff]
      %v1542 = vld [vmem:[%s1525 + $0x80] sm:$0xff]
      %v1543 = vld [vmem:[%s1525 + $0x88] sm:$0xff]
      %v1544 = vld [vmem:[%s1525 + $0x90] sm:$0xff]
      %v1545 = vld [vmem:[%s1525 + $0x98] sm:$0xff]
      %v1546 = vld [vmem:[%s1525 + $0xa0] sm:$0xff]
      %v1547 = vld [vmem:[%s1525 + $0xa8] sm:$0xff]
      %v1548 = vld [vmem:[%s1525 + $0xb0] sm:$0xff]
      %v1549 = vld [vmem:[%s1525 + $0xb8] sm:$0xff]
      %v1550 = vld [vmem:[%s1525 + $0xc0] sm:$0xff]
      %v1551 = vld [vmem:[%s1525 + $0xc8] sm:$0xff]
      %v1552 = vld [vmem:[%s1525 + $0xd0] sm:$0xff]
      %v1553 = vld [vmem:[%s1525 + $0xd8] sm:$0xff]
      %v1554 = vld [vmem:[%s1525 + $0xe0] sm:$0xff]
      %v1555 = vld [vmem:[%s1525 + $0xe8] sm:$0xff]
      %v1556 = vld [vmem:[%s1525 + $0xf0] sm:$0xff]
      %v1557 = vld [vmem:[%s1525 + $0xf8] sm:$0xff]
      %v1558 = vld [vmem:[%s1525 + $0x100] sm:$0xff]
      %v1559 = vld [vmem:[%s1525 + $0x108] sm:$0xff]
      %v1560 = vld [vmem:[%s1525 + $0x110] sm:$0xff]
      %v1561 = vld [vmem:[%s1525 + $0x118] sm:$0xff]
      %v1562 = vld [vmem:[%s1525 + $0x120] sm:$0xff]
      %v1563 = vld [vmem:[%s1525 + $0x128] sm:$0xff]
      %v1564 = vld [vmem:[%s1525 + $0x130] sm:$0xff]
      %v1565 = vld [vmem:[%s1525 + $0x138] sm:$0xff]
      %v1566 = vld [vmem:[%s1525 + $0x140] sm:$0xff]
      %v1567 = vld [vmem:[%s1525 + $0x148] sm:$0xff]
      %v1568 = vld [vmem:[%s1525 + $0x150] sm:$0xff]
      %v1569 = vld [vmem:[%s1525 + $0x158] sm:$0xff]
      %v1570 = vld [vmem:[%s1525 + $0x160] sm:$0xff]
      %v1571 = vld [vmem:[%s1525 + $0x168] sm:$0xff]
      %v1572 = vld [vmem:[%s1525 + $0x170] sm:$0xff]
      %v1573 = vld [vmem:[%s1525 + $0x178] sm:$0xff]
      %v1574 = vld [vmem:[%s1525 + $0x180] sm:$0xff]
      %v1575 = vld [vmem:[%s1525 + $0x188] sm:$0xff]
      %v1576 = vld [vmem:[%s1525 + $0x190] sm:$0xff]
      %v1577 = vld [vmem:[%s1525 + $0x198] sm:$0xff]
      %v1578 = vld [vmem:[%s1525 + $0x1a0] sm:$0xff]
      %v1579 = vld [vmem:[%s1525 + $0x1a8] sm:$0xff]
      %v1580 = vld [vmem:[%s1525 + $0x1b0] sm:$0xff]
      %v1581 = vld [vmem:[%s1525 + $0x1b8] sm:$0xff]
      %v1583 = vsel %vm552, %v1527, 0
      %v1586 = vsel %vm552, %v1529, 0
      %v1589 = vsel %vm552, %v1531, 0
      %v1592 = vsel %vm552, %v1533, 0
      %v1595 = vsel %vm552, %v1535, 0
      %v1598 = vsel %vm552, %v1537, 0
      %v1601 = vsel %vm552, %v1539, 0
      %v1604 = vsel %vm552, %v1541, 0
      %v1607 = vsel %vm552, %v1543, 0
      %v1610 = vsel %vm552, %v1545, 0
      %v1613 = vsel %vm552, %v1547, 0
      %v1616 = vsel %vm552, %v1549, 0
      %v1619 = vsel %vm552, %v1551, 0
      %v1622 = vsel %vm552, %v1553, 0
      %v1625 = vsel %vm552, %v1555, 0
      %v1628 = vsel %vm552, %v1557, 0
      %v1631 = vsel %vm552, %v1559, 0
      %v1634 = vsel %vm552, %v1561, 0
      %v1637 = vsel %vm552, %v1563, 0
      %v1640 = vsel %vm552, %v1565, 0
      %v1643 = vsel %vm552, %v1567, 0
      %v1646 = vsel %vm552, %v1569, 0
      %v1649 = vsel %vm552, %v1571, 0
      %v1652 = vsel %vm552, %v1573, 0
      %v1655 = vsel %vm552, %v1575, 0
      %v1658 = vsel %vm552, %v1577, 0
      %v1661 = vsel %vm552, %v1579, 0
      %v1664 = vsel %vm552, %v1581, 0
      %1666 = vmatpush.msra.mxu0 %v483
      %1667 = vmatpush.msra.mxu0 %v482
      %1668 = vmatpush.msra.mxu0 %v481
      %1669 = vmatpush.msra.mxu0 %v480
      %1670 = vmatpush.msra.mxu0 %v479
      %1671 = vmatpush.msra.mxu0 %v478
      %1672 = vmatpush.msra.mxu0 %v477
      %1673 = vmatpush.msra.mxu0 %v476
      %1674 = vmatpush.msra.mxu0 %v475
      %1675 = vmatpush.msra.mxu0 %v474
      %1676 = vmatpush.msra.mxu0 %v473
      %1677 = vmatpush.msra.mxu0 %v472
      %1678 = vmatpush.msra.mxu0 %v471
      %1679 = vmatpush.msra.mxu0 %v470
      %1680 = vmatpush.msra.mxu0 %v469
      %1681 = vmatpush.msra.mxu0 %v468
      %1682 = vmatmul.f32.gmra.mxu0 %v1526
      %v1683 = vpop.f32.mrf.mxu0
      %v1684 = vadd.f32 0.0, %v1683
      %1685 = vmatmul.f32.gmra.mxu0 %v1528
      %v1686 = vpop.f32.mrf.mxu0
      %v1687 = vadd.f32 0.0, %v1686
      %1688 = vmatmul.f32.gmra.mxu0 %v1530
      %v1689 = vpop.f32.mrf.mxu0
      %v1690 = vadd.f32 0.0, %v1689
      %1691 = vmatmul.f32.gmra.mxu0 %v1532
      %v1692 = vpop.f32.mrf.mxu0
      %v1693 = vadd.f32 0.0, %v1692
      %1694 = vmatmul.f32.gmra.mxu0 %v1534
      %v1695 = vpop.f32.mrf.mxu0
      %v1696 = vadd.f32 0.0, %v1695
      %1697 = vmatmul.f32.gmra.mxu0 %v1536
      %v1698 = vpop.f32.mrf.mxu0
      %v1699 = vadd.f32 0.0, %v1698
      %1700 = vmatmul.f32.gmra.mxu0 %v1538
      %v1701 = vpop.f32.mrf.mxu0
      %v1702 = vadd.f32 0.0, %v1701
      %1703 = vmatmul.f32.gmra.mxu0 %v1540
      %v1704 = vpop.f32.mrf.mxu0
      %v1705 = vadd.f32 0.0, %v1704
      %1706 = vmatmul.f32.gmra.mxu0 %v1542
      %v1707 = vpop.f32.mrf.mxu0
      %v1708 = vadd.f32 0.0, %v1707
      %1709 = vmatmul.f32.gmra.mxu0 %v1544
      %v1710 = vpop.f32.mrf.mxu0
      %v1711 = vadd.f32 0.0, %v1710
      %1712 = vmatmul.f32.gmra.mxu0 %v1546
      %v1713 = vpop.f32.mrf.mxu0
      %v1714 = vadd.f32 0.0, %v1713
      %1715 = vmatmul.f32.gmra.mxu0 %v1548
      %v1716 = vpop.f32.mrf.mxu0
      %v1717 = vadd.f32 0.0, %v1716
      %1718 = vmatmul.f32.gmra.mxu0 %v1550
      %v1719 = vpop.f32.mrf.mxu0
      %v1720 = vadd.f32 0.0, %v1719
      %1721 = vmatmul.f32.gmra.mxu0 %v1552
      %v1722 = vpop.f32.mrf.mxu0
      %v1723 = vadd.f32 0.0, %v1722
      %1724 = vmatmul.f32.gmra.mxu0 %v1554
      %v1725 = vpop.f32.mrf.mxu0
      %v1726 = vadd.f32 0.0, %v1725
      %1727 = vmatmul.f32.gmra.mxu0 %v1556
      %v1728 = vpop.f32.mrf.mxu0
      %v1729 = vadd.f32 0.0, %v1728
      %1730 = vmatmul.f32.gmra.mxu0 %v1558
      %v1731 = vpop.f32.mrf.mxu0
      %v1732 = vadd.f32 0.0, %v1731
      %1733 = vmatmul.f32.gmra.mxu0 %v1560
      %v1734 = vpop.f32.mrf.mxu0
      %v1735 = vadd.f32 0.0, %v1734
      %1736 = vmatmul.f32.gmra.mxu0 %v1562
      %v1737 = vpop.f32.mrf.mxu0
      %v1738 = vadd.f32 0.0, %v1737
      %1739 = vmatmul.f32.gmra.mxu0 %v1564
      %v1740 = vpop.f32.mrf.mxu0
      %v1741 = vadd.f32 0.0, %v1740
      %1742 = vmatmul.f32.gmra.mxu0 %v1566
      %v1743 = vpop.f32.mrf.mxu0
      %v1744 = vadd.f32 0.0, %v1743
      %1745 = vmatmul.f32.gmra.mxu0 %v1568
      %v1746 = vpop.f32.mrf.mxu0
      %v1747 = vadd.f32 0.0, %v1746
      %1748 = vmatmul.f32.gmra.mxu0 %v1570
      %v1749 = vpop.f32.mrf.mxu0
      %v1750 = vadd.f32 0.0, %v1749
      %1751 = vmatmul.f32.gmra.mxu0 %v1572
      %v1752 = vpop.f32.mrf.mxu0
      %v1753 = vadd.f32 0.0, %v1752
      %1754 = vmatmul.f32.gmra.mxu0 %v1574
      %v1755 = vpop.f32.mrf.mxu0
      %v1756 = vadd.f32 0.0, %v1755
      %1757 = vmatmul.f32.gmra.mxu0 %v1576
      %v1758 = vpop.f32.mrf.mxu0
      %v1759 = vadd.f32 0.0, %v1758
      %1760 = vmatmul.f32.gmra.mxu0 %v1578
      %v1761 = vpop.f32.mrf.mxu0
      %v1762 = vadd.f32 0.0, %v1761
      %1763 = vmatmul.f32.gmra.mxu0 %v1580
      %v1764 = vpop.f32.mrf.mxu0
      %v1765 = vadd.f32 0.0, %v1764
      %1766 = vdwg.mxu0
      %1767 = vmatpush.msra.mxu0 0.0
      %1768 = vmatpush.msra.mxu0 0.0
      %1769 = vmatpush.msra.mxu0 0.0
      %1770 = vmatpush.msra.mxu0 0.0
      %1771 = vmatpush.msra.mxu0 %v495
      %1772 = vmatpush.msra.mxu0 %v494
      %1773 = vmatpush.msra.mxu0 %v493
      %1774 = vmatpush.msra.mxu0 %v492
      %1775 = vmatpush.msra.mxu0 %v491
      %1776 = vmatpush.msra.mxu0 %v490
      %1777 = vmatpush.msra.mxu0 %v489
      %1778 = vmatpush.msra.mxu0 %v488
      %1779 = vmatpush.msra.mxu0 %v487
      %1780 = vmatpush.msra.mxu0 %v486
      %1781 = vmatpush.msra.mxu0 %v485
      %1782 = vmatpush.msra.mxu0 %v484
      %1783 = vmatmul.f32.gmra.mxu0 %v1583
      %v1784 = vpop.f32.mrf.mxu0
      %v1785 = vadd.f32 %v1684, %v1784
      %1786 = vmatmul.f32.gmra.mxu0 %v1586
      %v1787 = vpop.f32.mrf.mxu0
      %v1788 = vadd.f32 %v1687, %v1787
      %1789 = vmatmul.f32.gmra.mxu0 %v1589
      %v1790 = vpop.f32.mrf.mxu0
      %v1791 = vadd.f32 %v1690, %v1790
      %1792 = vmatmul.f32.gmra.mxu0 %v1592
      %v1793 = vpop.f32.mrf.mxu0
      %v1794 = vadd.f32 %v1693, %v1793
      %1795 = vmatmul.f32.gmra.mxu0 %v1595
      %v1796 = vpop.f32.mrf.mxu0
      %v1797 = vadd.f32 %v1696, %v1796
      %1798 = vmatmul.f32.gmra.mxu0 %v1598
      %v1799 = vpop.f32.mrf.mxu0
      %v1800 = vadd.f32 %v1699, %v1799
      %1801 = vmatmul.f32.gmra.mxu0 %v1601
      %v1802 = vpop.f32.mrf.mxu0
      %v1803 = vadd.f32 %v1702, %v1802
      %1804 = vmatmul.f32.gmra.mxu0 %v1604
      %v1805 = vpop.f32.mrf.mxu0
      %v1806 = vadd.f32 %v1705, %v1805
      %1807 = vmatmul.f32.gmra.mxu0 %v1607
      %v1808 = vpop.f32.mrf.mxu0
      %v1809 = vadd.f32 %v1708, %v1808
      %1810 = vmatmul.f32.gmra.mxu0 %v1610
      %v1811 = vpop.f32.mrf.mxu0
      %v1812 = vadd.f32 %v1711, %v1811
      %1813 = vmatmul.f32.gmra.mxu0 %v1613
      %v1814 = vpop.f32.mrf.mxu0
      %v1815 = vadd.f32 %v1714, %v1814
      %1816 = vmatmul.f32.gmra.mxu0 %v1616
      %v1817 = vpop.f32.mrf.mxu0
      %v1818 = vadd.f32 %v1717, %v1817
      %1819 = vmatmul.f32.gmra.mxu0 %v1619
      %v1820 = vpop.f32.mrf.mxu0
      %v1821 = vadd.f32 %v1720, %v1820
      %1822 = vmatmul.f32.gmra.mxu0 %v1622
      %v1823 = vpop.f32.mrf.mxu0
      %v1824 = vadd.f32 %v1723, %v1823
      %1825 = vmatmul.f32.gmra.mxu0 %v1625
      %v1826 = vpop.f32.mrf.mxu0
      %v1827 = vadd.f32 %v1726, %v1826
      %1828 = vmatmul.f32.gmra.mxu0 %v1628
      %v1829 = vpop.f32.mrf.mxu0
      %v1830 = vadd.f32 %v1729, %v1829
      %1831 = vmatmul.f32.gmra.mxu0 %v1631
      %v1832 = vpop.f32.mrf.mxu0
      %v1833 = vadd.f32 %v1732, %v1832
      %1834 = vmatmul.f32.gmra.mxu0 %v1634
      %v1835 = vpop.f32.mrf.mxu0
      %v1836 = vadd.f32 %v1735, %v1835
      %1837 = vmatmul.f32.gmra.mxu0 %v1637
      %v1838 = vpop.f32.mrf.mxu0
      %v1839 = vadd.f32 %v1738, %v1838
      %1840 = vmatmul.f32.gmra.mxu0 %v1640
      %v1841 = vpop.f32.mrf.mxu0
      %v1842 = vadd.f32 %v1741, %v1841
      %1843 = vmatmul.f32.gmra.mxu0 %v1643
      %v1844 = vpop.f32.mrf.mxu0
      %v1845 = vadd.f32 %v1744, %v1844
      %1846 = vmatmul.f32.gmra.mxu0 %v1646
      %v1847 = vpop.f32.mrf.mxu0
      %v1848 = vadd.f32 %v1747, %v1847
      %1849 = vmatmul.f32.gmra.mxu0 %v1649
      %v1850 = vpop.f32.mrf.mxu0
      %v1851 = vadd.f32 %v1750, %v1850
      %1852 = vmatmul.f32.gmra.mxu0 %v1652
      %v1853 = vpop.f32.mrf.mxu0
      %v1854 = vadd.f32 %v1753, %v1853
      %1855 = vmatmul.f32.gmra.mxu0 %v1655
      %v1856 = vpop.f32.mrf.mxu0
      %v1857 = vadd.f32 %v1756, %v1856
      %1858 = vmatmul.f32.gmra.mxu0 %v1658
      %v1859 = vpop.f32.mrf.mxu0
      %v1860 = vadd.f32 %v1759, %v1859
      %1861 = vmatmul.f32.gmra.mxu0 %v1661
      %v1862 = vpop.f32.mrf.mxu0
      %v1863 = vadd.f32 %v1762, %v1862
      %1864 = vmatmul.f32.gmra.mxu0 %v1664
      %v1865 = vpop.f32.mrf.mxu0
      %v1866 = vadd.f32 %v1765, %v1865
      %1867 = vdwg.mxu0
      %s1868 = scalar_lea.vmem %s1, 1792
      %v1869 = vld [vmem:[%s1868] sm:$0xff]
      %v1870 = vld [vmem:[%s1868 + $0x8] sm:$0xff]
      %v1871 = vld [vmem:[%s1868 + $0x10] sm:$0xff]
      %v1872 = vld [vmem:[%s1868 + $0x18] sm:$0xff]
      %v1873 = vld [vmem:[%s1868 + $0x20] sm:$0xff]
      %v1874 = vld [vmem:[%s1868 + $0x28] sm:$0xff]
      %v1875 = vld [vmem:[%s1868 + $0x30] sm:$0xff]
      %v1876 = vld [vmem:[%s1868 + $0x38] sm:$0xff]
      %v1877 = vld [vmem:[%s1868 + $0x40] sm:$0xff]
      %v1878 = vld [vmem:[%s1868 + $0x48] sm:$0xff]
      %v1879 = vld [vmem:[%s1868 + $0x50] sm:$0xff]
      %v1880 = vld [vmem:[%s1868 + $0x58] sm:$0xff]
      %v1881 = vld [vmem:[%s1868 + $0x60] sm:$0xff]
      %v1882 = vld [vmem:[%s1868 + $0x68] sm:$0xff]
      %v1883 = vld [vmem:[%s1868 + $0x70] sm:$0xff]
      %v1884 = vld [vmem:[%s1868 + $0x78] sm:$0xff]
      %v1885 = vld [vmem:[%s1868 + $0x80] sm:$0xff]
      %v1886 = vld [vmem:[%s1868 + $0x88] sm:$0xff]
      %v1887 = vld [vmem:[%s1868 + $0x90] sm:$0xff]
      %v1888 = vld [vmem:[%s1868 + $0x98] sm:$0xff]
      %v1889 = vld [vmem:[%s1868 + $0xa0] sm:$0xff]
      %v1890 = vld [vmem:[%s1868 + $0xa8] sm:$0xff]
      %v1891 = vld [vmem:[%s1868 + $0xb0] sm:$0xff]
      %v1892 = vld [vmem:[%s1868 + $0xb8] sm:$0xff]
      %v1893 = vld [vmem:[%s1868 + $0xc0] sm:$0xff]
      %v1894 = vld [vmem:[%s1868 + $0xc8] sm:$0xff]
      %v1895 = vld [vmem:[%s1868 + $0xd0] sm:$0xff]
      %v1896 = vld [vmem:[%s1868 + $0xd8] sm:$0xff]
      %v1897 = vld [vmem:[%s1868 + $0xe0] sm:$0xff]
      %v1898 = vld [vmem:[%s1868 + $0xe8] sm:$0xff]
      %v1899 = vld [vmem:[%s1868 + $0xf0] sm:$0xff]
      %v1900 = vld [vmem:[%s1868 + $0xf8] sm:$0xff]
      %v1901 = vld [vmem:[%s1868 + $0x100] sm:$0xff]
      %v1902 = vld [vmem:[%s1868 + $0x108] sm:$0xff]
      %v1903 = vld [vmem:[%s1868 + $0x110] sm:$0xff]
      %v1904 = vld [vmem:[%s1868 + $0x118] sm:$0xff]
      %v1905 = vld [vmem:[%s1868 + $0x120] sm:$0xff]
      %v1906 = vld [vmem:[%s1868 + $0x128] sm:$0xff]
      %v1907 = vld [vmem:[%s1868 + $0x130] sm:$0xff]
      %v1908 = vld [vmem:[%s1868 + $0x138] sm:$0xff]
      %v1909 = vld [vmem:[%s1868 + $0x140] sm:$0xff]
      %v1910 = vld [vmem:[%s1868 + $0x148] sm:$0xff]
      %v1911 = vld [vmem:[%s1868 + $0x150] sm:$0xff]
      %v1912 = vld [vmem:[%s1868 + $0x158] sm:$0xff]
      %v1913 = vld [vmem:[%s1868 + $0x160] sm:$0xff]
      %v1914 = vld [vmem:[%s1868 + $0x168] sm:$0xff]
      %v1915 = vld [vmem:[%s1868 + $0x170] sm:$0xff]
      %v1916 = vld [vmem:[%s1868 + $0x178] sm:$0xff]
      %v1917 = vld [vmem:[%s1868 + $0x180] sm:$0xff]
      %v1918 = vld [vmem:[%s1868 + $0x188] sm:$0xff]
      %v1919 = vld [vmem:[%s1868 + $0x190] sm:$0xff]
      %v1920 = vld [vmem:[%s1868 + $0x198] sm:$0xff]
      %v1921 = vld [vmem:[%s1868 + $0x1a0] sm:$0xff]
      %v1922 = vld [vmem:[%s1868 + $0x1a8] sm:$0xff]
      %v1923 = vld [vmem:[%s1868 + $0x1b0] sm:$0xff]
      %v1924 = vld [vmem:[%s1868 + $0x1b8] sm:$0xff]
      %v1926 = vsel %vm552, %v1870, 0
      %v1929 = vsel %vm552, %v1872, 0
      %v1932 = vsel %vm552, %v1874, 0
      %v1935 = vsel %vm552, %v1876, 0
      %v1938 = vsel %vm552, %v1878, 0
      %v1941 = vsel %vm552, %v1880, 0
      %v1944 = vsel %vm552, %v1882, 0
      %v1947 = vsel %vm552, %v1884, 0
      %v1950 = vsel %vm552, %v1886, 0
      %v1953 = vsel %vm552, %v1888, 0
      %v1956 = vsel %vm552, %v1890, 0
      %v1959 = vsel %vm552, %v1892, 0
      %v1962 = vsel %vm552, %v1894, 0
      %v1965 = vsel %vm552, %v1896, 0
      %v1968 = vsel %vm552, %v1898, 0
      %v1971 = vsel %vm552, %v1900, 0
      %v1974 = vsel %vm552, %v1902, 0
      %v1977 = vsel %vm552, %v1904, 0
      %v1980 = vsel %vm552, %v1906, 0
      %v1983 = vsel %vm552, %v1908, 0
      %v1986 = vsel %vm552, %v1910, 0
      %v1989 = vsel %vm552, %v1912, 0
      %v1992 = vsel %vm552, %v1914, 0
      %v1995 = vsel %vm552, %v1916, 0
      %v1998 = vsel %vm552, %v1918, 0
      %v2001 = vsel %vm552, %v1920, 0
      %v2004 = vsel %vm552, %v1922, 0
      %v2007 = vsel %vm552, %v1924, 0
      %2009 = vmatpush.msra.mxu0 %v483
      %2010 = vmatpush.msra.mxu0 %v482
      %2011 = vmatpush.msra.mxu0 %v481
      %2012 = vmatpush.msra.mxu0 %v480
      %2013 = vmatpush.msra.mxu0 %v479
      %2014 = vmatpush.msra.mxu0 %v478
      %2015 = vmatpush.msra.mxu0 %v477
      %2016 = vmatpush.msra.mxu0 %v476
      %2017 = vmatpush.msra.mxu0 %v475
      %2018 = vmatpush.msra.mxu0 %v474
      %2019 = vmatpush.msra.mxu0 %v473
      %2020 = vmatpush.msra.mxu0 %v472
      %2021 = vmatpush.msra.mxu0 %v471
      %2022 = vmatpush.msra.mxu0 %v470
      %2023 = vmatpush.msra.mxu0 %v469
      %2024 = vmatpush.msra.mxu0 %v468
      %2025 = vmatmul.f32.gmra.mxu0 %v1869
      %v2026 = vpop.f32.mrf.mxu0
      %v2027 = vadd.f32 0.0, %v2026
      %2028 = vmatmul.f32.gmra.mxu0 %v1871
      %v2029 = vpop.f32.mrf.mxu0
      %v2030 = vadd.f32 0.0, %v2029
      %2031 = vmatmul.f32.gmra.mxu0 %v1873
      %v2032 = vpop.f32.mrf.mxu0
      %v2033 = vadd.f32 0.0, %v2032
      %2034 = vmatmul.f32.gmra.mxu0 %v1875
      %v2035 = vpop.f32.mrf.mxu0
      %v2036 = vadd.f32 0.0, %v2035
      %2037 = vmatmul.f32.gmra.mxu0 %v1877
      %v2038 = vpop.f32.mrf.mxu0
      %v2039 = vadd.f32 0.0, %v2038
      %2040 = vmatmul.f32.gmra.mxu0 %v1879
      %v2041 = vpop.f32.mrf.mxu0
      %v2042 = vadd.f32 0.0, %v2041
      %2043 = vmatmul.f32.gmra.mxu0 %v1881
      %v2044 = vpop.f32.mrf.mxu0
      %v2045 = vadd.f32 0.0, %v2044
      %2046 = vmatmul.f32.gmra.mxu0 %v1883
      %v2047 = vpop.f32.mrf.mxu0
      %v2048 = vadd.f32 0.0, %v2047
      %2049 = vmatmul.f32.gmra.mxu0 %v1885
      %v2050 = vpop.f32.mrf.mxu0
      %v2051 = vadd.f32 0.0, %v2050
      %2052 = vmatmul.f32.gmra.mxu0 %v1887
      %v2053 = vpop.f32.mrf.mxu0
      %v2054 = vadd.f32 0.0, %v2053
      %2055 = vmatmul.f32.gmra.mxu0 %v1889
      %v2056 = vpop.f32.mrf.mxu0
      %v2057 = vadd.f32 0.0, %v2056
      %2058 = vmatmul.f32.gmra.mxu0 %v1891
      %v2059 = vpop.f32.mrf.mxu0
      %v2060 = vadd.f32 0.0, %v2059
      %2061 = vmatmul.f32.gmra.mxu0 %v1893
      %v2062 = vpop.f32.mrf.mxu0
      %v2063 = vadd.f32 0.0, %v2062
      %2064 = vmatmul.f32.gmra.mxu0 %v1895
      %v2065 = vpop.f32.mrf.mxu0
      %v2066 = vadd.f32 0.0, %v2065
      %2067 = vmatmul.f32.gmra.mxu0 %v1897
      %v2068 = vpop.f32.mrf.mxu0
      %v2069 = vadd.f32 0.0, %v2068
      %2070 = vmatmul.f32.gmra.mxu0 %v1899
      %v2071 = vpop.f32.mrf.mxu0
      %v2072 = vadd.f32 0.0, %v2071
      %2073 = vmatmul.f32.gmra.mxu0 %v1901
      %v2074 = vpop.f32.mrf.mxu0
      %v2075 = vadd.f32 0.0, %v2074
      %2076 = vmatmul.f32.gmra.mxu0 %v1903
      %v2077 = vpop.f32.mrf.mxu0
      %v2078 = vadd.f32 0.0, %v2077
      %2079 = vmatmul.f32.gmra.mxu0 %v1905
      %v2080 = vpop.f32.mrf.mxu0
      %v2081 = vadd.f32 0.0, %v2080
      %2082 = vmatmul.f32.gmra.mxu0 %v1907
      %v2083 = vpop.f32.mrf.mxu0
      %v2084 = vadd.f32 0.0, %v2083
      %2085 = vmatmul.f32.gmra.mxu0 %v1909
      %v2086 = vpop.f32.mrf.mxu0
      %v2087 = vadd.f32 0.0, %v2086
      %2088 = vmatmul.f32.gmra.mxu0 %v1911
      %v2089 = vpop.f32.mrf.mxu0
      %v2090 = vadd.f32 0.0, %v2089
      %2091 = vmatmul.f32.gmra.mxu0 %v1913
      %v2092 = vpop.f32.mrf.mxu0
      %v2093 = vadd.f32 0.0, %v2092
      %2094 = vmatmul.f32.gmra.mxu0 %v1915
      %v2095 = vpop.f32.mrf.mxu0
      %v2096 = vadd.f32 0.0, %v2095
      %2097 = vmatmul.f32.gmra.mxu0 %v1917
      %v2098 = vpop.f32.mrf.mxu0
      %v2099 = vadd.f32 0.0, %v2098
      %2100 = vmatmul.f32.gmra.mxu0 %v1919
      %v2101 = vpop.f32.mrf.mxu0
      %v2102 = vadd.f32 0.0, %v2101
      %2103 = vmatmul.f32.gmra.mxu0 %v1921
      %v2104 = vpop.f32.mrf.mxu0
      %v2105 = vadd.f32 0.0, %v2104
      %2106 = vmatmul.f32.gmra.mxu0 %v1923
      %v2107 = vpop.f32.mrf.mxu0
      %v2108 = vadd.f32 0.0, %v2107
      %2109 = vdwg.mxu0
      %2110 = vmatpush.msra.mxu0 0.0
      %2111 = vmatpush.msra.mxu0 0.0
      %2112 = vmatpush.msra.mxu0 0.0
      %2113 = vmatpush.msra.mxu0 0.0
      %2114 = vmatpush.msra.mxu0 %v495
      %2115 = vmatpush.msra.mxu0 %v494
      %2116 = vmatpush.msra.mxu0 %v493
      %2117 = vmatpush.msra.mxu0 %v492
      %2118 = vmatpush.msra.mxu0 %v491
      %2119 = vmatpush.msra.mxu0 %v490
      %2120 = vmatpush.msra.mxu0 %v489
      %2121 = vmatpush.msra.mxu0 %v488
      %2122 = vmatpush.msra.mxu0 %v487
      %2123 = vmatpush.msra.mxu0 %v486
      %2124 = vmatpush.msra.mxu0 %v485
      %2125 = vmatpush.msra.mxu0 %v484
      %2126 = vmatmul.f32.gmra.mxu0 %v1926
      %v2127 = vpop.f32.mrf.mxu0
      %v2128 = vadd.f32 %v2027, %v2127
      %2129 = vmatmul.f32.gmra.mxu0 %v1929
      %v2130 = vpop.f32.mrf.mxu0
      %v2131 = vadd.f32 %v2030, %v2130
      %2132 = vmatmul.f32.gmra.mxu0 %v1932
      %v2133 = vpop.f32.mrf.mxu0
      %v2134 = vadd.f32 %v2033, %v2133
      %2135 = vmatmul.f32.gmra.mxu0 %v1935
      %v2136 = vpop.f32.mrf.mxu0
      %v2137 = vadd.f32 %v2036, %v2136
      %2138 = vmatmul.f32.gmra.mxu0 %v1938
      %v2139 = vpop.f32.mrf.mxu0
      %v2140 = vadd.f32 %v2039, %v2139
      %2141 = vmatmul.f32.gmra.mxu0 %v1941
      %v2142 = vpop.f32.mrf.mxu0
      %v2143 = vadd.f32 %v2042, %v2142
      %2144 = vmatmul.f32.gmra.mxu0 %v1944
      %v2145 = vpop.f32.mrf.mxu0
      %v2146 = vadd.f32 %v2045, %v2145
      %2147 = vmatmul.f32.gmra.mxu0 %v1947
      %v2148 = vpop.f32.mrf.mxu0
      %v2149 = vadd.f32 %v2048, %v2148
      %2150 = vmatmul.f32.gmra.mxu0 %v1950
      %v2151 = vpop.f32.mrf.mxu0
      %v2152 = vadd.f32 %v2051, %v2151
      %2153 = vmatmul.f32.gmra.mxu0 %v1953
      %v2154 = vpop.f32.mrf.mxu0
      %v2155 = vadd.f32 %v2054, %v2154
      %2156 = vmatmul.f32.gmra.mxu0 %v1956
      %v2157 = vpop.f32.mrf.mxu0
      %v2158 = vadd.f32 %v2057, %v2157
      %2159 = vmatmul.f32.gmra.mxu0 %v1959
      %v2160 = vpop.f32.mrf.mxu0
      %v2161 = vadd.f32 %v2060, %v2160
      %2162 = vmatmul.f32.gmra.mxu0 %v1962
      %v2163 = vpop.f32.mrf.mxu0
      %v2164 = vadd.f32 %v2063, %v2163
      %2165 = vmatmul.f32.gmra.mxu0 %v1965
      %v2166 = vpop.f32.mrf.mxu0
      %v2167 = vadd.f32 %v2066, %v2166
      %2168 = vmatmul.f32.gmra.mxu0 %v1968
      %v2169 = vpop.f32.mrf.mxu0
      %v2170 = vadd.f32 %v2069, %v2169
      %2171 = vmatmul.f32.gmra.mxu0 %v1971
      %v2172 = vpop.f32.mrf.mxu0
      %v2173 = vadd.f32 %v2072, %v2172
      %2174 = vmatmul.f32.gmra.mxu0 %v1974
      %v2175 = vpop.f32.mrf.mxu0
      %v2176 = vadd.f32 %v2075, %v2175
      %2177 = vmatmul.f32.gmra.mxu0 %v1977
      %v2178 = vpop.f32.mrf.mxu0
      %v2179 = vadd.f32 %v2078, %v2178
      %2180 = vmatmul.f32.gmra.mxu0 %v1980
      %v2181 = vpop.f32.mrf.mxu0
      %v2182 = vadd.f32 %v2081, %v2181
      %2183 = vmatmul.f32.gmra.mxu0 %v1983
      %v2184 = vpop.f32.mrf.mxu0
      %v2185 = vadd.f32 %v2084, %v2184
      %2186 = vmatmul.f32.gmra.mxu0 %v1986
      %v2187 = vpop.f32.mrf.mxu0
      %v2188 = vadd.f32 %v2087, %v2187
      %2189 = vmatmul.f32.gmra.mxu0 %v1989
      %v2190 = vpop.f32.mrf.mxu0
      %v2191 = vadd.f32 %v2090, %v2190
      %2192 = vmatmul.f32.gmra.mxu0 %v1992
      %v2193 = vpop.f32.mrf.mxu0
      %v2194 = vadd.f32 %v2093, %v2193
      %2195 = vmatmul.f32.gmra.mxu0 %v1995
      %v2196 = vpop.f32.mrf.mxu0
      %v2197 = vadd.f32 %v2096, %v2196
      %2198 = vmatmul.f32.gmra.mxu0 %v1998
      %v2199 = vpop.f32.mrf.mxu0
      %v2200 = vadd.f32 %v2099, %v2199
      %2201 = vmatmul.f32.gmra.mxu0 %v2001
      %v2202 = vpop.f32.mrf.mxu0
      %v2203 = vadd.f32 %v2102, %v2202
      %2204 = vmatmul.f32.gmra.mxu0 %v2004
      %v2205 = vpop.f32.mrf.mxu0
      %v2206 = vadd.f32 %v2105, %v2205
      %2207 = vmatmul.f32.gmra.mxu0 %v2007
      %v2208 = vpop.f32.mrf.mxu0
      %v2209 = vadd.f32 %v2108, %v2208
      %2210 = vdwg.mxu0
      %v2211 = vld [vmem:[%s2] sm:$0xff]
      %v2212 = vld [vmem:[%s2 + $0x8] sm:$0xff]
      %v2213 = vld [vmem:[%s2 + $0x10] sm:$0xff]
      %v2214 = vld [vmem:[%s2 + $0x18] sm:$0xff]
      %v2215 = vld [vmem:[%s2 + $0x20] sm:$0xff]
      %v2216 = vld [vmem:[%s2 + $0x28] sm:$0xff]
      %v2217 = vld [vmem:[%s2 + $0x30] sm:$0xff]
      %v2218 = vld [vmem:[%s2 + $0x38] sm:$0xff]
      %v2219 = vld [vmem:[%s2 + $0x40] sm:$0xff]
      %v2220 = vld [vmem:[%s2 + $0x48] sm:$0xff]
      %v2221 = vld [vmem:[%s2 + $0x50] sm:$0xff]
      %v2222 = vld [vmem:[%s2 + $0x58] sm:$0xff]
      %v2223 = vld [vmem:[%s2 + $0x60] sm:$0xff]
      %v2224 = vld [vmem:[%s2 + $0x68] sm:$0xff]
      %v2225 = vld [vmem:[%s2 + $0x70] sm:$0xff]
      %v2226 = vld [vmem:[%s2 + $0x78] sm:$0xff]
      %v2227 = vld [vmem:[%s2 + $0x80] sm:$0xff]
      %v2228 = vld [vmem:[%s2 + $0x88] sm:$0xff]
      %v2229 = vld [vmem:[%s2 + $0x90] sm:$0xff]
      %v2230 = vld [vmem:[%s2 + $0x98] sm:$0xff]
      %v2231 = vld [vmem:[%s2 + $0xa0] sm:$0xff]
      %v2232 = vld [vmem:[%s2 + $0xa8] sm:$0xff]
      %v2233 = vld [vmem:[%s2 + $0xb0] sm:$0xff]
      %v2234 = vld [vmem:[%s2 + $0xb8] sm:$0xff]
      %v2235 = vld [vmem:[%s2 + $0xc0] sm:$0xff]
      %v2236 = vld [vmem:[%s2 + $0xc8] sm:$0xff]
      %v2237 = vld [vmem:[%s2 + $0xd0] sm:$0xff]
      %v2238 = vld [vmem:[%s2 + $0xd8] sm:$0xff]
      %v2239 = vld [vmem:[%s2 + $0xe0] sm:$0xff]
      %v2240 = vld [vmem:[%s2 + $0xe8] sm:$0xff]
      %v2241 = vld [vmem:[%s2 + $0xf0] sm:$0xff]
      %v2242 = vld [vmem:[%s2 + $0xf8] sm:$0xff]
      %v2243 = vld [vmem:[%s2 + $0x100] sm:$0xff]
      %v2244 = vld [vmem:[%s2 + $0x108] sm:$0xff]
      %v2245 = vld [vmem:[%s2 + $0x110] sm:$0xff]
      %v2246 = vld [vmem:[%s2 + $0x118] sm:$0xff]
      %v2247 = vld [vmem:[%s2 + $0x120] sm:$0xff]
      %v2248 = vld [vmem:[%s2 + $0x128] sm:$0xff]
      %v2249 = vld [vmem:[%s2 + $0x130] sm:$0xff]
      %v2250 = vld [vmem:[%s2 + $0x138] sm:$0xff]
      %v2251 = vld [vmem:[%s2 + $0x140] sm:$0xff]
      %v2252 = vld [vmem:[%s2 + $0x148] sm:$0xff]
      %v2253 = vld [vmem:[%s2 + $0x150] sm:$0xff]
      %v2254 = vld [vmem:[%s2 + $0x158] sm:$0xff]
      %v2255 = vld [vmem:[%s2 + $0x160] sm:$0xff]
      %v2256 = vld [vmem:[%s2 + $0x168] sm:$0xff]
      %v2257 = vld [vmem:[%s2 + $0x170] sm:$0xff]
      %v2258 = vld [vmem:[%s2 + $0x178] sm:$0xff]
      %v2259 = vld [vmem:[%s2 + $0x180] sm:$0xff]
      %v2260 = vld [vmem:[%s2 + $0x188] sm:$0xff]
      %v2261 = vld [vmem:[%s2 + $0x190] sm:$0xff]
      %v2262 = vld [vmem:[%s2 + $0x198] sm:$0xff]
      %v2263 = vld [vmem:[%s2 + $0x1a0] sm:$0xff]
      %v2264 = vld [vmem:[%s2 + $0x1a8] sm:$0xff]
      %v2265 = vld [vmem:[%s2 + $0x1b0] sm:$0xff]
      %v2266 = vld [vmem:[%s2 + $0x1b8] sm:$0xff]
      %v2267 = vld [vmem:[%s2 + $0x1c0] sm:$0xff]
      %v2268 = vld [vmem:[%s2 + $0x1c8] sm:$0xff]
      %v2269 = vld [vmem:[%s2 + $0x1d0] sm:$0xff]
      %v2270 = vld [vmem:[%s2 + $0x1d8] sm:$0xff]
      %v2271 = vld [vmem:[%s2 + $0x1e0] sm:$0xff]
      %v2272 = vld [vmem:[%s2 + $0x1e8] sm:$0xff]
      %v2273 = vld [vmem:[%s2 + $0x1f0] sm:$0xff]
      %v2274 = vld [vmem:[%s2 + $0x1f8] sm:$0xff]
      %v2275 = vld [vmem:[%s2 + $0x200] sm:$0xff]
      %v2276 = vld [vmem:[%s2 + $0x208] sm:$0xff]
      %v2277 = vld [vmem:[%s2 + $0x210] sm:$0xff]
      %v2278 = vld [vmem:[%s2 + $0x218] sm:$0xff]
      %v2279 = vld [vmem:[%s2 + $0x220] sm:$0xff]
      %v2280 = vld [vmem:[%s2 + $0x228] sm:$0xff]
      %v2281 = vld [vmem:[%s2 + $0x230] sm:$0xff]
      %v2282 = vld [vmem:[%s2 + $0x238] sm:$0xff]
      %v2283 = vld [vmem:[%s2 + $0x240] sm:$0xff]
      %v2284 = vld [vmem:[%s2 + $0x248] sm:$0xff]
      %v2285 = vld [vmem:[%s2 + $0x250] sm:$0xff]
      %v2286 = vld [vmem:[%s2 + $0x258] sm:$0xff]
      %v2287 = vld [vmem:[%s2 + $0x260] sm:$0xff]
      %v2288 = vld [vmem:[%s2 + $0x268] sm:$0xff]
      %v2289 = vld [vmem:[%s2 + $0x270] sm:$0xff]
      %v2290 = vld [vmem:[%s2 + $0x278] sm:$0xff]
      %v2291 = vld [vmem:[%s2 + $0x280] sm:$0xff]
      %v2292 = vld [vmem:[%s2 + $0x288] sm:$0xff]
      %v2293 = vld [vmem:[%s2 + $0x290] sm:$0xff]
      %v2294 = vld [vmem:[%s2 + $0x298] sm:$0xff]
      %v2295 = vld [vmem:[%s2 + $0x2a0] sm:$0xff]
      %v2296 = vld [vmem:[%s2 + $0x2a8] sm:$0xff]
      %v2297 = vld [vmem:[%s2 + $0x2b0] sm:$0xff]
      %v2298 = vld [vmem:[%s2 + $0x2b8] sm:$0xff]
      %v2299 = vld [vmem:[%s2 + $0x2c0] sm:$0xff]
      %v2300 = vld [vmem:[%s2 + $0x2c8] sm:$0xff]
      %v2301 = vld [vmem:[%s2 + $0x2d0] sm:$0xff]
      %v2302 = vld [vmem:[%s2 + $0x2d8] sm:$0xff]
      %v2303 = vld [vmem:[%s2 + $0x2e0] sm:$0xff]
      %v2304 = vld [vmem:[%s2 + $0x2e8] sm:$0xff]
      %v2305 = vld [vmem:[%s2 + $0x2f0] sm:$0xff]
      %v2306 = vld [vmem:[%s2 + $0x2f8] sm:$0xff]
      %v2307 = vld [vmem:[%s2 + $0x300] sm:$0xff]
      %v2308 = vld [vmem:[%s2 + $0x308] sm:$0xff]
      %v2309 = vld [vmem:[%s2 + $0x310] sm:$0xff]
      %v2310 = vld [vmem:[%s2 + $0x318] sm:$0xff]
      %v2311 = vld [vmem:[%s2 + $0x320] sm:$0xff]
      %v2312 = vld [vmem:[%s2 + $0x328] sm:$0xff]
      %v2313 = vld [vmem:[%s2 + $0x330] sm:$0xff]
      %v2314 = vld [vmem:[%s2 + $0x338] sm:$0xff]
      %v2315 = vld [vmem:[%s2 + $0x340] sm:$0xff]
      %v2316 = vld [vmem:[%s2 + $0x348] sm:$0xff]
      %v2317 = vld [vmem:[%s2 + $0x350] sm:$0xff]
      %v2318 = vld [vmem:[%s2 + $0x358] sm:$0xff]
      %v2319 = vld [vmem:[%s2 + $0x360] sm:$0xff]
      %v2320 = vld [vmem:[%s2 + $0x368] sm:$0xff]
      %v2321 = vld [vmem:[%s2 + $0x370] sm:$0xff]
      %v2322 = vld [vmem:[%s2 + $0x378] sm:$0xff]
      %v2323 = vld [vmem:[%s2 + $0x380] sm:$0xff]
      %v2324 = vld [vmem:[%s2 + $0x388] sm:$0xff]
      %v2325 = vld [vmem:[%s2 + $0x390] sm:$0xff]
      %v2326 = vld [vmem:[%s2 + $0x398] sm:$0xff]
      %v2327 = vld [vmem:[%s2 + $0x3a0] sm:$0xff]
      %v2328 = vld [vmem:[%s2 + $0x3a8] sm:$0xff]
      %v2329 = vld [vmem:[%s2 + $0x3b0] sm:$0xff]
      %v2330 = vld [vmem:[%s2 + $0x3b8] sm:$0xff]
      %v2331 = vld [vmem:[%s2 + $0x3c0] sm:$0xff]
      %v2332 = vld [vmem:[%s2 + $0x3c8] sm:$0xff]
      %v2333 = vld [vmem:[%s2 + $0x3d0] sm:$0xff]
      %v2334 = vld [vmem:[%s2 + $0x3d8] sm:$0xff]
      %v2335 = vld [vmem:[%s2 + $0x3e0] sm:$0xff]
      %v2336 = vld [vmem:[%s2 + $0x3e8] sm:$0xff]
      %v2337 = vld [vmem:[%s2 + $0x3f0] sm:$0xff]
      %v2338 = vld [vmem:[%s2 + $0x3f8] sm:$0xff]
      %v2339 = vld [vmem:[%s2 + $0x400] sm:$0xff]
      %v2340 = vld [vmem:[%s2 + $0x408] sm:$0xff]
      %v2341 = vld [vmem:[%s2 + $0x410] sm:$0xff]
      %v2342 = vld [vmem:[%s2 + $0x418] sm:$0xff]
      %v2343 = vld [vmem:[%s2 + $0x420] sm:$0xff]
      %v2344 = vld [vmem:[%s2 + $0x428] sm:$0xff]
      %v2345 = vld [vmem:[%s2 + $0x430] sm:$0xff]
      %v2346 = vld [vmem:[%s2 + $0x438] sm:$0xff]
      %v2347 = vld [vmem:[%s2 + $0x440] sm:$0xff]
      %v2348 = vld [vmem:[%s2 + $0x448] sm:$0xff]
      %v2349 = vld [vmem:[%s2 + $0x450] sm:$0xff]
      %v2350 = vld [vmem:[%s2 + $0x458] sm:$0xff]
      %v2351 = vld [vmem:[%s2 + $0x460] sm:$0xff]
      %v2352 = vld [vmem:[%s2 + $0x468] sm:$0xff]
      %v2353 = vld [vmem:[%s2 + $0x470] sm:$0xff]
      %v2354 = vld [vmem:[%s2 + $0x478] sm:$0xff]
      %v2355 = vld [vmem:[%s2 + $0x480] sm:$0xff]
      %v2356 = vld [vmem:[%s2 + $0x488] sm:$0xff]
      %v2357 = vld [vmem:[%s2 + $0x490] sm:$0xff]
      %v2358 = vld [vmem:[%s2 + $0x498] sm:$0xff]
      %v2359 = vld [vmem:[%s2 + $0x4a0] sm:$0xff]
      %v2360 = vld [vmem:[%s2 + $0x4a8] sm:$0xff]
      %v2361 = vld [vmem:[%s2 + $0x4b0] sm:$0xff]
      %v2362 = vld [vmem:[%s2 + $0x4b8] sm:$0xff]
      %v2363 = vld [vmem:[%s2 + $0x4c0] sm:$0xff]
      %v2364 = vld [vmem:[%s2 + $0x4c8] sm:$0xff]
      %v2365 = vld [vmem:[%s2 + $0x4d0] sm:$0xff]
      %v2366 = vld [vmem:[%s2 + $0x4d8] sm:$0xff]
      %v2367 = vld [vmem:[%s2 + $0x4e0] sm:$0xff]
      %v2368 = vld [vmem:[%s2 + $0x4e8] sm:$0xff]
      %v2369 = vld [vmem:[%s2 + $0x4f0] sm:$0xff]
      %v2370 = vld [vmem:[%s2 + $0x4f8] sm:$0xff]
      %2371 = vmatpush.msra.mxu0 %v2241
      %2372 = vmatpush.msra.mxu0 %v2239
      %2373 = vmatpush.msra.mxu0 %v2237
      %2374 = vmatpush.msra.mxu0 %v2235
      %2375 = vmatpush.msra.mxu0 %v2233
      %2376 = vmatpush.msra.mxu0 %v2231
      %2377 = vmatpush.msra.mxu0 %v2229
      %2378 = vmatpush.msra.mxu0 %v2227
      %2379 = vmatpush.msra.mxu0 %v2225
      %2380 = vmatpush.msra.mxu0 %v2223
      %2381 = vmatpush.msra.mxu0 %v2221
      %2382 = vmatpush.msra.mxu0 %v2219
      %2383 = vmatpush.msra.mxu0 %v2217
      %2384 = vmatpush.msra.mxu0 %v2215
      %2385 = vmatpush.msra.mxu0 %v2213
      %2386 = vmatpush.msra.mxu0 %v2211
      %2387 = vmatmul.f32.gmra.mxu0 %v756
      %v2388 = vpop.f32.mrf.mxu0
      %v2389 = vadd.f32 0.0, %v2388
      %2390 = vmatmul.f32.gmra.mxu0 %v759
      %v2391 = vpop.f32.mrf.mxu0
      %v2392 = vadd.f32 0.0, %v2391
      %2393 = vmatmul.f32.gmra.mxu0 %v762
      %v2394 = vpop.f32.mrf.mxu0
      %v2395 = vadd.f32 0.0, %v2394
      %2396 = vmatmul.f32.gmra.mxu0 %v765
      %v2397 = vpop.f32.mrf.mxu0
      %v2398 = vadd.f32 0.0, %v2397
      %2399 = vmatmul.f32.gmra.mxu0 %v768
      %v2400 = vpop.f32.mrf.mxu0
      %v2401 = vadd.f32 0.0, %v2400
      %2402 = vmatmul.f32.gmra.mxu0 %v771
      %v2403 = vpop.f32.mrf.mxu0
      %v2404 = vadd.f32 0.0, %v2403
      %2405 = vmatmul.f32.gmra.mxu0 %v774
      %v2406 = vpop.f32.mrf.mxu0
      %v2407 = vadd.f32 0.0, %v2406
      %2408 = vmatmul.f32.gmra.mxu0 %v777
      %v2409 = vpop.f32.mrf.mxu0
      %v2410 = vadd.f32 0.0, %v2409
      %2411 = vmatmul.f32.gmra.mxu0 %v780
      %v2412 = vpop.f32.mrf.mxu0
      %v2413 = vadd.f32 0.0, %v2412
      %2414 = vmatmul.f32.gmra.mxu0 %v783
      %v2415 = vpop.f32.mrf.mxu0
      %v2416 = vadd.f32 0.0, %v2415
      %2417 = vmatmul.f32.gmra.mxu0 %v786
      %v2418 = vpop.f32.mrf.mxu0
      %v2419 = vadd.f32 0.0, %v2418
      %2420 = vmatmul.f32.gmra.mxu0 %v789
      %v2421 = vpop.f32.mrf.mxu0
      %v2422 = vadd.f32 0.0, %v2421
      %2423 = vmatmul.f32.gmra.mxu0 %v792
      %v2424 = vpop.f32.mrf.mxu0
      %v2425 = vadd.f32 0.0, %v2424
      %2426 = vmatmul.f32.gmra.mxu0 %v795
      %v2427 = vpop.f32.mrf.mxu0
      %v2428 = vadd.f32 0.0, %v2427
      %2429 = vmatmul.f32.gmra.mxu0 %v798
      %v2430 = vpop.f32.mrf.mxu0
      %v2431 = vadd.f32 0.0, %v2430
      %2432 = vmatmul.f32.gmra.mxu0 %v801
      %v2433 = vpop.f32.mrf.mxu0
      %v2434 = vadd.f32 0.0, %v2433
      %2435 = vmatmul.f32.gmra.mxu0 %v804
      %v2436 = vpop.f32.mrf.mxu0
      %v2437 = vadd.f32 0.0, %v2436
      %2438 = vmatmul.f32.gmra.mxu0 %v807
      %v2439 = vpop.f32.mrf.mxu0
      %v2440 = vadd.f32 0.0, %v2439
      %2441 = vmatmul.f32.gmra.mxu0 %v810
      %v2442 = vpop.f32.mrf.mxu0
      %v2443 = vadd.f32 0.0, %v2442
      %2444 = vmatmul.f32.gmra.mxu0 %v813
      %v2445 = vpop.f32.mrf.mxu0
      %v2446 = vadd.f32 0.0, %v2445
      %2447 = vmatmul.f32.gmra.mxu0 %v816
      %v2448 = vpop.f32.mrf.mxu0
      %v2449 = vadd.f32 0.0, %v2448
      %2450 = vmatmul.f32.gmra.mxu0 %v819
      %v2451 = vpop.f32.mrf.mxu0
      %v2452 = vadd.f32 0.0, %v2451
      %2453 = vmatmul.f32.gmra.mxu0 %v822
      %v2454 = vpop.f32.mrf.mxu0
      %v2455 = vadd.f32 0.0, %v2454
      %2456 = vmatmul.f32.gmra.mxu0 %v825
      %v2457 = vpop.f32.mrf.mxu0
      %v2458 = vadd.f32 0.0, %v2457
      %2459 = vmatmul.f32.gmra.mxu0 %v828
      %v2460 = vpop.f32.mrf.mxu0
      %v2461 = vadd.f32 0.0, %v2460
      %2462 = vmatmul.f32.gmra.mxu0 %v831
      %v2463 = vpop.f32.mrf.mxu0
      %v2464 = vadd.f32 0.0, %v2463
      %2465 = vmatmul.f32.gmra.mxu0 %v834
      %v2466 = vpop.f32.mrf.mxu0
      %v2467 = vadd.f32 0.0, %v2466
      %2468 = vmatmul.f32.gmra.mxu0 %v837
      %v2469 = vpop.f32.mrf.mxu0
      %v2470 = vadd.f32 0.0, %v2469
      %2471 = vdwg.mxu0
      %2472 = vmatpush.msra.mxu0 %v2273
      %2473 = vmatpush.msra.mxu0 %v2271
      %2474 = vmatpush.msra.mxu0 %v2269
      %2475 = vmatpush.msra.mxu0 %v2267
      %2476 = vmatpush.msra.mxu0 %v2265
      %2477 = vmatpush.msra.mxu0 %v2263
      %2478 = vmatpush.msra.mxu0 %v2261
      %2479 = vmatpush.msra.mxu0 %v2259
      %2480 = vmatpush.msra.mxu0 %v2257
      %2481 = vmatpush.msra.mxu0 %v2255
      %2482 = vmatpush.msra.mxu0 %v2253
      %2483 = vmatpush.msra.mxu0 %v2251
      %2484 = vmatpush.msra.mxu0 %v2249
      %2485 = vmatpush.msra.mxu0 %v2247
      %2486 = vmatpush.msra.mxu0 %v2245
      %2487 = vmatpush.msra.mxu0 %v2243
      %2488 = vmatmul.f32.gmra.mxu0 %v1099
      %v2489 = vpop.f32.mrf.mxu0
      %v2490 = vadd.f32 %v2389, %v2489
      %2491 = vmatmul.f32.gmra.mxu0 %v1102
      %v2492 = vpop.f32.mrf.mxu0
      %v2493 = vadd.f32 %v2392, %v2492
      %2494 = vmatmul.f32.gmra.mxu0 %v1105
      %v2495 = vpop.f32.mrf.mxu0
      %v2496 = vadd.f32 %v2395, %v2495
      %2497 = vmatmul.f32.gmra.mxu0 %v1108
      %v2498 = vpop.f32.mrf.mxu0
      %v2499 = vadd.f32 %v2398, %v2498
      %2500 = vmatmul.f32.gmra.mxu0 %v1111
      %v2501 = vpop.f32.mrf.mxu0
      %v2502 = vadd.f32 %v2401, %v2501
      %2503 = vmatmul.f32.gmra.mxu0 %v1114
      %v2504 = vpop.f32.mrf.mxu0
      %v2505 = vadd.f32 %v2404, %v2504
      %2506 = vmatmul.f32.gmra.mxu0 %v1117
      %v2507 = vpop.f32.mrf.mxu0
      %v2508 = vadd.f32 %v2407, %v2507
      %2509 = vmatmul.f32.gmra.mxu0 %v1120
      %v2510 = vpop.f32.mrf.mxu0
      %v2511 = vadd.f32 %v2410, %v2510
      %2512 = vmatmul.f32.gmra.mxu0 %v1123
      %v2513 = vpop.f32.mrf.mxu0
      %v2514 = vadd.f32 %v2413, %v2513
      %2515 = vmatmul.f32.gmra.mxu0 %v1126
      %v2516 = vpop.f32.mrf.mxu0
      %v2517 = vadd.f32 %v2416, %v2516
      %2518 = vmatmul.f32.gmra.mxu0 %v1129
      %v2519 = vpop.f32.mrf.mxu0
      %v2520 = vadd.f32 %v2419, %v2519
      %2521 = vmatmul.f32.gmra.mxu0 %v1132
      %v2522 = vpop.f32.mrf.mxu0
      %v2523 = vadd.f32 %v2422, %v2522
      %2524 = vmatmul.f32.gmra.mxu0 %v1135
      %v2525 = vpop.f32.mrf.mxu0
      %v2526 = vadd.f32 %v2425, %v2525
      %2527 = vmatmul.f32.gmra.mxu0 %v1138
      %v2528 = vpop.f32.mrf.mxu0
      %v2529 = vadd.f32 %v2428, %v2528
      %2530 = vmatmul.f32.gmra.mxu0 %v1141
      %v2531 = vpop.f32.mrf.mxu0
      %v2532 = vadd.f32 %v2431, %v2531
      %2533 = vmatmul.f32.gmra.mxu0 %v1144
      %v2534 = vpop.f32.mrf.mxu0
      %v2535 = vadd.f32 %v2434, %v2534
      %2536 = vmatmul.f32.gmra.mxu0 %v1147
      %v2537 = vpop.f32.mrf.mxu0
      %v2538 = vadd.f32 %v2437, %v2537
      %2539 = vmatmul.f32.gmra.mxu0 %v1150
      %v2540 = vpop.f32.mrf.mxu0
      %v2541 = vadd.f32 %v2440, %v2540
      %2542 = vmatmul.f32.gmra.mxu0 %v1153
      %v2543 = vpop.f32.mrf.mxu0
      %v2544 = vadd.f32 %v2443, %v2543
      %2545 = vmatmul.f32.gmra.mxu0 %v1156
      %v2546 = vpop.f32.mrf.mxu0
      %v2547 = vadd.f32 %v2446, %v2546
      %2548 = vmatmul.f32.gmra.mxu0 %v1159
      %v2549 = vpop.f32.mrf.mxu0
      %v2550 = vadd.f32 %v2449, %v2549
      %2551 = vmatmul.f32.gmra.mxu0 %v1162
      %v2552 = vpop.f32.mrf.mxu0
      %v2553 = vadd.f32 %v2452, %v2552
      %2554 = vmatmul.f32.gmra.mxu0 %v1165
      %v2555 = vpop.f32.mrf.mxu0
      %v2556 = vadd.f32 %v2455, %v2555
      %2557 = vmatmul.f32.gmra.mxu0 %v1168
      %v2558 = vpop.f32.mrf.mxu0
      %v2559 = vadd.f32 %v2458, %v2558
      %2560 = vmatmul.f32.gmra.mxu0 %v1171
      %v2561 = vpop.f32.mrf.mxu0
      %v2562 = vadd.f32 %v2461, %v2561
      %2563 = vmatmul.f32.gmra.mxu0 %v1174
      %v2564 = vpop.f32.mrf.mxu0
      %v2565 = vadd.f32 %v2464, %v2564
      %2566 = vmatmul.f32.gmra.mxu0 %v1177
      %v2567 = vpop.f32.mrf.mxu0
      %v2568 = vadd.f32 %v2467, %v2567
      %2569 = vmatmul.f32.gmra.mxu0 %v1180
      %v2570 = vpop.f32.mrf.mxu0
      %v2571 = vadd.f32 %v2470, %v2570
      %2572 = vdwg.mxu0
      %2573 = vmatpush.msra.mxu0 %v2305
      %2574 = vmatpush.msra.mxu0 %v2303
      %2575 = vmatpush.msra.mxu0 %v2301
      %2576 = vmatpush.msra.mxu0 %v2299
      %2577 = vmatpush.msra.mxu0 %v2297
      %2578 = vmatpush.msra.mxu0 %v2295
      %2579 = vmatpush.msra.mxu0 %v2293
      %2580 = vmatpush.msra.mxu0 %v2291
      %2581 = vmatpush.msra.mxu0 %v2289
      %2582 = vmatpush.msra.mxu0 %v2287
      %2583 = vmatpush.msra.mxu0 %v2285
      %2584 = vmatpush.msra.mxu0 %v2283
      %2585 = vmatpush.msra.mxu0 %v2281
      %2586 = vmatpush.msra.mxu0 %v2279
      %2587 = vmatpush.msra.mxu0 %v2277
      %2588 = vmatpush.msra.mxu0 %v2275
      %2589 = vmatmul.f32.gmra.mxu0 %v1442
      %v2590 = vpop.f32.mrf.mxu0
      %v2591 = vadd.f32 %v2490, %v2590
      %2592 = vmatmul.f32.gmra.mxu0 %v1445
      %v2593 = vpop.f32.mrf.mxu0
      %v2594 = vadd.f32 %v2493, %v2593
      %2595 = vmatmul.f32.gmra.mxu0 %v1448
      %v2596 = vpop.f32.mrf.mxu0
      %v2597 = vadd.f32 %v2496, %v2596
      %2598 = vmatmul.f32.gmra.mxu0 %v1451
      %v2599 = vpop.f32.mrf.mxu0
      %v2600 = vadd.f32 %v2499, %v2599
      %2601 = vmatmul.f32.gmra.mxu0 %v1454
      %v2602 = vpop.f32.mrf.mxu0
      %v2603 = vadd.f32 %v2502, %v2602
      %2604 = vmatmul.f32.gmra.mxu0 %v1457
      %v2605 = vpop.f32.mrf.mxu0
      %v2606 = vadd.f32 %v2505, %v2605
      %2607 = vmatmul.f32.gmra.mxu0 %v1460
      %v2608 = vpop.f32.mrf.mxu0
      %v2609 = vadd.f32 %v2508, %v2608
      %2610 = vmatmul.f32.gmra.mxu0 %v1463
      %v2611 = vpop.f32.mrf.mxu0
      %v2612 = vadd.f32 %v2511, %v2611
      %2613 = vmatmul.f32.gmra.mxu0 %v1466
      %v2614 = vpop.f32.mrf.mxu0
      %v2615 = vadd.f32 %v2514, %v2614
      %2616 = vmatmul.f32.gmra.mxu0 %v1469
      %v2617 = vpop.f32.mrf.mxu0
      %v2618 = vadd.f32 %v2517, %v2617
      %2619 = vmatmul.f32.gmra.mxu0 %v1472
      %v2620 = vpop.f32.mrf.mxu0
      %v2621 = vadd.f32 %v2520, %v2620
      %2622 = vmatmul.f32.gmra.mxu0 %v1475
      %v2623 = vpop.f32.mrf.mxu0
      %v2624 = vadd.f32 %v2523, %v2623
      %2625 = vmatmul.f32.gmra.mxu0 %v1478
      %v2626 = vpop.f32.mrf.mxu0
      %v2627 = vadd.f32 %v2526, %v2626
      %2628 = vmatmul.f32.gmra.mxu0 %v1481
      %v2629 = vpop.f32.mrf.mxu0
      %v2630 = vadd.f32 %v2529, %v2629
      %2631 = vmatmul.f32.gmra.mxu0 %v1484
      %v2632 = vpop.f32.mrf.mxu0
      %v2633 = vadd.f32 %v2532, %v2632
      %2634 = vmatmul.f32.gmra.mxu0 %v1487
      %v2635 = vpop.f32.mrf.mxu0
      %v2636 = vadd.f32 %v2535, %v2635
      %2637 = vmatmul.f32.gmra.mxu0 %v1490
      %v2638 = vpop.f32.mrf.mxu0
      %v2639 = vadd.f32 %v2538, %v2638
      %2640 = vmatmul.f32.gmra.mxu0 %v1493
      %v2641 = vpop.f32.mrf.mxu0
      %v2642 = vadd.f32 %v2541, %v2641
      %2643 = vmatmul.f32.gmra.mxu0 %v1496
      %v2644 = vpop.f32.mrf.mxu0
      %v2645 = vadd.f32 %v2544, %v2644
      %2646 = vmatmul.f32.gmra.mxu0 %v1499
      %v2647 = vpop.f32.mrf.mxu0
      %v2648 = vadd.f32 %v2547, %v2647
      %2649 = vmatmul.f32.gmra.mxu0 %v1502
      %v2650 = vpop.f32.mrf.mxu0
      %v2651 = vadd.f32 %v2550, %v2650
      %2652 = vmatmul.f32.gmra.mxu0 %v1505
      %v2653 = vpop.f32.mrf.mxu0
      %v2654 = vadd.f32 %v2553, %v2653
      %2655 = vmatmul.f32.gmra.mxu0 %v1508
      %v2656 = vpop.f32.mrf.mxu0
      %v2657 = vadd.f32 %v2556, %v2656
      %2658 = vmatmul.f32.gmra.mxu0 %v1511
      %v2659 = vpop.f32.mrf.mxu0
      %v2660 = vadd.f32 %v2559, %v2659
      %2661 = vmatmul.f32.gmra.mxu0 %v1514
      %v2662 = vpop.f32.mrf.mxu0
      %v2663 = vadd.f32 %v2562, %v2662
      %2664 = vmatmul.f32.gmra.mxu0 %v1517
      %v2665 = vpop.f32.mrf.mxu0
      %v2666 = vadd.f32 %v2565, %v2665
      %2667 = vmatmul.f32.gmra.mxu0 %v1520
      %v2668 = vpop.f32.mrf.mxu0
      %v2669 = vadd.f32 %v2568, %v2668
      %2670 = vmatmul.f32.gmra.mxu0 %v1523
      %v2671 = vpop.f32.mrf.mxu0
      %v2672 = vadd.f32 %v2571, %v2671
      %2673 = vdwg.mxu0
      %2674 = vmatpush.msra.mxu0 %v2337
      %2675 = vmatpush.msra.mxu0 %v2335
      %2676 = vmatpush.msra.mxu0 %v2333
      %2677 = vmatpush.msra.mxu0 %v2331
      %2678 = vmatpush.msra.mxu0 %v2329
      %2679 = vmatpush.msra.mxu0 %v2327
      %2680 = vmatpush.msra.mxu0 %v2325
      %2681 = vmatpush.msra.mxu0 %v2323
      %2682 = vmatpush.msra.mxu0 %v2321
      %2683 = vmatpush.msra.mxu0 %v2319
      %2684 = vmatpush.msra.mxu0 %v2317
      %2685 = vmatpush.msra.mxu0 %v2315
      %2686 = vmatpush.msra.mxu0 %v2313
      %2687 = vmatpush.msra.mxu0 %v2311
      %2688 = vmatpush.msra.mxu0 %v2309
      %2689 = vmatpush.msra.mxu0 %v2307
      %2690 = vmatmul.f32.gmra.mxu0 %v1785
      %v2691 = vpop.f32.mrf.mxu0
      %v2692 = vadd.f32 %v2591, %v2691
      %2693 = vmatmul.f32.gmra.mxu0 %v1788
      %v2694 = vpop.f32.mrf.mxu0
      %v2695 = vadd.f32 %v2594, %v2694
      %2696 = vmatmul.f32.gmra.mxu0 %v1791
      %v2697 = vpop.f32.mrf.mxu0
      %v2698 = vadd.f32 %v2597, %v2697
      %2699 = vmatmul.f32.gmra.mxu0 %v1794
      %v2700 = vpop.f32.mrf.mxu0
      %v2701 = vadd.f32 %v2600, %v2700
      %2702 = vmatmul.f32.gmra.mxu0 %v1797
      %v2703 = vpop.f32.mrf.mxu0
      %v2704 = vadd.f32 %v2603, %v2703
      %2705 = vmatmul.f32.gmra.mxu0 %v1800
      %v2706 = vpop.f32.mrf.mxu0
      %v2707 = vadd.f32 %v2606, %v2706
      %2708 = vmatmul.f32.gmra.mxu0 %v1803
      %v2709 = vpop.f32.mrf.mxu0
      %v2710 = vadd.f32 %v2609, %v2709
      %2711 = vmatmul.f32.gmra.mxu0 %v1806
      %v2712 = vpop.f32.mrf.mxu0
      %v2713 = vadd.f32 %v2612, %v2712
      %2714 = vmatmul.f32.gmra.mxu0 %v1809
      %v2715 = vpop.f32.mrf.mxu0
      %v2716 = vadd.f32 %v2615, %v2715
      %2717 = vmatmul.f32.gmra.mxu0 %v1812
      %v2718 = vpop.f32.mrf.mxu0
      %v2719 = vadd.f32 %v2618, %v2718
      %2720 = vmatmul.f32.gmra.mxu0 %v1815
      %v2721 = vpop.f32.mrf.mxu0
      %v2722 = vadd.f32 %v2621, %v2721
      %2723 = vmatmul.f32.gmra.mxu0 %v1818
      %v2724 = vpop.f32.mrf.mxu0
      %v2725 = vadd.f32 %v2624, %v2724
      %2726 = vmatmul.f32.gmra.mxu0 %v1821
      %v2727 = vpop.f32.mrf.mxu0
      %v2728 = vadd.f32 %v2627, %v2727
      %2729 = vmatmul.f32.gmra.mxu0 %v1824
      %v2730 = vpop.f32.mrf.mxu0
      %v2731 = vadd.f32 %v2630, %v2730
      %2732 = vmatmul.f32.gmra.mxu0 %v1827
      %v2733 = vpop.f32.mrf.mxu0
      %v2734 = vadd.f32 %v2633, %v2733
      %2735 = vmatmul.f32.gmra.mxu0 %v1830
      %v2736 = vpop.f32.mrf.mxu0
      %v2737 = vadd.f32 %v2636, %v2736
      %2738 = vmatmul.f32.gmra.mxu0 %v1833
      %v2739 = vpop.f32.mrf.mxu0
      %v2740 = vadd.f32 %v2639, %v2739
      %2741 = vmatmul.f32.gmra.mxu0 %v1836
      %v2742 = vpop.f32.mrf.mxu0
      %v2743 = vadd.f32 %v2642, %v2742
      %2744 = vmatmul.f32.gmra.mxu0 %v1839
      %v2745 = vpop.f32.mrf.mxu0
      %v2746 = vadd.f32 %v2645, %v2745
      %2747 = vmatmul.f32.gmra.mxu0 %v1842
      %v2748 = vpop.f32.mrf.mxu0
      %v2749 = vadd.f32 %v2648, %v2748
      %2750 = vmatmul.f32.gmra.mxu0 %v1845
      %v2751 = vpop.f32.mrf.mxu0
      %v2752 = vadd.f32 %v2651, %v2751
      %2753 = vmatmul.f32.gmra.mxu0 %v1848
      %v2754 = vpop.f32.mrf.mxu0
      %v2755 = vadd.f32 %v2654, %v2754
      %2756 = vmatmul.f32.gmra.mxu0 %v1851
      %v2757 = vpop.f32.mrf.mxu0
      %v2758 = vadd.f32 %v2657, %v2757
      %2759 = vmatmul.f32.gmra.mxu0 %v1854
      %v2760 = vpop.f32.mrf.mxu0
      %v2761 = vadd.f32 %v2660, %v2760
      %2762 = vmatmul.f32.gmra.mxu0 %v1857
      %v2763 = vpop.f32.mrf.mxu0
      %v2764 = vadd.f32 %v2663, %v2763
      %2765 = vmatmul.f32.gmra.mxu0 %v1860
      %v2766 = vpop.f32.mrf.mxu0
      %v2767 = vadd.f32 %v2666, %v2766
      %2768 = vmatmul.f32.gmra.mxu0 %v1863
      %v2769 = vpop.f32.mrf.mxu0
      %v2770 = vadd.f32 %v2669, %v2769
      %2771 = vmatmul.f32.gmra.mxu0 %v1866
      %v2772 = vpop.f32.mrf.mxu0
      %v2773 = vadd.f32 %v2672, %v2772
      %2774 = vdwg.mxu0
      %2775 = vmatpush.msra.mxu0 %v2369
      %2776 = vmatpush.msra.mxu0 %v2367
      %2777 = vmatpush.msra.mxu0 %v2365
      %2778 = vmatpush.msra.mxu0 %v2363
      %2779 = vmatpush.msra.mxu0 %v2361
      %2780 = vmatpush.msra.mxu0 %v2359
      %2781 = vmatpush.msra.mxu0 %v2357
      %2782 = vmatpush.msra.mxu0 %v2355
      %2783 = vmatpush.msra.mxu0 %v2353
      %2784 = vmatpush.msra.mxu0 %v2351
      %2785 = vmatpush.msra.mxu0 %v2349
      %2786 = vmatpush.msra.mxu0 %v2347
      %2787 = vmatpush.msra.mxu0 %v2345
      %2788 = vmatpush.msra.mxu0 %v2343
      %2789 = vmatpush.msra.mxu0 %v2341
      %2790 = vmatpush.msra.mxu0 %v2339
      %2791 = vmatmul.f32.gmra.mxu0 %v2128
      %v2792 = vpop.f32.mrf.mxu0
      %v2793 = vadd.f32 %v2692, %v2792
      %2794 = vmatmul.f32.gmra.mxu0 %v2131
      %v2795 = vpop.f32.mrf.mxu0
      %v2796 = vadd.f32 %v2695, %v2795
      %2797 = vmatmul.f32.gmra.mxu0 %v2134
      %v2798 = vpop.f32.mrf.mxu0
      %v2799 = vadd.f32 %v2698, %v2798
      %2800 = vmatmul.f32.gmra.mxu0 %v2137
      %v2801 = vpop.f32.mrf.mxu0
      %v2802 = vadd.f32 %v2701, %v2801
      %2803 = vmatmul.f32.gmra.mxu0 %v2140
      %v2804 = vpop.f32.mrf.mxu0
      %v2805 = vadd.f32 %v2704, %v2804
      %2806 = vmatmul.f32.gmra.mxu0 %v2143
      %v2807 = vpop.f32.mrf.mxu0
      %v2808 = vadd.f32 %v2707, %v2807
      %2809 = vmatmul.f32.gmra.mxu0 %v2146
      %v2810 = vpop.f32.mrf.mxu0
      %v2811 = vadd.f32 %v2710, %v2810
      %2812 = vmatmul.f32.gmra.mxu0 %v2149
      %v2813 = vpop.f32.mrf.mxu0
      %v2814 = vadd.f32 %v2713, %v2813
      %2815 = vmatmul.f32.gmra.mxu0 %v2152
      %v2816 = vpop.f32.mrf.mxu0
      %v2817 = vadd.f32 %v2716, %v2816
      %2818 = vmatmul.f32.gmra.mxu0 %v2155
      %v2819 = vpop.f32.mrf.mxu0
      %v2820 = vadd.f32 %v2719, %v2819
      %2821 = vmatmul.f32.gmra.mxu0 %v2158
      %v2822 = vpop.f32.mrf.mxu0
      %v2823 = vadd.f32 %v2722, %v2822
      %2824 = vmatmul.f32.gmra.mxu0 %v2161
      %v2825 = vpop.f32.mrf.mxu0
      %v2826 = vadd.f32 %v2725, %v2825
      %2827 = vmatmul.f32.gmra.mxu0 %v2164
      %v2828 = vpop.f32.mrf.mxu0
      %v2829 = vadd.f32 %v2728, %v2828
      %2830 = vmatmul.f32.gmra.mxu0 %v2167
      %v2831 = vpop.f32.mrf.mxu0
      %v2832 = vadd.f32 %v2731, %v2831
      %2833 = vmatmul.f32.gmra.mxu0 %v2170
      %v2834 = vpop.f32.mrf.mxu0
      %v2835 = vadd.f32 %v2734, %v2834
      %2836 = vmatmul.f32.gmra.mxu0 %v2173
      %v2837 = vpop.f32.mrf.mxu0
      %v2838 = vadd.f32 %v2737, %v2837
      %2839 = vmatmul.f32.gmra.mxu0 %v2176
      %v2840 = vpop.f32.mrf.mxu0
      %v2841 = vadd.f32 %v2740, %v2840
      %2842 = vmatmul.f32.gmra.mxu0 %v2179
      %v2843 = vpop.f32.mrf.mxu0
      %v2844 = vadd.f32 %v2743, %v2843
      %2845 = vmatmul.f32.gmra.mxu0 %v2182
      %v2846 = vpop.f32.mrf.mxu0
      %v2847 = vadd.f32 %v2746, %v2846
      %2848 = vmatmul.f32.gmra.mxu0 %v2185
      %v2849 = vpop.f32.mrf.mxu0
      %v2850 = vadd.f32 %v2749, %v2849
      %2851 = vmatmul.f32.gmra.mxu0 %v2188
      %v2852 = vpop.f32.mrf.mxu0
      %v2853 = vadd.f32 %v2752, %v2852
      %2854 = vmatmul.f32.gmra.mxu0 %v2191
      %v2855 = vpop.f32.mrf.mxu0
      %v2856 = vadd.f32 %v2755, %v2855
      %2857 = vmatmul.f32.gmra.mxu0 %v2194
      %v2858 = vpop.f32.mrf.mxu0
      %v2859 = vadd.f32 %v2758, %v2858
      %2860 = vmatmul.f32.gmra.mxu0 %v2197
      %v2861 = vpop.f32.mrf.mxu0
      %v2862 = vadd.f32 %v2761, %v2861
      %2863 = vmatmul.f32.gmra.mxu0 %v2200
      %v2864 = vpop.f32.mrf.mxu0
      %v2865 = vadd.f32 %v2764, %v2864
      %2866 = vmatmul.f32.gmra.mxu0 %v2203
      %v2867 = vpop.f32.mrf.mxu0
      %v2868 = vadd.f32 %v2767, %v2867
      %2869 = vmatmul.f32.gmra.mxu0 %v2206
      %v2870 = vpop.f32.mrf.mxu0
      %v2871 = vadd.f32 %v2770, %v2870
      %2872 = vmatmul.f32.gmra.mxu0 %v2209
      %v2873 = vpop.f32.mrf.mxu0
      %v2874 = vadd.f32 %v2773, %v2873
      %2875 = vdwg.mxu0
      %2876 = vmatpush.msra.mxu0 %v2242
      %2877 = vmatpush.msra.mxu0 %v2240
      %2878 = vmatpush.msra.mxu0 %v2238
      %2879 = vmatpush.msra.mxu0 %v2236
      %2880 = vmatpush.msra.mxu0 %v2234
      %2881 = vmatpush.msra.mxu0 %v2232
      %2882 = vmatpush.msra.mxu0 %v2230
      %2883 = vmatpush.msra.mxu0 %v2228
      %2884 = vmatpush.msra.mxu0 %v2226
      %2885 = vmatpush.msra.mxu0 %v2224
      %2886 = vmatpush.msra.mxu0 %v2222
      %2887 = vmatpush.msra.mxu0 %v2220
      %2888 = vmatpush.msra.mxu0 %v2218
      %2889 = vmatpush.msra.mxu0 %v2216
      %2890 = vmatpush.msra.mxu0 %v2214
      %2891 = vmatpush.msra.mxu0 %v2212
      %2892 = vmatmul.f32.gmra.mxu0 %v756
      %v2893 = vpop.f32.mrf.mxu0
      %v2894 = vadd.f32 0.0, %v2893
      %2895 = vmatmul.f32.gmra.mxu0 %v759
      %v2896 = vpop.f32.mrf.mxu0
      %v2897 = vadd.f32 0.0, %v2896
      %2898 = vmatmul.f32.gmra.mxu0 %v762
      %v2899 = vpop.f32.mrf.mxu0
      %v2900 = vadd.f32 0.0, %v2899
      %2901 = vmatmul.f32.gmra.mxu0 %v765
      %v2902 = vpop.f32.mrf.mxu0
      %v2903 = vadd.f32 0.0, %v2902
      %2904 = vmatmul.f32.gmra.mxu0 %v768
      %v2905 = vpop.f32.mrf.mxu0
      %v2906 = vadd.f32 0.0, %v2905
      %2907 = vmatmul.f32.gmra.mxu0 %v771
      %v2908 = vpop.f32.mrf.mxu0
      %v2909 = vadd.f32 0.0, %v2908
      %2910 = vmatmul.f32.gmra.mxu0 %v774
      %v2911 = vpop.f32.mrf.mxu0
      %v2912 = vadd.f32 0.0, %v2911
      %2913 = vmatmul.f32.gmra.mxu0 %v777
      %v2914 = vpop.f32.mrf.mxu0
      %v2915 = vadd.f32 0.0, %v2914
      %2916 = vmatmul.f32.gmra.mxu0 %v780
      %v2917 = vpop.f32.mrf.mxu0
      %v2918 = vadd.f32 0.0, %v2917
      %2919 = vmatmul.f32.gmra.mxu0 %v783
      %v2920 = vpop.f32.mrf.mxu0
      %v2921 = vadd.f32 0.0, %v2920
      %2922 = vmatmul.f32.gmra.mxu0 %v786
      %v2923 = vpop.f32.mrf.mxu0
      %v2924 = vadd.f32 0.0, %v2923
      %2925 = vmatmul.f32.gmra.mxu0 %v789
      %v2926 = vpop.f32.mrf.mxu0
      %v2927 = vadd.f32 0.0, %v2926
      %2928 = vmatmul.f32.gmra.mxu0 %v792
      %v2929 = vpop.f32.mrf.mxu0
      %v2930 = vadd.f32 0.0, %v2929
      %2931 = vmatmul.f32.gmra.mxu0 %v795
      %v2932 = vpop.f32.mrf.mxu0
      %v2933 = vadd.f32 0.0, %v2932
      %2934 = vmatmul.f32.gmra.mxu0 %v798
      %v2935 = vpop.f32.mrf.mxu0
      %v2936 = vadd.f32 0.0, %v2935
      %2937 = vmatmul.f32.gmra.mxu0 %v801
      %v2938 = vpop.f32.mrf.mxu0
      %v2939 = vadd.f32 0.0, %v2938
      %2940 = vmatmul.f32.gmra.mxu0 %v804
      %v2941 = vpop.f32.mrf.mxu0
      %v2942 = vadd.f32 0.0, %v2941
      %2943 = vmatmul.f32.gmra.mxu0 %v807
      %v2944 = vpop.f32.mrf.mxu0
      %v2945 = vadd.f32 0.0, %v2944
      %2946 = vmatmul.f32.gmra.mxu0 %v810
      %v2947 = vpop.f32.mrf.mxu0
      %v2948 = vadd.f32 0.0, %v2947
      %2949 = vmatmul.f32.gmra.mxu0 %v813
      %v2950 = vpop.f32.mrf.mxu0
      %v2951 = vadd.f32 0.0, %v2950
      %2952 = vmatmul.f32.gmra.mxu0 %v816
      %v2953 = vpop.f32.mrf.mxu0
      %v2954 = vadd.f32 0.0, %v2953
      %2955 = vmatmul.f32.gmra.mxu0 %v819
      %v2956 = vpop.f32.mrf.mxu0
      %v2957 = vadd.f32 0.0, %v2956
      %2958 = vmatmul.f32.gmra.mxu0 %v822
      %v2959 = vpop.f32.mrf.mxu0
      %v2960 = vadd.f32 0.0, %v2959
      %2961 = vmatmul.f32.gmra.mxu0 %v825
      %v2962 = vpop.f32.mrf.mxu0
      %v2963 = vadd.f32 0.0, %v2962
      %2964 = vmatmul.f32.gmra.mxu0 %v828
      %v2965 = vpop.f32.mrf.mxu0
      %v2966 = vadd.f32 0.0, %v2965
      %2967 = vmatmul.f32.gmra.mxu0 %v831
      %v2968 = vpop.f32.mrf.mxu0
      %v2969 = vadd.f32 0.0, %v2968
      %2970 = vmatmul.f32.gmra.mxu0 %v834
      %v2971 = vpop.f32.mrf.mxu0
      %v2972 = vadd.f32 0.0, %v2971
      %2973 = vmatmul.f32.gmra.mxu0 %v837
      %v2974 = vpop.f32.mrf.mxu0
      %v2975 = vadd.f32 0.0, %v2974
      %2976 = vdwg.mxu0
      %2977 = vmatpush.msra.mxu0 %v2274
      %2978 = vmatpush.msra.mxu0 %v2272
      %2979 = vmatpush.msra.mxu0 %v2270
      %2980 = vmatpush.msra.mxu0 %v2268
      %2981 = vmatpush.msra.mxu0 %v2266
      %2982 = vmatpush.msra.mxu0 %v2264
      %2983 = vmatpush.msra.mxu0 %v2262
      %2984 = vmatpush.msra.mxu0 %v2260
      %2985 = vmatpush.msra.mxu0 %v2258
      %2986 = vmatpush.msra.mxu0 %v2256
      %2987 = vmatpush.msra.mxu0 %v2254
      %2988 = vmatpush.msra.mxu0 %v2252
      %2989 = vmatpush.msra.mxu0 %v2250
      %2990 = vmatpush.msra.mxu0 %v2248
      %2991 = vmatpush.msra.mxu0 %v2246
      %2992 = vmatpush.msra.mxu0 %v2244
      %2993 = vmatmul.f32.gmra.mxu0 %v1099
      %v2994 = vpop.f32.mrf.mxu0
      %v2995 = vadd.f32 %v2894, %v2994
      %2996 = vmatmul.f32.gmra.mxu0 %v1102
      %v2997 = vpop.f32.mrf.mxu0
      %v2998 = vadd.f32 %v2897, %v2997
      %2999 = vmatmul.f32.gmra.mxu0 %v1105
      %v3000 = vpop.f32.mrf.mxu0
      %v3001 = vadd.f32 %v2900, %v3000
      %3002 = vmatmul.f32.gmra.mxu0 %v1108
      %v3003 = vpop.f32.mrf.mxu0
      %v3004 = vadd.f32 %v2903, %v3003
      %3005 = vmatmul.f32.gmra.mxu0 %v1111
      %v3006 = vpop.f32.mrf.mxu0
      %v3007 = vadd.f32 %v2906, %v3006
      %3008 = vmatmul.f32.gmra.mxu0 %v1114
      %v3009 = vpop.f32.mrf.mxu0
      %v3010 = vadd.f32 %v2909, %v3009
      %3011 = vmatmul.f32.gmra.mxu0 %v1117
      %v3012 = vpop.f32.mrf.mxu0
      %v3013 = vadd.f32 %v2912, %v3012
      %3014 = vmatmul.f32.gmra.mxu0 %v1120
      %v3015 = vpop.f32.mrf.mxu0
      %v3016 = vadd.f32 %v2915, %v3015
      %3017 = vmatmul.f32.gmra.mxu0 %v1123
      %v3018 = vpop.f32.mrf.mxu0
      %v3019 = vadd.f32 %v2918, %v3018
      %3020 = vmatmul.f32.gmra.mxu0 %v1126
      %v3021 = vpop.f32.mrf.mxu0
      %v3022 = vadd.f32 %v2921, %v3021
      %3023 = vmatmul.f32.gmra.mxu0 %v1129
      %v3024 = vpop.f32.mrf.mxu0
      %v3025 = vadd.f32 %v2924, %v3024
      %3026 = vmatmul.f32.gmra.mxu0 %v1132
      %v3027 = vpop.f32.mrf.mxu0
      %v3028 = vadd.f32 %v2927, %v3027
      %3029 = vmatmul.f32.gmra.mxu0 %v1135
      %v3030 = vpop.f32.mrf.mxu0
      %v3031 = vadd.f32 %v2930, %v3030
      %3032 = vmatmul.f32.gmra.mxu0 %v1138
      %v3033 = vpop.f32.mrf.mxu0
      %v3034 = vadd.f32 %v2933, %v3033
      %3035 = vmatmul.f32.gmra.mxu0 %v1141
      %v3036 = vpop.f32.mrf.mxu0
      %v3037 = vadd.f32 %v2936, %v3036
      %3038 = vmatmul.f32.gmra.mxu0 %v1144
      %v3039 = vpop.f32.mrf.mxu0
      %v3040 = vadd.f32 %v2939, %v3039
      %3041 = vmatmul.f32.gmra.mxu0 %v1147
      %v3042 = vpop.f32.mrf.mxu0
      %v3043 = vadd.f32 %v2942, %v3042
      %3044 = vmatmul.f32.gmra.mxu0 %v1150
      %v3045 = vpop.f32.mrf.mxu0
      %v3046 = vadd.f32 %v2945, %v3045
      %3047 = vmatmul.f32.gmra.mxu0 %v1153
      %v3048 = vpop.f32.mrf.mxu0
      %v3049 = vadd.f32 %v2948, %v3048
      %3050 = vmatmul.f32.gmra.mxu0 %v1156
      %v3051 = vpop.f32.mrf.mxu0
      %v3052 = vadd.f32 %v2951, %v3051
      %3053 = vmatmul.f32.gmra.mxu0 %v1159
      %v3054 = vpop.f32.mrf.mxu0
      %v3055 = vadd.f32 %v2954, %v3054
      %3056 = vmatmul.f32.gmra.mxu0 %v1162
      %v3057 = vpop.f32.mrf.mxu0
      %v3058 = vadd.f32 %v2957, %v3057
      %3059 = vmatmul.f32.gmra.mxu0 %v1165
      %v3060 = vpop.f32.mrf.mxu0
      %v3061 = vadd.f32 %v2960, %v3060
      %3062 = vmatmul.f32.gmra.mxu0 %v1168
      %v3063 = vpop.f32.mrf.mxu0
      %v3064 = vadd.f32 %v2963, %v3063
      %3065 = vmatmul.f32.gmra.mxu0 %v1171
      %v3066 = vpop.f32.mrf.mxu0
      %v3067 = vadd.f32 %v2966, %v3066
      %3068 = vmatmul.f32.gmra.mxu0 %v1174
      %v3069 = vpop.f32.mrf.mxu0
      %v3070 = vadd.f32 %v2969, %v3069
      %3071 = vmatmul.f32.gmra.mxu0 %v1177
      %v3072 = vpop.f32.mrf.mxu0
      %v3073 = vadd.f32 %v2972, %v3072
      %3074 = vmatmul.f32.gmra.mxu0 %v1180
      %v3075 = vpop.f32.mrf.mxu0
      %v3076 = vadd.f32 %v2975, %v3075
      %3077 = vdwg.mxu0
      %3078 = vmatpush.msra.mxu0 %v2306
      %3079 = vmatpush.msra.mxu0 %v2304
      %3080 = vmatpush.msra.mxu0 %v2302
      %3081 = vmatpush.msra.mxu0 %v2300
      %3082 = vmatpush.msra.mxu0 %v2298
      %3083 = vmatpush.msra.mxu0 %v2296
      %3084 = vmatpush.msra.mxu0 %v2294
      %3085 = vmatpush.msra.mxu0 %v2292
      %3086 = vmatpush.msra.mxu0 %v2290
      %3087 = vmatpush.msra.mxu0 %v2288
      %3088 = vmatpush.msra.mxu0 %v2286
      %3089 = vmatpush.msra.mxu0 %v2284
      %3090 = vmatpush.msra.mxu0 %v2282
      %3091 = vmatpush.msra.mxu0 %v2280
      %3092 = vmatpush.msra.mxu0 %v2278
      %3093 = vmatpush.msra.mxu0 %v2276
      %3094 = vmatmul.f32.gmra.mxu0 %v1442
      %v3095 = vpop.f32.mrf.mxu0
      %v3096 = vadd.f32 %v2995, %v3095
      %3097 = vmatmul.f32.gmra.mxu0 %v1445
      %v3098 = vpop.f32.mrf.mxu0
      %v3099 = vadd.f32 %v2998, %v3098
      %3100 = vmatmul.f32.gmra.mxu0 %v1448
      %v3101 = vpop.f32.mrf.mxu0
      %v3102 = vadd.f32 %v3001, %v3101
      %3103 = vmatmul.f32.gmra.mxu0 %v1451
      %v3104 = vpop.f32.mrf.mxu0
      %v3105 = vadd.f32 %v3004, %v3104
      %3106 = vmatmul.f32.gmra.mxu0 %v1454
      %v3107 = vpop.f32.mrf.mxu0
      %v3108 = vadd.f32 %v3007, %v3107
      %3109 = vmatmul.f32.gmra.mxu0 %v1457
      %v3110 = vpop.f32.mrf.mxu0
      %v3111 = vadd.f32 %v3010, %v3110
      %3112 = vmatmul.f32.gmra.mxu0 %v1460
      %v3113 = vpop.f32.mrf.mxu0
      %v3114 = vadd.f32 %v3013, %v3113
      %3115 = vmatmul.f32.gmra.mxu0 %v1463
      %v3116 = vpop.f32.mrf.mxu0
      %v3117 = vadd.f32 %v3016, %v3116
      %3118 = vmatmul.f32.gmra.mxu0 %v1466
      %v3119 = vpop.f32.mrf.mxu0
      %v3120 = vadd.f32 %v3019, %v3119
      %3121 = vmatmul.f32.gmra.mxu0 %v1469
      %v3122 = vpop.f32.mrf.mxu0
      %v3123 = vadd.f32 %v3022, %v3122
      %3124 = vmatmul.f32.gmra.mxu0 %v1472
      %v3125 = vpop.f32.mrf.mxu0
      %v3126 = vadd.f32 %v3025, %v3125
      %3127 = vmatmul.f32.gmra.mxu0 %v1475
      %v3128 = vpop.f32.mrf.mxu0
      %v3129 = vadd.f32 %v3028, %v3128
      %3130 = vmatmul.f32.gmra.mxu0 %v1478
      %v3131 = vpop.f32.mrf.mxu0
      %v3132 = vadd.f32 %v3031, %v3131
      %3133 = vmatmul.f32.gmra.mxu0 %v1481
      %v3134 = vpop.f32.mrf.mxu0
      %v3135 = vadd.f32 %v3034, %v3134
      %3136 = vmatmul.f32.gmra.mxu0 %v1484
      %v3137 = vpop.f32.mrf.mxu0
      %v3138 = vadd.f32 %v3037, %v3137
      %3139 = vmatmul.f32.gmra.mxu0 %v1487
      %v3140 = vpop.f32.mrf.mxu0
      %v3141 = vadd.f32 %v3040, %v3140
      %3142 = vmatmul.f32.gmra.mxu0 %v1490
      %v3143 = vpop.f32.mrf.mxu0
      %v3144 = vadd.f32 %v3043, %v3143
      %3145 = vmatmul.f32.gmra.mxu0 %v1493
      %v3146 = vpop.f32.mrf.mxu0
      %v3147 = vadd.f32 %v3046, %v3146
      %3148 = vmatmul.f32.gmra.mxu0 %v1496
      %v3149 = vpop.f32.mrf.mxu0
      %v3150 = vadd.f32 %v3049, %v3149
      %3151 = vmatmul.f32.gmra.mxu0 %v1499
      %v3152 = vpop.f32.mrf.mxu0
      %v3153 = vadd.f32 %v3052, %v3152
      %3154 = vmatmul.f32.gmra.mxu0 %v1502
      %v3155 = vpop.f32.mrf.mxu0
      %v3156 = vadd.f32 %v3055, %v3155
      %3157 = vmatmul.f32.gmra.mxu0 %v1505
      %v3158 = vpop.f32.mrf.mxu0
      %v3159 = vadd.f32 %v3058, %v3158
      %3160 = vmatmul.f32.gmra.mxu0 %v1508
      %v3161 = vpop.f32.mrf.mxu0
      %v3162 = vadd.f32 %v3061, %v3161
      %3163 = vmatmul.f32.gmra.mxu0 %v1511
      %v3164 = vpop.f32.mrf.mxu0
      %v3165 = vadd.f32 %v3064, %v3164
      %3166 = vmatmul.f32.gmra.mxu0 %v1514
      %v3167 = vpop.f32.mrf.mxu0
      %v3168 = vadd.f32 %v3067, %v3167
      %3169 = vmatmul.f32.gmra.mxu0 %v1517
      %v3170 = vpop.f32.mrf.mxu0
      %v3171 = vadd.f32 %v3070, %v3170
      %3172 = vmatmul.f32.gmra.mxu0 %v1520
      %v3173 = vpop.f32.mrf.mxu0
      %v3174 = vadd.f32 %v3073, %v3173
      %3175 = vmatmul.f32.gmra.mxu0 %v1523
      %v3176 = vpop.f32.mrf.mxu0
      %v3177 = vadd.f32 %v3076, %v3176
      %3178 = vdwg.mxu0
      %3179 = vmatpush.msra.mxu0 %v2338
      %3180 = vmatpush.msra.mxu0 %v2336
      %3181 = vmatpush.msra.mxu0 %v2334
      %3182 = vmatpush.msra.mxu0 %v2332
      %3183 = vmatpush.msra.mxu0 %v2330
      %3184 = vmatpush.msra.mxu0 %v2328
      %3185 = vmatpush.msra.mxu0 %v2326
      %3186 = vmatpush.msra.mxu0 %v2324
      %3187 = vmatpush.msra.mxu0 %v2322
      %3188 = vmatpush.msra.mxu0 %v2320
      %3189 = vmatpush.msra.mxu0 %v2318
      %3190 = vmatpush.msra.mxu0 %v2316
      %3191 = vmatpush.msra.mxu0 %v2314
      %3192 = vmatpush.msra.mxu0 %v2312
      %3193 = vmatpush.msra.mxu0 %v2310
      %3194 = vmatpush.msra.mxu0 %v2308
      %3195 = vmatmul.f32.gmra.mxu0 %v1785
      %v3196 = vpop.f32.mrf.mxu0
      %v3197 = vadd.f32 %v3096, %v3196
      %3198 = vmatmul.f32.gmra.mxu0 %v1788
      %v3199 = vpop.f32.mrf.mxu0
      %v3200 = vadd.f32 %v3099, %v3199
      %3201 = vmatmul.f32.gmra.mxu0 %v1791
      %v3202 = vpop.f32.mrf.mxu0
      %v3203 = vadd.f32 %v3102, %v3202
      %3204 = vmatmul.f32.gmra.mxu0 %v1794
      %v3205 = vpop.f32.mrf.mxu0
      %v3206 = vadd.f32 %v3105, %v3205
      %3207 = vmatmul.f32.gmra.mxu0 %v1797
      %v3208 = vpop.f32.mrf.mxu0
      %v3209 = vadd.f32 %v3108, %v3208
      %3210 = vmatmul.f32.gmra.mxu0 %v1800
      %v3211 = vpop.f32.mrf.mxu0
      %v3212 = vadd.f32 %v3111, %v3211
      %3213 = vmatmul.f32.gmra.mxu0 %v1803
      %v3214 = vpop.f32.mrf.mxu0
      %v3215 = vadd.f32 %v3114, %v3214
      %3216 = vmatmul.f32.gmra.mxu0 %v1806
      %v3217 = vpop.f32.mrf.mxu0
      %v3218 = vadd.f32 %v3117, %v3217
      %3219 = vmatmul.f32.gmra.mxu0 %v1809
      %v3220 = vpop.f32.mrf.mxu0
      %v3221 = vadd.f32 %v3120, %v3220
      %3222 = vmatmul.f32.gmra.mxu0 %v1812
      %v3223 = vpop.f32.mrf.mxu0
      %v3224 = vadd.f32 %v3123, %v3223
      %3225 = vmatmul.f32.gmra.mxu0 %v1815
      %v3226 = vpop.f32.mrf.mxu0
      %v3227 = vadd.f32 %v3126, %v3226
      %3228 = vmatmul.f32.gmra.mxu0 %v1818
      %v3229 = vpop.f32.mrf.mxu0
      %v3230 = vadd.f32 %v3129, %v3229
      %3231 = vmatmul.f32.gmra.mxu0 %v1821
      %v3232 = vpop.f32.mrf.mxu0
      %v3233 = vadd.f32 %v3132, %v3232
      %3234 = vmatmul.f32.gmra.mxu0 %v1824
      %v3235 = vpop.f32.mrf.mxu0
      %v3236 = vadd.f32 %v3135, %v3235
      %3237 = vmatmul.f32.gmra.mxu0 %v1827
      %v3238 = vpop.f32.mrf.mxu0
      %v3239 = vadd.f32 %v3138, %v3238
      %3240 = vmatmul.f32.gmra.mxu0 %v1830
      %v3241 = vpop.f32.mrf.mxu0
      %v3242 = vadd.f32 %v3141, %v3241
      %3243 = vmatmul.f32.gmra.mxu0 %v1833
      %v3244 = vpop.f32.mrf.mxu0
      %v3245 = vadd.f32 %v3144, %v3244
      %3246 = vmatmul.f32.gmra.mxu0 %v1836
      %v3247 = vpop.f32.mrf.mxu0
      %v3248 = vadd.f32 %v3147, %v3247
      %3249 = vmatmul.f32.gmra.mxu0 %v1839
      %v3250 = vpop.f32.mrf.mxu0
      %v3251 = vadd.f32 %v3150, %v3250
      %3252 = vmatmul.f32.gmra.mxu0 %v1842
      %v3253 = vpop.f32.mrf.mxu0
      %v3254 = vadd.f32 %v3153, %v3253
      %3255 = vmatmul.f32.gmra.mxu0 %v1845
      %v3256 = vpop.f32.mrf.mxu0
      %v3257 = vadd.f32 %v3156, %v3256
      %3258 = vmatmul.f32.gmra.mxu0 %v1848
      %v3259 = vpop.f32.mrf.mxu0
      %v3260 = vadd.f32 %v3159, %v3259
      %3261 = vmatmul.f32.gmra.mxu0 %v1851
      %v3262 = vpop.f32.mrf.mxu0
      %v3263 = vadd.f32 %v3162, %v3262
      %3264 = vmatmul.f32.gmra.mxu0 %v1854
      %v3265 = vpop.f32.mrf.mxu0
      %v3266 = vadd.f32 %v3165, %v3265
      %3267 = vmatmul.f32.gmra.mxu0 %v1857
      %v3268 = vpop.f32.mrf.mxu0
      %v3269 = vadd.f32 %v3168, %v3268
      %3270 = vmatmul.f32.gmra.mxu0 %v1860
      %v3271 = vpop.f32.mrf.mxu0
      %v3272 = vadd.f32 %v3171, %v3271
      %3273 = vmatmul.f32.gmra.mxu0 %v1863
      %v3274 = vpop.f32.mrf.mxu0
      %v3275 = vadd.f32 %v3174, %v3274
      %3276 = vmatmul.f32.gmra.mxu0 %v1866
      %v3277 = vpop.f32.mrf.mxu0
      %v3278 = vadd.f32 %v3177, %v3277
      %3279 = vdwg.mxu0
      %3280 = vmatpush.msra.mxu0 %v2370
      %3281 = vmatpush.msra.mxu0 %v2368
      %3282 = vmatpush.msra.mxu0 %v2366
      %3283 = vmatpush.msra.mxu0 %v2364
      %3284 = vmatpush.msra.mxu0 %v2362
      %3285 = vmatpush.msra.mxu0 %v2360
      %3286 = vmatpush.msra.mxu0 %v2358
      %3287 = vmatpush.msra.mxu0 %v2356
      %3288 = vmatpush.msra.mxu0 %v2354
      %3289 = vmatpush.msra.mxu0 %v2352
      %3290 = vmatpush.msra.mxu0 %v2350
      %3291 = vmatpush.msra.mxu0 %v2348
      %3292 = vmatpush.msra.mxu0 %v2346
      %3293 = vmatpush.msra.mxu0 %v2344
      %3294 = vmatpush.msra.mxu0 %v2342
      %3295 = vmatpush.msra.mxu0 %v2340
      %3296 = vmatmul.f32.gmra.mxu0 %v2128
      %v3297 = vpop.f32.mrf.mxu0
      %v3298 = vadd.f32 %v3197, %v3297
      %3299 = vmatmul.f32.gmra.mxu0 %v2131
      %v3300 = vpop.f32.mrf.mxu0
      %v3301 = vadd.f32 %v3200, %v3300
      %3302 = vmatmul.f32.gmra.mxu0 %v2134
      %v3303 = vpop.f32.mrf.mxu0
      %v3304 = vadd.f32 %v3203, %v3303
      %3305 = vmatmul.f32.gmra.mxu0 %v2137
      %v3306 = vpop.f32.mrf.mxu0
      %v3307 = vadd.f32 %v3206, %v3306
      %3308 = vmatmul.f32.gmra.mxu0 %v2140
      %v3309 = vpop.f32.mrf.mxu0
      %v3310 = vadd.f32 %v3209, %v3309
      %3311 = vmatmul.f32.gmra.mxu0 %v2143
      %v3312 = vpop.f32.mrf.mxu0
      %v3313 = vadd.f32 %v3212, %v3312
      %3314 = vmatmul.f32.gmra.mxu0 %v2146
      %v3315 = vpop.f32.mrf.mxu0
      %v3316 = vadd.f32 %v3215, %v3315
      %3317 = vmatmul.f32.gmra.mxu0 %v2149
      %v3318 = vpop.f32.mrf.mxu0
      %v3319 = vadd.f32 %v3218, %v3318
      %3320 = vmatmul.f32.gmra.mxu0 %v2152
      %v3321 = vpop.f32.mrf.mxu0
      %v3322 = vadd.f32 %v3221, %v3321
      %3323 = vmatmul.f32.gmra.mxu0 %v2155
      %v3324 = vpop.f32.mrf.mxu0
      %v3325 = vadd.f32 %v3224, %v3324
      %3326 = vmatmul.f32.gmra.mxu0 %v2158
      %v3327 = vpop.f32.mrf.mxu0
      %v3328 = vadd.f32 %v3227, %v3327
      %3329 = vmatmul.f32.gmra.mxu0 %v2161
      %v3330 = vpop.f32.mrf.mxu0
      %v3331 = vadd.f32 %v3230, %v3330
      %3332 = vmatmul.f32.gmra.mxu0 %v2164
      %v3333 = vpop.f32.mrf.mxu0
      %v3334 = vadd.f32 %v3233, %v3333
      %3335 = vmatmul.f32.gmra.mxu0 %v2167
      %v3336 = vpop.f32.mrf.mxu0
      %v3337 = vadd.f32 %v3236, %v3336
      %3338 = vmatmul.f32.gmra.mxu0 %v2170
      %v3339 = vpop.f32.mrf.mxu0
      %v3340 = vadd.f32 %v3239, %v3339
      %3341 = vmatmul.f32.gmra.mxu0 %v2173
      %v3342 = vpop.f32.mrf.mxu0
      %v3343 = vadd.f32 %v3242, %v3342
      %3344 = vmatmul.f32.gmra.mxu0 %v2176
      %v3345 = vpop.f32.mrf.mxu0
      %v3346 = vadd.f32 %v3245, %v3345
      %3347 = vmatmul.f32.gmra.mxu0 %v2179
      %v3348 = vpop.f32.mrf.mxu0
      %v3349 = vadd.f32 %v3248, %v3348
      %3350 = vmatmul.f32.gmra.mxu0 %v2182
      %v3351 = vpop.f32.mrf.mxu0
      %v3352 = vadd.f32 %v3251, %v3351
      %3353 = vmatmul.f32.gmra.mxu0 %v2185
      %v3354 = vpop.f32.mrf.mxu0
      %v3355 = vadd.f32 %v3254, %v3354
      %3356 = vmatmul.f32.gmra.mxu0 %v2188
      %v3357 = vpop.f32.mrf.mxu0
      %v3358 = vadd.f32 %v3257, %v3357
      %3359 = vmatmul.f32.gmra.mxu0 %v2191
      %v3360 = vpop.f32.mrf.mxu0
      %v3361 = vadd.f32 %v3260, %v3360
      %3362 = vmatmul.f32.gmra.mxu0 %v2194
      %v3363 = vpop.f32.mrf.mxu0
      %v3364 = vadd.f32 %v3263, %v3363
      %3365 = vmatmul.f32.gmra.mxu0 %v2197
      %v3366 = vpop.f32.mrf.mxu0
      %v3367 = vadd.f32 %v3266, %v3366
      %3368 = vmatmul.f32.gmra.mxu0 %v2200
      %v3369 = vpop.f32.mrf.mxu0
      %v3370 = vadd.f32 %v3269, %v3369
      %3371 = vmatmul.f32.gmra.mxu0 %v2203
      %v3372 = vpop.f32.mrf.mxu0
      %v3373 = vadd.f32 %v3272, %v3372
      %3374 = vmatmul.f32.gmra.mxu0 %v2206
      %v3375 = vpop.f32.mrf.mxu0
      %v3376 = vadd.f32 %v3275, %v3375
      %3377 = vmatmul.f32.gmra.mxu0 %v2209
      %v3378 = vpop.f32.mrf.mxu0
      %v3379 = vadd.f32 %v3278, %v3378
      %3380 = vdwg.mxu0
      %v3381 = vmax.f32 %v2793, %v2835
      %v3382 = vmax.f32 %v3298, %v3340
      %v3383 = vmax.f32 %v2796, %v2838
      %v3384 = vmax.f32 %v3301, %v3343
      %v3385 = vmax.f32 %v2799, %v2841
      %v3386 = vmax.f32 %v3304, %v3346
      %v3387 = vmax.f32 %v2802, %v2844
      %v3388 = vmax.f32 %v3307, %v3349
      %v3389 = vmax.f32 %v2805, %v2847
      %v3390 = vmax.f32 %v3310, %v3352
      %v3391 = vmax.f32 %v2808, %v2850
      %v3392 = vmax.f32 %v3313, %v3355
      %v3393 = vmax.f32 %v2811, %v2853
      %v3394 = vmax.f32 %v3316, %v3358
      %v3395 = vmax.f32 %v2814, %v2856
      %v3396 = vmax.f32 %v3319, %v3361
      %v3397 = vmax.f32 %v2817, %v2859
      %v3398 = vmax.f32 %v3322, %v3364
      %v3399 = vmax.f32 %v2820, %v2862
      %v3400 = vmax.f32 %v3325, %v3367
      %v3401 = vmax.f32 %v2823, %v2865
      %v3402 = vmax.f32 %v3328, %v3370
      %v3403 = vmax.f32 %v2826, %v2868
      %v3404 = vmax.f32 %v3331, %v3373
      %v3405 = vmax.f32 %v2829, %v2871
      %v3406 = vmax.f32 %v3334, %v3376
      %v3407 = vmax.f32 %v2832, %v2874
      %v3408 = vmax.f32 %v3337, %v3379
      %v3409 = vmax.f32 %v3381, %v3382
      %v3410 = vmax.f32 %v3383, %v3384
      %v3411 = vmax.f32 %v3385, %v3386
      %v3412 = vmax.f32 %v3387, %v3388
      %v3413 = vmax.f32 %v3389, %v3390
      %v3414 = vmax.f32 %v3391, %v3392
      %v3415 = vmax.f32 %v3393, %v3394
      %v3416 = vmax.f32 %v3395, %v3396
      %v3417 = vmax.f32 %v3397, %v3398
      %v3418 = vmax.f32 %v3399, %v3400
      %v3419 = vmax.f32 %v3401, %v3402
      %v3420 = vmax.f32 %v3403, %v3404
      %v3421 = vmax.f32 %v3405, %v3406
      %v3422 = vmax.f32 %v3407, %v3408
      %v3423 = vld [vmem:[%s3] sm:$0x1]
      %v3425 = vperm.slane %v3423, 0
      %v3427 = vadd.f32 %v3409, %v3425
      %v3428 = vadd.f32 %v3410, %v3425
      %v3429 = vadd.f32 %v3411, %v3425
      %v3430 = vadd.f32 %v3412, %v3425
      %v3431 = vadd.f32 %v3413, %v3425
      %v3432 = vadd.f32 %v3414, %v3425
      %v3433 = vadd.f32 %v3415, %v3425
      %v3434 = vadd.f32 %v3416, %v3425
      %v3435 = vadd.f32 %v3417, %v3425
      %v3436 = vadd.f32 %v3418, %v3425
      %v3437 = vadd.f32 %v3419, %v3425
      %v3438 = vadd.f32 %v3420, %v3425
      %v3439 = vadd.f32 %v3421, %v3425
      %v3440 = vadd.f32 %v3422, %v3425
      %v3441 = vmax.f32 %v3427, 0.0
      %v3442 = vmax.f32 %v3428, 0.0
      %v3443 = vmax.f32 %v3429, 0.0
      %v3444 = vmax.f32 %v3430, 0.0
      %v3445 = vmax.f32 %v3431, 0.0
      %v3446 = vmax.f32 %v3432, 0.0
      %v3447 = vmax.f32 %v3433, 0.0
      %v3448 = vmax.f32 %v3434, 0.0
      %v3449 = vmax.f32 %v3435, 0.0
      %v3450 = vmax.f32 %v3436, 0.0
      %v3451 = vmax.f32 %v3437, 0.0
      %v3452 = vmax.f32 %v3438, 0.0
      %v3453 = vmax.f32 %v3439, 0.0
      %v3454 = vmax.f32 %v3440, 0.0
      %v3455 = vld [vmem:[%s4] sm:$0xff]
      %v3456 = vld [vmem:[%s4 + $0x8] sm:$0xff]
      %v3457 = vld [vmem:[%s4 + $0x10] sm:$0xff]
      %v3458 = vld [vmem:[%s4 + $0x18] sm:$0xff]
      %v3459 = vld [vmem:[%s4 + $0x20] sm:$0xff]
      %v3460 = vld [vmem:[%s4 + $0x28] sm:$0xff]
      %v3461 = vld [vmem:[%s4 + $0x30] sm:$0xff]
      %v3462 = vld [vmem:[%s4 + $0x38] sm:$0xff]
      %v3463 = vld [vmem:[%s4 + $0x40] sm:$0xff]
      %v3464 = vld [vmem:[%s4 + $0x48] sm:$0xff]
      %vm3465 = vcmask 916480
      %v3467 = vsel %vm3465, %v3455, 0
      %v3470 = vsel %vm3465, %v3456, 0
      %v3473 = vsel %vm3465, %v3457, 0
      %v3476 = vsel %vm3465, %v3458, 0
      %v3479 = vsel %vm3465, %v3459, 0
      %v3482 = vsel %vm3465, %v3460, 0
      %v3485 = vsel %vm3465, %v3461, 0
      %v3488 = vsel %vm3465, %v3462, 0
      %v3491 = vsel %vm3465, %v3463, 0
      %v3494 = vsel %vm3465, %v3464, 0
      %3496 = vmatpush.msra.mxu0 0.0
      %3497 = vmatpush.msra.mxu0 0.0
      %3498 = vmatpush.msra.mxu0 %v3454
      %3499 = vmatpush.msra.mxu0 %v3453
      %3500 = vmatpush.msra.mxu0 %v3452
      %3501 = vmatpush.msra.mxu0 %v3451
      %3502 = vmatpush.msra.mxu0 %v3450
      %3503 = vmatpush.msra.mxu0 %v3449
      %3504 = vmatpush.msra.mxu0 %v3448
      %3505 = vmatpush.msra.mxu0 %v3447
      %3506 = vmatpush.msra.mxu0 %v3446
      %3507 = vmatpush.msra.mxu0 %v3445
      %3508 = vmatpush.msra.mxu0 %v3444
      %3509 = vmatpush.msra.mxu0 %v3443
      %3510 = vmatpush.msra.mxu0 %v3442
      %3511 = vmatpush.msra.mxu0 %v3441
      %3512 = vmatmul.f32.gmra.mxu0 %v3467
      %v3513 = vpop.f32.mrf.mxu0
      %v3514 = vadd.f32 0.0, %v3513
      %3515 = vmatmul.f32.gmra.mxu0 %v3470
      %v3516 = vpop.f32.mrf.mxu0
      %v3517 = vadd.f32 0.0, %v3516
      %3518 = vmatmul.f32.gmra.mxu0 %v3473
      %v3519 = vpop.f32.mrf.mxu0
      %v3520 = vadd.f32 0.0, %v3519
      %3521 = vmatmul.f32.gmra.mxu0 %v3476
      %v3522 = vpop.f32.mrf.mxu0
      %v3523 = vadd.f32 0.0, %v3522
      %3524 = vmatmul.f32.gmra.mxu0 %v3479
      %v3525 = vpop.f32.mrf.mxu0
      %v3526 = vadd.f32 0.0, %v3525
      %3527 = vmatmul.f32.gmra.mxu0 %v3482
      %v3528 = vpop.f32.mrf.mxu0
      %v3529 = vadd.f32 0.0, %v3528
      %3530 = vmatmul.f32.gmra.mxu0 %v3485
      %v3531 = vpop.f32.mrf.mxu0
      %v3532 = vadd.f32 0.0, %v3531
      %3533 = vmatmul.f32.gmra.mxu0 %v3488
      %v3534 = vpop.f32.mrf.mxu0
      %v3535 = vadd.f32 0.0, %v3534
      %3536 = vmatmul.f32.gmra.mxu0 %v3491
      %v3537 = vpop.f32.mrf.mxu0
      %v3538 = vadd.f32 0.0, %v3537
      %3539 = vmatmul.f32.gmra.mxu0 %v3494
      %v3540 = vpop.f32.mrf.mxu0
      %v3541 = vadd.f32 0.0, %v3540
      %3542 = vdwg.mxu0
      %s3543 = scalar_lea.vmem %s4, 80
      %v3544 = vld [vmem:[%s3543] sm:$0xff]
      %v3545 = vld [vmem:[%s3543 + $0x8] sm:$0xff]
      %v3546 = vld [vmem:[%s3543 + $0x10] sm:$0xff]
      %v3547 = vld [vmem:[%s3543 + $0x18] sm:$0xff]
      %v3548 = vld [vmem:[%s3543 + $0x20] sm:$0xff]
      %v3549 = vld [vmem:[%s3543 + $0x28] sm:$0xff]
      %v3550 = vld [vmem:[%s3543 + $0x30] sm:$0xff]
      %v3551 = vld [vmem:[%s3543 + $0x38] sm:$0xff]
      %v3552 = vld [vmem:[%s3543 + $0x40] sm:$0xff]
      %v3553 = vld [vmem:[%s3543 + $0x48] sm:$0xff]
      %v3555 = vsel %vm3465, %v3544, 0
      %v3558 = vsel %vm3465, %v3545, 0
      %v3561 = vsel %vm3465, %v3546, 0
      %v3564 = vsel %vm3465, %v3547, 0
      %v3567 = vsel %vm3465, %v3548, 0
      %v3570 = vsel %vm3465, %v3549, 0
      %v3573 = vsel %vm3465, %v3550, 0
      %v3576 = vsel %vm3465, %v3551, 0
      %v3579 = vsel %vm3465, %v3552, 0
      %v3582 = vsel %vm3465, %v3553, 0
      %3584 = vmatpush.msra.mxu0 0.0
      %3585 = vmatpush.msra.mxu0 0.0
      %3586 = vmatpush.msra.mxu0 %v3454
      %3587 = vmatpush.msra.mxu0 %v3453
      %3588 = vmatpush.msra.mxu0 %v3452
      %3589 = vmatpush.msra.mxu0 %v3451
      %3590 = vmatpush.msra.mxu0 %v3450
      %3591 = vmatpush.msra.mxu0 %v3449
      %3592 = vmatpush.msra.mxu0 %v3448
      %3593 = vmatpush.msra.mxu0 %v3447
      %3594 = vmatpush.msra.mxu0 %v3446
      %3595 = vmatpush.msra.mxu0 %v3445
      %3596 = vmatpush.msra.mxu0 %v3444
      %3597 = vmatpush.msra.mxu0 %v3443
      %3598 = vmatpush.msra.mxu0 %v3442
      %3599 = vmatpush.msra.mxu0 %v3441
      %3600 = vmatmul.f32.gmra.mxu0 %v3555
      %v3601 = vpop.f32.mrf.mxu0
      %v3602 = vadd.f32 0.0, %v3601
      %3603 = vmatmul.f32.gmra.mxu0 %v3558
      %v3604 = vpop.f32.mrf.mxu0
      %v3605 = vadd.f32 0.0, %v3604
      %3606 = vmatmul.f32.gmra.mxu0 %v3561
      %v3607 = vpop.f32.mrf.mxu0
      %v3608 = vadd.f32 0.0, %v3607
      %3609 = vmatmul.f32.gmra.mxu0 %v3564
      %v3610 = vpop.f32.mrf.mxu0
      %v3611 = vadd.f32 0.0, %v3610
      %3612 = vmatmul.f32.gmra.mxu0 %v3567
      %v3613 = vpop.f32.mrf.mxu0
      %v3614 = vadd.f32 0.0, %v3613
      %3615 = vmatmul.f32.gmra.mxu0 %v3570
      %v3616 = vpop.f32.mrf.mxu0
      %v3617 = vadd.f32 0.0, %v3616
      %3618 = vmatmul.f32.gmra.mxu0 %v3573
      %v3619 = vpop.f32.mrf.mxu0
      %v3620 = vadd.f32 0.0, %v3619
      %3621 = vmatmul.f32.gmra.mxu0 %v3576
      %v3622 = vpop.f32.mrf.mxu0
      %v3623 = vadd.f32 0.0, %v3622
      %3624 = vmatmul.f32.gmra.mxu0 %v3579
      %v3625 = vpop.f32.mrf.mxu0
      %v3626 = vadd.f32 0.0, %v3625
      %3627 = vmatmul.f32.gmra.mxu0 %v3582
      %v3628 = vpop.f32.mrf.mxu0
      %v3629 = vadd.f32 0.0, %v3628
      %3630 = vdwg.mxu0
      %s3631 = scalar_lea.vmem %s4, 160
      %v3632 = vld [vmem:[%s3631] sm:$0xff]
      %v3633 = vld [vmem:[%s3631 + $0x8] sm:$0xff]
      %v3634 = vld [vmem:[%s3631 + $0x10] sm:$0xff]
      %v3635 = vld [vmem:[%s3631 + $0x18] sm:$0xff]
      %v3636 = vld [vmem:[%s3631 + $0x20] sm:$0xff]
      %v3637 = vld [vmem:[%s3631 + $0x28] sm:$0xff]
      %v3638 = vld [vmem:[%s3631 + $0x30] sm:$0xff]
      %v3639 = vld [vmem:[%s3631 + $0x38] sm:$0xff]
      %v3640 = vld [vmem:[%s3631 + $0x40] sm:$0xff]
      %v3641 = vld [vmem:[%s3631 + $0x48] sm:$0xff]
      %v3643 = vsel %vm3465, %v3632, 0
      %v3646 = vsel %vm3465, %v3633, 0
      %v3649 = vsel %vm3465, %v3634, 0
      %v3652 = vsel %vm3465, %v3635, 0
      %v3655 = vsel %vm3465, %v3636, 0
      %v3658 = vsel %vm3465, %v3637, 0
      %v3661 = vsel %vm3465, %v3638, 0
      %v3664 = vsel %vm3465, %v3639, 0
      %v3667 = vsel %vm3465, %v3640, 0
      %v3670 = vsel %vm3465, %v3641, 0
      %3672 = vmatpush.msra.mxu0 0.0
      %3673 = vmatpush.msra.mxu0 0.0
      %3674 = vmatpush.msra.mxu0 %v3454
      %3675 = vmatpush.msra.mxu0 %v3453
      %3676 = vmatpush.msra.mxu0 %v3452
      %3677 = vmatpush.msra.mxu0 %v3451
      %3678 = vmatpush.msra.mxu0 %v3450
      %3679 = vmatpush.msra.mxu0 %v3449
      %3680 = vmatpush.msra.mxu0 %v3448
      %3681 = vmatpush.msra.mxu0 %v3447
      %3682 = vmatpush.msra.mxu0 %v3446
      %3683 = vmatpush.msra.mxu0 %v3445
      %3684 = vmatpush.msra.mxu0 %v3444
      %3685 = vmatpush.msra.mxu0 %v3443
      %3686 = vmatpush.msra.mxu0 %v3442
      %3687 = vmatpush.msra.mxu0 %v3441
      %3688 = vmatmul.f32.gmra.mxu0 %v3643
      %v3689 = vpop.f32.mrf.mxu0
      %v3690 = vadd.f32 0.0, %v3689
      %3691 = vmatmul.f32.gmra.mxu0 %v3646
      %v3692 = vpop.f32.mrf.mxu0
      %v3693 = vadd.f32 0.0, %v3692
      %3694 = vmatmul.f32.gmra.mxu0 %v3649
      %v3695 = vpop.f32.mrf.mxu0
      %v3696 = vadd.f32 0.0, %v3695
      %3697 = vmatmul.f32.gmra.mxu0 %v3652
      %v3698 = vpop.f32.mrf.mxu0
      %v3699 = vadd.f32 0.0, %v3698
      %3700 = vmatmul.f32.gmra.mxu0 %v3655
      %v3701 = vpop.f32.mrf.mxu0
      %v3702 = vadd.f32 0.0, %v3701
      %3703 = vmatmul.f32.gmra.mxu0 %v3658
      %v3704 = vpop.f32.mrf.mxu0
      %v3705 = vadd.f32 0.0, %v3704
      %3706 = vmatmul.f32.gmra.mxu0 %v3661
      %v3707 = vpop.f32.mrf.mxu0
      %v3708 = vadd.f32 0.0, %v3707
      %3709 = vmatmul.f32.gmra.mxu0 %v3664
      %v3710 = vpop.f32.mrf.mxu0
      %v3711 = vadd.f32 0.0, %v3710
      %3712 = vmatmul.f32.gmra.mxu0 %v3667
      %v3713 = vpop.f32.mrf.mxu0
      %v3714 = vadd.f32 0.0, %v3713
      %3715 = vmatmul.f32.gmra.mxu0 %v3670
      %v3716 = vpop.f32.mrf.mxu0
      %v3717 = vadd.f32 0.0, %v3716
      %3718 = vdwg.mxu0
      %s3719 = scalar_lea.vmem %s4, 240
      %v3720 = vld [vmem:[%s3719] sm:$0xff]
      %v3721 = vld [vmem:[%s3719 + $0x8] sm:$0xff]
      %v3722 = vld [vmem:[%s3719 + $0x10] sm:$0xff]
      %v3723 = vld [vmem:[%s3719 + $0x18] sm:$0xff]
      %v3724 = vld [vmem:[%s3719 + $0x20] sm:$0xff]
      %v3725 = vld [vmem:[%s3719 + $0x28] sm:$0xff]
      %v3726 = vld [vmem:[%s3719 + $0x30] sm:$0xff]
      %v3727 = vld [vmem:[%s3719 + $0x38] sm:$0xff]
      %v3728 = vld [vmem:[%s3719 + $0x40] sm:$0xff]
      %v3729 = vld [vmem:[%s3719 + $0x48] sm:$0xff]
      %v3731 = vsel %vm3465, %v3720, 0
      %v3734 = vsel %vm3465, %v3721, 0
      %v3737 = vsel %vm3465, %v3722, 0
      %v3740 = vsel %vm3465, %v3723, 0
      %v3743 = vsel %vm3465, %v3724, 0
      %v3746 = vsel %vm3465, %v3725, 0
      %v3749 = vsel %vm3465, %v3726, 0
      %v3752 = vsel %vm3465, %v3727, 0
      %v3755 = vsel %vm3465, %v3728, 0
      %v3758 = vsel %vm3465, %v3729, 0
      %3760 = vmatpush.msra.mxu0 0.0
      %3761 = vmatpush.msra.mxu0 0.0
      %3762 = vmatpush.msra.mxu0 %v3454
      %3763 = vmatpush.msra.mxu0 %v3453
      %3764 = vmatpush.msra.mxu0 %v3452
      %3765 = vmatpush.msra.mxu0 %v3451
      %3766 = vmatpush.msra.mxu0 %v3450
      %3767 = vmatpush.msra.mxu0 %v3449
      %3768 = vmatpush.msra.mxu0 %v3448
      %3769 = vmatpush.msra.mxu0 %v3447
      %3770 = vmatpush.msra.mxu0 %v3446
      %3771 = vmatpush.msra.mxu0 %v3445
      %3772 = vmatpush.msra.mxu0 %v3444
      %3773 = vmatpush.msra.mxu0 %v3443
      %3774 = vmatpush.msra.mxu0 %v3442
      %3775 = vmatpush.msra.mxu0 %v3441
      %3776 = vmatmul.f32.gmra.mxu0 %v3731
      %v3777 = vpop.f32.mrf.mxu0
      %v3778 = vadd.f32 0.0, %v3777
      %3779 = vmatmul.f32.gmra.mxu0 %v3734
      %v3780 = vpop.f32.mrf.mxu0
      %v3781 = vadd.f32 0.0, %v3780
      %3782 = vmatmul.f32.gmra.mxu0 %v3737
      %v3783 = vpop.f32.mrf.mxu0
      %v3784 = vadd.f32 0.0, %v3783
      %3785 = vmatmul.f32.gmra.mxu0 %v3740
      %v3786 = vpop.f32.mrf.mxu0
      %v3787 = vadd.f32 0.0, %v3786
      %3788 = vmatmul.f32.gmra.mxu0 %v3743
      %v3789 = vpop.f32.mrf.mxu0
      %v3790 = vadd.f32 0.0, %v3789
      %3791 = vmatmul.f32.gmra.mxu0 %v3746
      %v3792 = vpop.f32.mrf.mxu0
      %v3793 = vadd.f32 0.0, %v3792
      %3794 = vmatmul.f32.gmra.mxu0 %v3749
      %v3795 = vpop.f32.mrf.mxu0
      %v3796 = vadd.f32 0.0, %v3795
      %3797 = vmatmul.f32.gmra.mxu0 %v3752
      %v3798 = vpop.f32.mrf.mxu0
      %v3799 = vadd.f32 0.0, %v3798
      %3800 = vmatmul.f32.gmra.mxu0 %v3755
      %v3801 = vpop.f32.mrf.mxu0
      %v3802 = vadd.f32 0.0, %v3801
      %3803 = vmatmul.f32.gmra.mxu0 %v3758
      %v3804 = vpop.f32.mrf.mxu0
      %v3805 = vadd.f32 0.0, %v3804
      %3806 = vdwg.mxu0
      %s3807 = scalar_lea.vmem %s4, 320
      %v3808 = vld [vmem:[%s3807] sm:$0xff]
      %v3809 = vld [vmem:[%s3807 + $0x8] sm:$0xff]
      %v3810 = vld [vmem:[%s3807 + $0x10] sm:$0xff]
      %v3811 = vld [vmem:[%s3807 + $0x18] sm:$0xff]
      %v3812 = vld [vmem:[%s3807 + $0x20] sm:$0xff]
      %v3813 = vld [vmem:[%s3807 + $0x28] sm:$0xff]
      %v3814 = vld [vmem:[%s3807 + $0x30] sm:$0xff]
      %v3815 = vld [vmem:[%s3807 + $0x38] sm:$0xff]
      %v3816 = vld [vmem:[%s3807 + $0x40] sm:$0xff]
      %v3817 = vld [vmem:[%s3807 + $0x48] sm:$0xff]
      %v3819 = vsel %vm3465, %v3808, 0
      %v3822 = vsel %vm3465, %v3809, 0
      %v3825 = vsel %vm3465, %v3810, 0
      %v3828 = vsel %vm3465, %v3811, 0
      %v3831 = vsel %vm3465, %v3812, 0
      %v3834 = vsel %vm3465, %v3813, 0
      %v3837 = vsel %vm3465, %v3814, 0
      %v3840 = vsel %vm3465, %v3815, 0
      %v3843 = vsel %vm3465, %v3816, 0
      %v3846 = vsel %vm3465, %v3817, 0
      %3848 = vmatpush.msra.mxu0 0.0
      %3849 = vmatpush.msra.mxu0 0.0
      %3850 = vmatpush.msra.mxu0 %v3454
      %3851 = vmatpush.msra.mxu0 %v3453
      %3852 = vmatpush.msra.mxu0 %v3452
      %3853 = vmatpush.msra.mxu0 %v3451
      %3854 = vmatpush.msra.mxu0 %v3450
      %3855 = vmatpush.msra.mxu0 %v3449
      %3856 = vmatpush.msra.mxu0 %v3448
      %3857 = vmatpush.msra.mxu0 %v3447
      %3858 = vmatpush.msra.mxu0 %v3446
      %3859 = vmatpush.msra.mxu0 %v3445
      %3860 = vmatpush.msra.mxu0 %v3444
      %3861 = vmatpush.msra.mxu0 %v3443
      %3862 = vmatpush.msra.mxu0 %v3442
      %3863 = vmatpush.msra.mxu0 %v3441
      %3864 = vmatmul.f32.gmra.mxu0 %v3819
      %v3865 = vpop.f32.mrf.mxu0
      %v3866 = vadd.f32 0.0, %v3865
      %3867 = vmatmul.f32.gmra.mxu0 %v3822
      %v3868 = vpop.f32.mrf.mxu0
      %v3869 = vadd.f32 0.0, %v3868
      %3870 = vmatmul.f32.gmra.mxu0 %v3825
      %v3871 = vpop.f32.mrf.mxu0
      %v3872 = vadd.f32 0.0, %v3871
      %3873 = vmatmul.f32.gmra.mxu0 %v3828
      %v3874 = vpop.f32.mrf.mxu0
      %v3875 = vadd.f32 0.0, %v3874
      %3876 = vmatmul.f32.gmra.mxu0 %v3831
      %v3877 = vpop.f32.mrf.mxu0
      %v3878 = vadd.f32 0.0, %v3877
      %3879 = vmatmul.f32.gmra.mxu0 %v3834
      %v3880 = vpop.f32.mrf.mxu0
      %v3881 = vadd.f32 0.0, %v3880
      %3882 = vmatmul.f32.gmra.mxu0 %v3837
      %v3883 = vpop.f32.mrf.mxu0
      %v3884 = vadd.f32 0.0, %v3883
      %3885 = vmatmul.f32.gmra.mxu0 %v3840
      %v3886 = vpop.f32.mrf.mxu0
      %v3887 = vadd.f32 0.0, %v3886
      %3888 = vmatmul.f32.gmra.mxu0 %v3843
      %v3889 = vpop.f32.mrf.mxu0
      %v3890 = vadd.f32 0.0, %v3889
      %3891 = vmatmul.f32.gmra.mxu0 %v3846
      %v3892 = vpop.f32.mrf.mxu0
      %v3893 = vadd.f32 0.0, %v3892
      %3894 = vdwg.mxu0
      %v3895 = vld [vmem:[%s5] sm:$0xff]
      %v3896 = vld [vmem:[%s5 + $0x8] sm:$0xff]
      %v3897 = vld [vmem:[%s5 + $0x10] sm:$0xff]
      %v3898 = vld [vmem:[%s5 + $0x18] sm:$0xff]
      %v3899 = vld [vmem:[%s5 + $0x20] sm:$0xff]
      %v3900 = vld [vmem:[%s5 + $0x28] sm:$0xff]
      %v3901 = vld [vmem:[%s5 + $0x30] sm:$0xff]
      %v3902 = vld [vmem:[%s5 + $0x38] sm:$0xff]
      %v3903 = vld [vmem:[%s5 + $0x40] sm:$0xff]
      %v3904 = vld [vmem:[%s5 + $0x48] sm:$0xff]
      %v3905 = vld [vmem:[%s5 + $0x50] sm:$0xff]
      %v3906 = vld [vmem:[%s5 + $0x58] sm:$0xff]
      %v3907 = vld [vmem:[%s5 + $0x60] sm:$0xff]
      %v3908 = vld [vmem:[%s5 + $0x68] sm:$0xff]
      %v3909 = vld [vmem:[%s5 + $0x70] sm:$0xff]
      %v3910 = vld [vmem:[%s5 + $0x78] sm:$0xff]
      %v3911 = vld [vmem:[%s5 + $0x80] sm:$0xff]
      %v3912 = vld [vmem:[%s5 + $0x88] sm:$0xff]
      %v3913 = vld [vmem:[%s5 + $0x90] sm:$0xff]
      %v3914 = vld [vmem:[%s5 + $0x98] sm:$0xff]
      %v3915 = vld [vmem:[%s5 + $0xa0] sm:$0xff]
      %v3916 = vld [vmem:[%s5 + $0xa8] sm:$0xff]
      %v3917 = vld [vmem:[%s5 + $0xb0] sm:$0xff]
      %v3918 = vld [vmem:[%s5 + $0xb8] sm:$0xff]
      %v3919 = vld [vmem:[%s5 + $0xc0] sm:$0xff]
      %v3920 = vld [vmem:[%s5 + $0xc8] sm:$0xff]
      %v3921 = vld [vmem:[%s5 + $0xd0] sm:$0xff]
      %v3922 = vld [vmem:[%s5 + $0xd8] sm:$0xff]
      %v3923 = vld [vmem:[%s5 + $0xe0] sm:$0xff]
      %v3924 = vld [vmem:[%s5 + $0xe8] sm:$0xff]
      %v3925 = vld [vmem:[%s5 + $0xf0] sm:$0xff]
      %v3926 = vld [vmem:[%s5 + $0xf8] sm:$0xff]
      %v3927 = vld [vmem:[%s5 + $0x100] sm:$0xff]
      %v3928 = vld [vmem:[%s5 + $0x108] sm:$0xff]
      %v3929 = vld [vmem:[%s5 + $0x110] sm:$0xff]
      %v3930 = vld [vmem:[%s5 + $0x118] sm:$0xff]
      %v3931 = vld [vmem:[%s5 + $0x120] sm:$0xff]
      %v3932 = vld [vmem:[%s5 + $0x128] sm:$0xff]
      %v3933 = vld [vmem:[%s5 + $0x130] sm:$0xff]
      %v3934 = vld [vmem:[%s5 + $0x138] sm:$0xff]
      %v3935 = vld [vmem:[%s5 + $0x140] sm:$0xff]
      %v3936 = vld [vmem:[%s5 + $0x148] sm:$0xff]
      %v3937 = vld [vmem:[%s5 + $0x150] sm:$0xff]
      %v3938 = vld [vmem:[%s5 + $0x158] sm:$0xff]
      %v3939 = vld [vmem:[%s5 + $0x160] sm:$0xff]
      %v3940 = vld [vmem:[%s5 + $0x168] sm:$0xff]
      %v3941 = vld [vmem:[%s5 + $0x170] sm:$0xff]
      %v3942 = vld [vmem:[%s5 + $0x178] sm:$0xff]
      %v3943 = vld [vmem:[%s5 + $0x180] sm:$0xff]
      %v3944 = vld [vmem:[%s5 + $0x188] sm:$0xff]
      %v3945 = vld [vmem:[%s5 + $0x190] sm:$0xff]
      %v3946 = vld [vmem:[%s5 + $0x198] sm:$0xff]
      %v3947 = vld [vmem:[%s5 + $0x1a0] sm:$0xff]
      %v3948 = vld [vmem:[%s5 + $0x1a8] sm:$0xff]
      %v3949 = vld [vmem:[%s5 + $0x1b0] sm:$0xff]
      %v3950 = vld [vmem:[%s5 + $0x1b8] sm:$0xff]
      %v3951 = vld [vmem:[%s5 + $0x1c0] sm:$0xff]
      %v3952 = vld [vmem:[%s5 + $0x1c8] sm:$0xff]
      %v3953 = vld [vmem:[%s5 + $0x1d0] sm:$0xff]
      %v3954 = vld [vmem:[%s5 + $0x1d8] sm:$0xff]
      %v3955 = vld [vmem:[%s5 + $0x1e0] sm:$0xff]
      %v3956 = vld [vmem:[%s5 + $0x1e8] sm:$0xff]
      %v3957 = vld [vmem:[%s5 + $0x1f0] sm:$0xff]
      %v3958 = vld [vmem:[%s5 + $0x1f8] sm:$0xff]
      %v3959 = vld [vmem:[%s5 + $0x200] sm:$0xff]
      %v3960 = vld [vmem:[%s5 + $0x208] sm:$0xff]
      %v3961 = vld [vmem:[%s5 + $0x210] sm:$0xff]
      %v3962 = vld [vmem:[%s5 + $0x218] sm:$0xff]
      %v3963 = vld [vmem:[%s5 + $0x220] sm:$0xff]
      %v3964 = vld [vmem:[%s5 + $0x228] sm:$0xff]
      %v3965 = vld [vmem:[%s5 + $0x230] sm:$0xff]
      %v3966 = vld [vmem:[%s5 + $0x238] sm:$0xff]
      %v3967 = vld [vmem:[%s5 + $0x240] sm:$0xff]
      %v3968 = vld [vmem:[%s5 + $0x248] sm:$0xff]
      %v3969 = vld [vmem:[%s5 + $0x250] sm:$0xff]
      %v3970 = vld [vmem:[%s5 + $0x258] sm:$0xff]
      %v3971 = vld [vmem:[%s5 + $0x260] sm:$0xff]
      %v3972 = vld [vmem:[%s5 + $0x268] sm:$0xff]
      %v3973 = vld [vmem:[%s5 + $0x270] sm:$0xff]
      %v3974 = vld [vmem:[%s5 + $0x278] sm:$0xff]
      %v3975 = vld [vmem:[%s5 + $0x280] sm:$0xff]
      %v3976 = vld [vmem:[%s5 + $0x288] sm:$0xff]
      %v3977 = vld [vmem:[%s5 + $0x290] sm:$0xff]
      %v3978 = vld [vmem:[%s5 + $0x298] sm:$0xff]
      %v3979 = vld [vmem:[%s5 + $0x2a0] sm:$0xff]
      %v3980 = vld [vmem:[%s5 + $0x2a8] sm:$0xff]
      %v3981 = vld [vmem:[%s5 + $0x2b0] sm:$0xff]
      %v3982 = vld [vmem:[%s5 + $0x2b8] sm:$0xff]
      %v3983 = vld [vmem:[%s5 + $0x2c0] sm:$0xff]
      %v3984 = vld [vmem:[%s5 + $0x2c8] sm:$0xff]
      %v3985 = vld [vmem:[%s5 + $0x2d0] sm:$0xff]
      %v3986 = vld [vmem:[%s5 + $0x2d8] sm:$0xff]
      %v3987 = vld [vmem:[%s5 + $0x2e0] sm:$0xff]
      %v3988 = vld [vmem:[%s5 + $0x2e8] sm:$0xff]
      %v3989 = vld [vmem:[%s5 + $0x2f0] sm:$0xff]
      %v3990 = vld [vmem:[%s5 + $0x2f8] sm:$0xff]
      %v3991 = vld [vmem:[%s5 + $0x300] sm:$0xff]
      %v3992 = vld [vmem:[%s5 + $0x308] sm:$0xff]
      %v3993 = vld [vmem:[%s5 + $0x310] sm:$0xff]
      %v3994 = vld [vmem:[%s5 + $0x318] sm:$0xff]
      %v3995 = vld [vmem:[%s5 + $0x320] sm:$0xff]
      %v3996 = vld [vmem:[%s5 + $0x328] sm:$0xff]
      %v3997 = vld [vmem:[%s5 + $0x330] sm:$0xff]
      %v3998 = vld [vmem:[%s5 + $0x338] sm:$0xff]
      %v3999 = vld [vmem:[%s5 + $0x340] sm:$0xff]
      %v4000 = vld [vmem:[%s5 + $0x348] sm:$0xff]
      %v4001 = vld [vmem:[%s5 + $0x350] sm:$0xff]
      %v4002 = vld [vmem:[%s5 + $0x358] sm:$0xff]
      %v4003 = vld [vmem:[%s5 + $0x360] sm:$0xff]
      %v4004 = vld [vmem:[%s5 + $0x368] sm:$0xff]
      %v4005 = vld [vmem:[%s5 + $0x370] sm:$0xff]
      %v4006 = vld [vmem:[%s5 + $0x378] sm:$0xff]
      %v4007 = vld [vmem:[%s5 + $0x380] sm:$0xff]
      %v4008 = vld [vmem:[%s5 + $0x388] sm:$0xff]
      %v4009 = vld [vmem:[%s5 + $0x390] sm:$0xff]
      %v4010 = vld [vmem:[%s5 + $0x398] sm:$0xff]
      %v4011 = vld [vmem:[%s5 + $0x3a0] sm:$0xff]
      %v4012 = vld [vmem:[%s5 + $0x3a8] sm:$0xff]
      %v4013 = vld [vmem:[%s5 + $0x3b0] sm:$0xff]
      %v4014 = vld [vmem:[%s5 + $0x3b8] sm:$0xff]
      %v4015 = vld [vmem:[%s5 + $0x3c0] sm:$0xff]
      %v4016 = vld [vmem:[%s5 + $0x3c8] sm:$0xff]
      %v4017 = vld [vmem:[%s5 + $0x3d0] sm:$0xff]
      %v4018 = vld [vmem:[%s5 + $0x3d8] sm:$0xff]
      %v4019 = vld [vmem:[%s5 + $0x3e0] sm:$0xff]
      %v4020 = vld [vmem:[%s5 + $0x3e8] sm:$0xff]
      %v4021 = vld [vmem:[%s5 + $0x3f0] sm:$0xff]
      %v4022 = vld [vmem:[%s5 + $0x3f8] sm:$0xff]
      %v4023 = vld [vmem:[%s5 + $0x400] sm:$0xff]
      %v4024 = vld [vmem:[%s5 + $0x408] sm:$0xff]
      %v4025 = vld [vmem:[%s5 + $0x410] sm:$0xff]
      %v4026 = vld [vmem:[%s5 + $0x418] sm:$0xff]
      %v4027 = vld [vmem:[%s5 + $0x420] sm:$0xff]
      %v4028 = vld [vmem:[%s5 + $0x428] sm:$0xff]
      %v4029 = vld [vmem:[%s5 + $0x430] sm:$0xff]
      %v4030 = vld [vmem:[%s5 + $0x438] sm:$0xff]
      %v4031 = vld [vmem:[%s5 + $0x440] sm:$0xff]
      %v4032 = vld [vmem:[%s5 + $0x448] sm:$0xff]
      %v4033 = vld [vmem:[%s5 + $0x450] sm:$0xff]
      %v4034 = vld [vmem:[%s5 + $0x458] sm:$0xff]
      %v4035 = vld [vmem:[%s5 + $0x460] sm:$0xff]
      %v4036 = vld [vmem:[%s5 + $0x468] sm:$0xff]
      %v4037 = vld [vmem:[%s5 + $0x470] sm:$0xff]
      %v4038 = vld [vmem:[%s5 + $0x478] sm:$0xff]
      %v4039 = vld [vmem:[%s5 + $0x480] sm:$0xff]
      %v4040 = vld [vmem:[%s5 + $0x488] sm:$0xff]
      %v4041 = vld [vmem:[%s5 + $0x490] sm:$0xff]
      %v4042 = vld [vmem:[%s5 + $0x498] sm:$0xff]
      %v4043 = vld [vmem:[%s5 + $0x4a0] sm:$0xff]
      %v4044 = vld [vmem:[%s5 + $0x4a8] sm:$0xff]
      %v4045 = vld [vmem:[%s5 + $0x4b0] sm:$0xff]
      %v4046 = vld [vmem:[%s5 + $0x4b8] sm:$0xff]
      %v4047 = vld [vmem:[%s5 + $0x4c0] sm:$0xff]
      %v4048 = vld [vmem:[%s5 + $0x4c8] sm:$0xff]
      %v4049 = vld [vmem:[%s5 + $0x4d0] sm:$0xff]
      %v4050 = vld [vmem:[%s5 + $0x4d8] sm:$0xff]
      %v4051 = vld [vmem:[%s5 + $0x4e0] sm:$0xff]
      %v4052 = vld [vmem:[%s5 + $0x4e8] sm:$0xff]
      %v4053 = vld [vmem:[%s5 + $0x4f0] sm:$0xff]
      %v4054 = vld [vmem:[%s5 + $0x4f8] sm:$0xff]
      %4055 = vmatpush.msra.mxu0 %v3925
      %4056 = vmatpush.msra.mxu0 %v3923
      %4057 = vmatpush.msra.mxu0 %v3921
      %4058 = vmatpush.msra.mxu0 %v3919
      %4059 = vmatpush.msra.mxu0 %v3917
      %4060 = vmatpush.msra.mxu0 %v3915
      %4061 = vmatpush.msra.mxu0 %v3913
      %4062 = vmatpush.msra.mxu0 %v3911
      %4063 = vmatpush.msra.mxu0 %v3909
      %4064 = vmatpush.msra.mxu0 %v3907
      %4065 = vmatpush.msra.mxu0 %v3905
      %4066 = vmatpush.msra.mxu0 %v3903
      %4067 = vmatpush.msra.mxu0 %v3901
      %4068 = vmatpush.msra.mxu0 %v3899
      %4069 = vmatpush.msra.mxu0 %v3897
      %4070 = vmatpush.msra.mxu0 %v3895
      %4071 = vmatmul.f32.gmra.mxu0 %v3514
      %v4072 = vpop.f32.mrf.mxu0
      %v4073 = vadd.f32 0.0, %v4072
      %4074 = vmatmul.f32.gmra.mxu0 %v3517
      %v4075 = vpop.f32.mrf.mxu0
      %v4076 = vadd.f32 0.0, %v4075
      %4077 = vmatmul.f32.gmra.mxu0 %v3520
      %v4078 = vpop.f32.mrf.mxu0
      %v4079 = vadd.f32 0.0, %v4078
      %4080 = vmatmul.f32.gmra.mxu0 %v3523
      %v4081 = vpop.f32.mrf.mxu0
      %v4082 = vadd.f32 0.0, %v4081
      %4083 = vmatmul.f32.gmra.mxu0 %v3526
      %v4084 = vpop.f32.mrf.mxu0
      %v4085 = vadd.f32 0.0, %v4084
      %4086 = vmatmul.f32.gmra.mxu0 %v3529
      %v4087 = vpop.f32.mrf.mxu0
      %v4088 = vadd.f32 0.0, %v4087
      %4089 = vmatmul.f32.gmra.mxu0 %v3532
      %v4090 = vpop.f32.mrf.mxu0
      %v4091 = vadd.f32 0.0, %v4090
      %4092 = vmatmul.f32.gmra.mxu0 %v3535
      %v4093 = vpop.f32.mrf.mxu0
      %v4094 = vadd.f32 0.0, %v4093
      %4095 = vmatmul.f32.gmra.mxu0 %v3538
      %v4096 = vpop.f32.mrf.mxu0
      %v4097 = vadd.f32 0.0, %v4096
      %4098 = vmatmul.f32.gmra.mxu0 %v3541
      %v4099 = vpop.f32.mrf.mxu0
      %v4100 = vadd.f32 0.0, %v4099
      %4101 = vdwg.mxu0
      %4102 = vmatpush.msra.mxu0 %v3957
      %4103 = vmatpush.msra.mxu0 %v3955
      %4104 = vmatpush.msra.mxu0 %v3953
      %4105 = vmatpush.msra.mxu0 %v3951
      %4106 = vmatpush.msra.mxu0 %v3949
      %4107 = vmatpush.msra.mxu0 %v3947
      %4108 = vmatpush.msra.mxu0 %v3945
      %4109 = vmatpush.msra.mxu0 %v3943
      %4110 = vmatpush.msra.mxu0 %v3941
      %4111 = vmatpush.msra.mxu0 %v3939
      %4112 = vmatpush.msra.mxu0 %v3937
      %4113 = vmatpush.msra.mxu0 %v3935
      %4114 = vmatpush.msra.mxu0 %v3933
      %4115 = vmatpush.msra.mxu0 %v3931
      %4116 = vmatpush.msra.mxu0 %v3929
      %4117 = vmatpush.msra.mxu0 %v3927
      %4118 = vmatmul.f32.gmra.mxu0 %v3602
      %v4119 = vpop.f32.mrf.mxu0
      %v4120 = vadd.f32 %v4073, %v4119
      %4121 = vmatmul.f32.gmra.mxu0 %v3605
      %v4122 = vpop.f32.mrf.mxu0
      %v4123 = vadd.f32 %v4076, %v4122
      %4124 = vmatmul.f32.gmra.mxu0 %v3608
      %v4125 = vpop.f32.mrf.mxu0
      %v4126 = vadd.f32 %v4079, %v4125
      %4127 = vmatmul.f32.gmra.mxu0 %v3611
      %v4128 = vpop.f32.mrf.mxu0
      %v4129 = vadd.f32 %v4082, %v4128
      %4130 = vmatmul.f32.gmra.mxu0 %v3614
      %v4131 = vpop.f32.mrf.mxu0
      %v4132 = vadd.f32 %v4085, %v4131
      %4133 = vmatmul.f32.gmra.mxu0 %v3617
      %v4134 = vpop.f32.mrf.mxu0
      %v4135 = vadd.f32 %v4088, %v4134
      %4136 = vmatmul.f32.gmra.mxu0 %v3620
      %v4137 = vpop.f32.mrf.mxu0
      %v4138 = vadd.f32 %v4091, %v4137
      %4139 = vmatmul.f32.gmra.mxu0 %v3623
      %v4140 = vpop.f32.mrf.mxu0
      %v4141 = vadd.f32 %v4094, %v4140
      %4142 = vmatmul.f32.gmra.mxu0 %v3626
      %v4143 = vpop.f32.mrf.mxu0
      %v4144 = vadd.f32 %v4097, %v4143
      %4145 = vmatmul.f32.gmra.mxu0 %v3629
      %v4146 = vpop.f32.mrf.mxu0
      %v4147 = vadd.f32 %v4100, %v4146
      %4148 = vdwg.mxu0
      %4149 = vmatpush.msra.mxu0 %v3989
      %4150 = vmatpush.msra.mxu0 %v3987
      %4151 = vmatpush.msra.mxu0 %v3985
      %4152 = vmatpush.msra.mxu0 %v3983
      %4153 = vmatpush.msra.mxu0 %v3981
      %4154 = vmatpush.msra.mxu0 %v3979
      %4155 = vmatpush.msra.mxu0 %v3977
      %4156 = vmatpush.msra.mxu0 %v3975
      %4157 = vmatpush.msra.mxu0 %v3973
      %4158 = vmatpush.msra.mxu0 %v3971
      %4159 = vmatpush.msra.mxu0 %v3969
      %4160 = vmatpush.msra.mxu0 %v3967
      %4161 = vmatpush.msra.mxu0 %v3965
      %4162 = vmatpush.msra.mxu0 %v3963
      %4163 = vmatpush.msra.mxu0 %v3961
      %4164 = vmatpush.msra.mxu0 %v3959
      %4165 = vmatmul.f32.gmra.mxu0 %v3690
      %v4166 = vpop.f32.mrf.mxu0
      %v4167 = vadd.f32 %v4120, %v4166
      %4168 = vmatmul.f32.gmra.mxu0 %v3693
      %v4169 = vpop.f32.mrf.mxu0
      %v4170 = vadd.f32 %v4123, %v4169
      %4171 = vmatmul.f32.gmra.mxu0 %v3696
      %v4172 = vpop.f32.mrf.mxu0
      %v4173 = vadd.f32 %v4126, %v4172
      %4174 = vmatmul.f32.gmra.mxu0 %v3699
      %v4175 = vpop.f32.mrf.mxu0
      %v4176 = vadd.f32 %v4129, %v4175
      %4177 = vmatmul.f32.gmra.mxu0 %v3702
      %v4178 = vpop.f32.mrf.mxu0
      %v4179 = vadd.f32 %v4132, %v4178
      %4180 = vmatmul.f32.gmra.mxu0 %v3705
      %v4181 = vpop.f32.mrf.mxu0
      %v4182 = vadd.f32 %v4135, %v4181
      %4183 = vmatmul.f32.gmra.mxu0 %v3708
      %v4184 = vpop.f32.mrf.mxu0
      %v4185 = vadd.f32 %v4138, %v4184
      %4186 = vmatmul.f32.gmra.mxu0 %v3711
      %v4187 = vpop.f32.mrf.mxu0
      %v4188 = vadd.f32 %v4141, %v4187
      %4189 = vmatmul.f32.gmra.mxu0 %v3714
      %v4190 = vpop.f32.mrf.mxu0
      %v4191 = vadd.f32 %v4144, %v4190
      %4192 = vmatmul.f32.gmra.mxu0 %v3717
      %v4193 = vpop.f32.mrf.mxu0
      %v4194 = vadd.f32 %v4147, %v4193
      %4195 = vdwg.mxu0
      %4196 = vmatpush.msra.mxu0 %v4021
      %4197 = vmatpush.msra.mxu0 %v4019
      %4198 = vmatpush.msra.mxu0 %v4017
      %4199 = vmatpush.msra.mxu0 %v4015
      %4200 = vmatpush.msra.mxu0 %v4013
      %4201 = vmatpush.msra.mxu0 %v4011
      %4202 = vmatpush.msra.mxu0 %v4009
      %4203 = vmatpush.msra.mxu0 %v4007
      %4204 = vmatpush.msra.mxu0 %v4005
      %4205 = vmatpush.msra.mxu0 %v4003
      %4206 = vmatpush.msra.mxu0 %v4001
      %4207 = vmatpush.msra.mxu0 %v3999
      %4208 = vmatpush.msra.mxu0 %v3997
      %4209 = vmatpush.msra.mxu0 %v3995
      %4210 = vmatpush.msra.mxu0 %v3993
      %4211 = vmatpush.msra.mxu0 %v3991
      %4212 = vmatmul.f32.gmra.mxu0 %v3778
      %v4213 = vpop.f32.mrf.mxu0
      %v4214 = vadd.f32 %v4167, %v4213
      %4215 = vmatmul.f32.gmra.mxu0 %v3781
      %v4216 = vpop.f32.mrf.mxu0
      %v4217 = vadd.f32 %v4170, %v4216
      %4218 = vmatmul.f32.gmra.mxu0 %v3784
      %v4219 = vpop.f32.mrf.mxu0
      %v4220 = vadd.f32 %v4173, %v4219
      %4221 = vmatmul.f32.gmra.mxu0 %v3787
      %v4222 = vpop.f32.mrf.mxu0
      %v4223 = vadd.f32 %v4176, %v4222
      %4224 = vmatmul.f32.gmra.mxu0 %v3790
      %v4225 = vpop.f32.mrf.mxu0
      %v4226 = vadd.f32 %v4179, %v4225
      %4227 = vmatmul.f32.gmra.mxu0 %v3793
      %v4228 = vpop.f32.mrf.mxu0
      %v4229 = vadd.f32 %v4182, %v4228
      %4230 = vmatmul.f32.gmra.mxu0 %v3796
      %v4231 = vpop.f32.mrf.mxu0
      %v4232 = vadd.f32 %v4185, %v4231
      %4233 = vmatmul.f32.gmra.mxu0 %v3799
      %v4234 = vpop.f32.mrf.mxu0
      %v4235 = vadd.f32 %v4188, %v4234
      %4236 = vmatmul.f32.gmra.mxu0 %v3802
      %v4237 = vpop.f32.mrf.mxu0
      %v4238 = vadd.f32 %v4191, %v4237
      %4239 = vmatmul.f32.gmra.mxu0 %v3805
      %v4240 = vpop.f32.mrf.mxu0
      %v4241 = vadd.f32 %v4194, %v4240
      %4242 = vdwg.mxu0
      %4243 = vmatpush.msra.mxu0 %v4053
      %4244 = vmatpush.msra.mxu0 %v4051
      %4245 = vmatpush.msra.mxu0 %v4049
      %4246 = vmatpush.msra.mxu0 %v4047
      %4247 = vmatpush.msra.mxu0 %v4045
      %4248 = vmatpush.msra.mxu0 %v4043
      %4249 = vmatpush.msra.mxu0 %v4041
      %4250 = vmatpush.msra.mxu0 %v4039
      %4251 = vmatpush.msra.mxu0 %v4037
      %4252 = vmatpush.msra.mxu0 %v4035
      %4253 = vmatpush.msra.mxu0 %v4033
      %4254 = vmatpush.msra.mxu0 %v4031
      %4255 = vmatpush.msra.mxu0 %v4029
      %4256 = vmatpush.msra.mxu0 %v4027
      %4257 = vmatpush.msra.mxu0 %v4025
      %4258 = vmatpush.msra.mxu0 %v4023
      %4259 = vmatmul.f32.gmra.mxu0 %v3866
      %v4260 = vpop.f32.mrf.mxu0
      %v4261 = vadd.f32 %v4214, %v4260
      %4262 = vmatmul.f32.gmra.mxu0 %v3869
      %v4263 = vpop.f32.mrf.mxu0
      %v4264 = vadd.f32 %v4217, %v4263
      %4265 = vmatmul.f32.gmra.mxu0 %v3872
      %v4266 = vpop.f32.mrf.mxu0
      %v4267 = vadd.f32 %v4220, %v4266
      %4268 = vmatmul.f32.gmra.mxu0 %v3875
      %v4269 = vpop.f32.mrf.mxu0
      %v4270 = vadd.f32 %v4223, %v4269
      %4271 = vmatmul.f32.gmra.mxu0 %v3878
      %v4272 = vpop.f32.mrf.mxu0
      %v4273 = vadd.f32 %v4226, %v4272
      %4274 = vmatmul.f32.gmra.mxu0 %v3881
      %v4275 = vpop.f32.mrf.mxu0
      %v4276 = vadd.f32 %v4229, %v4275
      %4277 = vmatmul.f32.gmra.mxu0 %v3884
      %v4278 = vpop.f32.mrf.mxu0
      %v4279 = vadd.f32 %v4232, %v4278
      %4280 = vmatmul.f32.gmra.mxu0 %v3887
      %v4281 = vpop.f32.mrf.mxu0
      %v4282 = vadd.f32 %v4235, %v4281
      %4283 = vmatmul.f32.gmra.mxu0 %v3890
      %v4284 = vpop.f32.mrf.mxu0
      %v4285 = vadd.f32 %v4238, %v4284
      %4286 = vmatmul.f32.gmra.mxu0 %v3893
      %v4287 = vpop.f32.mrf.mxu0
      %v4288 = vadd.f32 %v4241, %v4287
      %4289 = vdwg.mxu0
      %4290 = vmatpush.msra.mxu0 %v3926
      %4291 = vmatpush.msra.mxu0 %v3924
      %4292 = vmatpush.msra.mxu0 %v3922
      %4293 = vmatpush.msra.mxu0 %v3920
      %4294 = vmatpush.msra.mxu0 %v3918
      %4295 = vmatpush.msra.mxu0 %v3916
      %4296 = vmatpush.msra.mxu0 %v3914
      %4297 = vmatpush.msra.mxu0 %v3912
      %4298 = vmatpush.msra.mxu0 %v3910
      %4299 = vmatpush.msra.mxu0 %v3908
      %4300 = vmatpush.msra.mxu0 %v3906
      %4301 = vmatpush.msra.mxu0 %v3904
      %4302 = vmatpush.msra.mxu0 %v3902
      %4303 = vmatpush.msra.mxu0 %v3900
      %4304 = vmatpush.msra.mxu0 %v3898
      %4305 = vmatpush.msra.mxu0 %v3896
      %4306 = vmatmul.f32.gmra.mxu0 %v3514
      %v4307 = vpop.f32.mrf.mxu0
      %v4308 = vadd.f32 0.0, %v4307
      %4309 = vmatmul.f32.gmra.mxu0 %v3517
      %v4310 = vpop.f32.mrf.mxu0
      %v4311 = vadd.f32 0.0, %v4310
      %4312 = vmatmul.f32.gmra.mxu0 %v3520
      %v4313 = vpop.f32.mrf.mxu0
      %v4314 = vadd.f32 0.0, %v4313
      %4315 = vmatmul.f32.gmra.mxu0 %v3523
      %v4316 = vpop.f32.mrf.mxu0
      %v4317 = vadd.f32 0.0, %v4316
      %4318 = vmatmul.f32.gmra.mxu0 %v3526
      %v4319 = vpop.f32.mrf.mxu0
      %v4320 = vadd.f32 0.0, %v4319
      %4321 = vmatmul.f32.gmra.mxu0 %v3529
      %v4322 = vpop.f32.mrf.mxu0
      %v4323 = vadd.f32 0.0, %v4322
      %4324 = vmatmul.f32.gmra.mxu0 %v3532
      %v4325 = vpop.f32.mrf.mxu0
      %v4326 = vadd.f32 0.0, %v4325
      %4327 = vmatmul.f32.gmra.mxu0 %v3535
      %v4328 = vpop.f32.mrf.mxu0
      %v4329 = vadd.f32 0.0, %v4328
      %4330 = vmatmul.f32.gmra.mxu0 %v3538
      %v4331 = vpop.f32.mrf.mxu0
      %v4332 = vadd.f32 0.0, %v4331
      %4333 = vmatmul.f32.gmra.mxu0 %v3541
      %v4334 = vpop.f32.mrf.mxu0
      %v4335 = vadd.f32 0.0, %v4334
      %4336 = vdwg.mxu0
      %4337 = vmatpush.msra.mxu0 %v3958
      %4338 = vmatpush.msra.mxu0 %v3956
      %4339 = vmatpush.msra.mxu0 %v3954
      %4340 = vmatpush.msra.mxu0 %v3952
      %4341 = vmatpush.msra.mxu0 %v3950
      %4342 = vmatpush.msra.mxu0 %v3948
      %4343 = vmatpush.msra.mxu0 %v3946
      %4344 = vmatpush.msra.mxu0 %v3944
      %4345 = vmatpush.msra.mxu0 %v3942
      %4346 = vmatpush.msra.mxu0 %v3940
      %4347 = vmatpush.msra.mxu0 %v3938
      %4348 = vmatpush.msra.mxu0 %v3936
      %4349 = vmatpush.msra.mxu0 %v3934
      %4350 = vmatpush.msra.mxu0 %v3932
      %4351 = vmatpush.msra.mxu0 %v3930
      %4352 = vmatpush.msra.mxu0 %v3928
      %4353 = vmatmul.f32.gmra.mxu0 %v3602
      %v4354 = vpop.f32.mrf.mxu0
      %v4355 = vadd.f32 %v4308, %v4354
      %4356 = vmatmul.f32.gmra.mxu0 %v3605
      %v4357 = vpop.f32.mrf.mxu0
      %v4358 = vadd.f32 %v4311, %v4357
      %4359 = vmatmul.f32.gmra.mxu0 %v3608
      %v4360 = vpop.f32.mrf.mxu0
      %v4361 = vadd.f32 %v4314, %v4360
      %4362 = vmatmul.f32.gmra.mxu0 %v3611
      %v4363 = vpop.f32.mrf.mxu0
      %v4364 = vadd.f32 %v4317, %v4363
      %4365 = vmatmul.f32.gmra.mxu0 %v3614
      %v4366 = vpop.f32.mrf.mxu0
      %v4367 = vadd.f32 %v4320, %v4366
      %4368 = vmatmul.f32.gmra.mxu0 %v3617
      %v4369 = vpop.f32.mrf.mxu0
      %v4370 = vadd.f32 %v4323, %v4369
      %4371 = vmatmul.f32.gmra.mxu0 %v3620
      %v4372 = vpop.f32.mrf.mxu0
      %v4373 = vadd.f32 %v4326, %v4372
      %4374 = vmatmul.f32.gmra.mxu0 %v3623
      %v4375 = vpop.f32.mrf.mxu0
      %v4376 = vadd.f32 %v4329, %v4375
      %4377 = vmatmul.f32.gmra.mxu0 %v3626
      %v4378 = vpop.f32.mrf.mxu0
      %v4379 = vadd.f32 %v4332, %v4378
      %4380 = vmatmul.f32.gmra.mxu0 %v3629
      %v4381 = vpop.f32.mrf.mxu0
      %v4382 = vadd.f32 %v4335, %v4381
      %4383 = vdwg.mxu0
      %4384 = vmatpush.msra.mxu0 %v3990
      %4385 = vmatpush.msra.mxu0 %v3988
      %4386 = vmatpush.msra.mxu0 %v3986
      %4387 = vmatpush.msra.mxu0 %v3984
      %4388 = vmatpush.msra.mxu0 %v3982
      %4389 = vmatpush.msra.mxu0 %v3980
      %4390 = vmatpush.msra.mxu0 %v3978
      %4391 = vmatpush.msra.mxu0 %v3976
      %4392 = vmatpush.msra.mxu0 %v3974
      %4393 = vmatpush.msra.mxu0 %v3972
      %4394 = vmatpush.msra.mxu0 %v3970
      %4395 = vmatpush.msra.mxu0 %v3968
      %4396 = vmatpush.msra.mxu0 %v3966
      %4397 = vmatpush.msra.mxu0 %v3964
      %4398 = vmatpush.msra.mxu0 %v3962
      %4399 = vmatpush.msra.mxu0 %v3960
      %4400 = vmatmul.f32.gmra.mxu0 %v3690
      %v4401 = vpop.f32.mrf.mxu0
      %v4402 = vadd.f32 %v4355, %v4401
      %4403 = vmatmul.f32.gmra.mxu0 %v3693
      %v4404 = vpop.f32.mrf.mxu0
      %v4405 = vadd.f32 %v4358, %v4404
      %4406 = vmatmul.f32.gmra.mxu0 %v3696
      %v4407 = vpop.f32.mrf.mxu0
      %v4408 = vadd.f32 %v4361, %v4407
      %4409 = vmatmul.f32.gmra.mxu0 %v3699
      %v4410 = vpop.f32.mrf.mxu0
      %v4411 = vadd.f32 %v4364, %v4410
      %4412 = vmatmul.f32.gmra.mxu0 %v3702
      %v4413 = vpop.f32.mrf.mxu0
      %v4414 = vadd.f32 %v4367, %v4413
      %4415 = vmatmul.f32.gmra.mxu0 %v3705
      %v4416 = vpop.f32.mrf.mxu0
      %v4417 = vadd.f32 %v4370, %v4416
      %4418 = vmatmul.f32.gmra.mxu0 %v3708
      %v4419 = vpop.f32.mrf.mxu0
      %v4420 = vadd.f32 %v4373, %v4419
      %4421 = vmatmul.f32.gmra.mxu0 %v3711
      %v4422 = vpop.f32.mrf.mxu0
      %v4423 = vadd.f32 %v4376, %v4422
      %4424 = vmatmul.f32.gmra.mxu0 %v3714
      %v4425 = vpop.f32.mrf.mxu0
      %v4426 = vadd.f32 %v4379, %v4425
      %4427 = vmatmul.f32.gmra.mxu0 %v3717
      %v4428 = vpop.f32.mrf.mxu0
      %v4429 = vadd.f32 %v4382, %v4428
      %4430 = vdwg.mxu0
      %4431 = vmatpush.msra.mxu0 %v4022
      %4432 = vmatpush.msra.mxu0 %v4020
      %4433 = vmatpush.msra.mxu0 %v4018
      %4434 = vmatpush.msra.mxu0 %v4016
      %4435 = vmatpush.msra.mxu0 %v4014
      %4436 = vmatpush.msra.mxu0 %v4012
      %4437 = vmatpush.msra.mxu0 %v4010
      %4438 = vmatpush.msra.mxu0 %v4008
      %4439 = vmatpush.msra.mxu0 %v4006
      %4440 = vmatpush.msra.mxu0 %v4004
      %4441 = vmatpush.msra.mxu0 %v4002
      %4442 = vmatpush.msra.mxu0 %v4000
      %4443 = vmatpush.msra.mxu0 %v3998
      %4444 = vmatpush.msra.mxu0 %v3996
      %4445 = vmatpush.msra.mxu0 %v3994
      %4446 = vmatpush.msra.mxu0 %v3992
      %4447 = vmatmul.f32.gmra.mxu0 %v3778
      %v4448 = vpop.f32.mrf.mxu0
      %v4449 = vadd.f32 %v4402, %v4448
      %4450 = vmatmul.f32.gmra.mxu0 %v3781
      %v4451 = vpop.f32.mrf.mxu0
      %v4452 = vadd.f32 %v4405, %v4451
      %4453 = vmatmul.f32.gmra.mxu0 %v3784
      %v4454 = vpop.f32.mrf.mxu0
      %v4455 = vadd.f32 %v4408, %v4454
      %4456 = vmatmul.f32.gmra.mxu0 %v3787
      %v4457 = vpop.f32.mrf.mxu0
      %v4458 = vadd.f32 %v4411, %v4457
      %4459 = vmatmul.f32.gmra.mxu0 %v3790
      %v4460 = vpop.f32.mrf.mxu0
      %v4461 = vadd.f32 %v4414, %v4460
      %4462 = vmatmul.f32.gmra.mxu0 %v3793
      %v4463 = vpop.f32.mrf.mxu0
      %v4464 = vadd.f32 %v4417, %v4463
      %4465 = vmatmul.f32.gmra.mxu0 %v3796
      %v4466 = vpop.f32.mrf.mxu0
      %v4467 = vadd.f32 %v4420, %v4466
      %4468 = vmatmul.f32.gmra.mxu0 %v3799
      %v4469 = vpop.f32.mrf.mxu0
      %v4470 = vadd.f32 %v4423, %v4469
      %4471 = vmatmul.f32.gmra.mxu0 %v3802
      %v4472 = vpop.f32.mrf.mxu0
      %v4473 = vadd.f32 %v4426, %v4472
      %4474 = vmatmul.f32.gmra.mxu0 %v3805
      %v4475 = vpop.f32.mrf.mxu0
      %v4476 = vadd.f32 %v4429, %v4475
      %4477 = vdwg.mxu0
      %4478 = vmatpush.msra.mxu0 %v4054
      %4479 = vmatpush.msra.mxu0 %v4052
      %4480 = vmatpush.msra.mxu0 %v4050
      %4481 = vmatpush.msra.mxu0 %v4048
      %4482 = vmatpush.msra.mxu0 %v4046
      %4483 = vmatpush.msra.mxu0 %v4044
      %4484 = vmatpush.msra.mxu0 %v4042
      %4485 = vmatpush.msra.mxu0 %v4040
      %4486 = vmatpush.msra.mxu0 %v4038
      %4487 = vmatpush.msra.mxu0 %v4036
      %4488 = vmatpush.msra.mxu0 %v4034
      %4489 = vmatpush.msra.mxu0 %v4032
      %4490 = vmatpush.msra.mxu0 %v4030
      %4491 = vmatpush.msra.mxu0 %v4028
      %4492 = vmatpush.msra.mxu0 %v4026
      %4493 = vmatpush.msra.mxu0 %v4024
      %4494 = vmatmul.f32.gmra.mxu0 %v3866
      %v4495 = vpop.f32.mrf.mxu0
      %v4496 = vadd.f32 %v4449, %v4495
      %4497 = vmatmul.f32.gmra.mxu0 %v3869
      %v4498 = vpop.f32.mrf.mxu0
      %v4499 = vadd.f32 %v4452, %v4498
      %4500 = vmatmul.f32.gmra.mxu0 %v3872
      %v4501 = vpop.f32.mrf.mxu0
      %v4502 = vadd.f32 %v4455, %v4501
      %4503 = vmatmul.f32.gmra.mxu0 %v3875
      %v4504 = vpop.f32.mrf.mxu0
      %v4505 = vadd.f32 %v4458, %v4504
      %4506 = vmatmul.f32.gmra.mxu0 %v3878
      %v4507 = vpop.f32.mrf.mxu0
      %v4508 = vadd.f32 %v4461, %v4507
      %4509 = vmatmul.f32.gmra.mxu0 %v3881
      %v4510 = vpop.f32.mrf.mxu0
      %v4511 = vadd.f32 %v4464, %v4510
      %4512 = vmatmul.f32.gmra.mxu0 %v3884
      %v4513 = vpop.f32.mrf.mxu0
      %v4514 = vadd.f32 %v4467, %v4513
      %4515 = vmatmul.f32.gmra.mxu0 %v3887
      %v4516 = vpop.f32.mrf.mxu0
      %v4517 = vadd.f32 %v4470, %v4516
      %4518 = vmatmul.f32.gmra.mxu0 %v3890
      %v4519 = vpop.f32.mrf.mxu0
      %v4520 = vadd.f32 %v4473, %v4519
      %4521 = vmatmul.f32.gmra.mxu0 %v3893
      %v4522 = vpop.f32.mrf.mxu0
      %v4523 = vadd.f32 %v4476, %v4522
      %4524 = vdwg.mxu0
      %v4525 = vmax.f32 %v4261, %v4276
      %v4526 = vmax.f32 %v4496, %v4511
      %v4527 = vmax.f32 %v4264, %v4279
      %v4528 = vmax.f32 %v4499, %v4514
      %v4529 = vmax.f32 %v4267, %v4282
      %v4530 = vmax.f32 %v4502, %v4517
      %v4531 = vmax.f32 %v4270, %v4285
      %v4532 = vmax.f32 %v4505, %v4520
      %v4533 = vmax.f32 %v4273, %v4288
      %v4534 = vmax.f32 %v4508, %v4523
      %v4535 = vmax.f32 %v4525, %v4526
      %v4536 = vmax.f32 %v4527, %v4528
      %v4537 = vmax.f32 %v4529, %v4530
      %v4538 = vmax.f32 %v4531, %v4532
      %v4539 = vmax.f32 %v4533, %v4534
      %v4540 = vld [vmem:[%s6] sm:$0x1]
      %v4542 = vperm.slane %v4540, 0
      %v4544 = vadd.f32 %v4535, %v4542
      %v4545 = vadd.f32 %v4536, %v4542
      %v4546 = vadd.f32 %v4537, %v4542
      %v4547 = vadd.f32 %v4538, %v4542
      %v4548 = vadd.f32 %v4539, %v4542
      %v4549 = vmax.f32 %v4544, 0.0
      %v4550 = vmax.f32 %v4545, 0.0
      %v4551 = vmax.f32 %v4546, 0.0
      %v4552 = vmax.f32 %v4547, 0.0
      %v4553 = vmax.f32 %v4548, 0.0
      %v4554 = vld [vmem:[%s7] sm:$0xff]
      %v4555 = vld [vmem:[%s7 + $0x8] sm:$0xff]
      %v4556 = vld [vmem:[%s7 + $0x10] sm:$0xff]
      %v4557 = vld [vmem:[%s7 + $0x18] sm:$0xff]
      %vm4558 = vcmask 326656
      %v4560 = vsel %vm4558, %v4554, 0
      %v4563 = vsel %vm4558, %v4555, 0
      %v4566 = vsel %vm4558, %v4556, 0
      %v4569 = vsel %vm4558, %v4557, 0
      %4571 = vmatpush.msra.mxu0 0.0
      %4572 = vmatpush.msra.mxu0 0.0
      %4573 = vmatpush.msra.mxu0 0.0
      %4574 = vmatpush.msra.mxu0 0.0
      %4575 = vmatpush.msra.mxu0 0.0
      %4576 = vmatpush.msra.mxu0 0.0
      %4577 = vmatpush.msra.mxu0 0.0
      %4578 = vmatpush.msra.mxu0 0.0
      %4579 = vmatpush.msra.mxu0 0.0
      %4580 = vmatpush.msra.mxu0 0.0
      %4581 = vmatpush.msra.mxu0 0.0
      %4582 = vmatpush.msra.mxu0 %v4553
      %4583 = vmatpush.msra.mxu0 %v4552
      %4584 = vmatpush.msra.mxu0 %v4551
      %4585 = vmatpush.msra.mxu0 %v4550
      %4586 = vmatpush.msra.mxu0 %v4549
      %4587 = vmatmul.f32.gmra.mxu0 %v4560
      %v4588 = vpop.f32.mrf.mxu0
      %v4589 = vadd.f32 0.0, %v4588
      %4590 = vmatmul.f32.gmra.mxu0 %v4563
      %v4591 = vpop.f32.mrf.mxu0
      %v4592 = vadd.f32 0.0, %v4591
      %4593 = vmatmul.f32.gmra.mxu0 %v4566
      %v4594 = vpop.f32.mrf.mxu0
      %v4595 = vadd.f32 0.0, %v4594
      %4596 = vmatmul.f32.gmra.mxu0 %v4569
      %v4597 = vpop.f32.mrf.mxu0
      %v4598 = vadd.f32 0.0, %v4597
      %4599 = vdwg.mxu0
      %s4600 = scalar_lea.vmem %s7, 32
      %v4601 = vld [vmem:[%s4600] sm:$0xff]
      %v4602 = vld [vmem:[%s4600 + $0x8] sm:$0xff]
      %v4603 = vld [vmem:[%s4600 + $0x10] sm:$0xff]
      %v4604 = vld [vmem:[%s4600 + $0x18] sm:$0xff]
      %v4606 = vsel %vm4558, %v4601, 0
      %v4609 = vsel %vm4558, %v4602, 0
      %v4612 = vsel %vm4558, %v4603, 0
      %v4615 = vsel %vm4558, %v4604, 0
      %4617 = vmatpush.msra.mxu0 0.0
      %4618 = vmatpush.msra.mxu0 0.0
      %4619 = vmatpush.msra.mxu0 0.0
      %4620 = vmatpush.msra.mxu0 0.0
      %4621 = vmatpush.msra.mxu0 0.0
      %4622 = vmatpush.msra.mxu0 0.0
      %4623 = vmatpush.msra.mxu0 0.0
      %4624 = vmatpush.msra.mxu0 0.0
      %4625 = vmatpush.msra.mxu0 0.0
      %4626 = vmatpush.msra.mxu0 0.0
      %4627 = vmatpush.msra.mxu0 0.0
      %4628 = vmatpush.msra.mxu0 %v4553
      %4629 = vmatpush.msra.mxu0 %v4552
      %4630 = vmatpush.msra.mxu0 %v4551
      %4631 = vmatpush.msra.mxu0 %v4550
      %4632 = vmatpush.msra.mxu0 %v4549
      %4633 = vmatmul.f32.gmra.mxu0 %v4606
      %v4634 = vpop.f32.mrf.mxu0
      %v4635 = vadd.f32 0.0, %v4634
      %4636 = vmatmul.f32.gmra.mxu0 %v4609
      %v4637 = vpop.f32.mrf.mxu0
      %v4638 = vadd.f32 0.0, %v4637
      %4639 = vmatmul.f32.gmra.mxu0 %v4612
      %v4640 = vpop.f32.mrf.mxu0
      %v4641 = vadd.f32 0.0, %v4640
      %4642 = vmatmul.f32.gmra.mxu0 %v4615
      %v4643 = vpop.f32.mrf.mxu0
      %v4644 = vadd.f32 0.0, %v4643
      %4645 = vdwg.mxu0
      %s4646 = scalar_lea.vmem %s7, 64
      %v4647 = vld [vmem:[%s4646] sm:$0xff]
      %v4648 = vld [vmem:[%s4646 + $0x8] sm:$0xff]
      %v4649 = vld [vmem:[%s4646 + $0x10] sm:$0xff]
      %v4650 = vld [vmem:[%s4646 + $0x18] sm:$0xff]
      %v4652 = vsel %vm4558, %v4647, 0
      %v4655 = vsel %vm4558, %v4648, 0
      %v4658 = vsel %vm4558, %v4649, 0
      %v4661 = vsel %vm4558, %v4650, 0
      %4663 = vmatpush.msra.mxu0 0.0
      %4664 = vmatpush.msra.mxu0 0.0
      %4665 = vmatpush.msra.mxu0 0.0
      %4666 = vmatpush.msra.mxu0 0.0
      %4667 = vmatpush.msra.mxu0 0.0
      %4668 = vmatpush.msra.mxu0 0.0
      %4669 = vmatpush.msra.mxu0 0.0
      %4670 = vmatpush.msra.mxu0 0.0
      %4671 = vmatpush.msra.mxu0 0.0
      %4672 = vmatpush.msra.mxu0 0.0
      %4673 = vmatpush.msra.mxu0 0.0
      %4674 = vmatpush.msra.mxu0 %v4553
      %4675 = vmatpush.msra.mxu0 %v4552
      %4676 = vmatpush.msra.mxu0 %v4551
      %4677 = vmatpush.msra.mxu0 %v4550
      %4678 = vmatpush.msra.mxu0 %v4549
      %4679 = vmatmul.f32.gmra.mxu0 %v4652
      %v4680 = vpop.f32.mrf.mxu0
      %v4681 = vadd.f32 0.0, %v4680
      %4682 = vmatmul.f32.gmra.mxu0 %v4655
      %v4683 = vpop.f32.mrf.mxu0
      %v4684 = vadd.f32 0.0, %v4683
      %4685 = vmatmul.f32.gmra.mxu0 %v4658
      %v4686 = vpop.f32.mrf.mxu0
      %v4687 = vadd.f32 0.0, %v4686
      %4688 = vmatmul.f32.gmra.mxu0 %v4661
      %v4689 = vpop.f32.mrf.mxu0
      %v4690 = vadd.f32 0.0, %v4689
      %4691 = vdwg.mxu0
      %v4692 = vld [vmem:[%s8] sm:$0xff]
      %v4693 = vld [vmem:[%s8 + $0x8] sm:$0xff]
      %v4694 = vld [vmem:[%s8 + $0x10] sm:$0xff]
      %v4695 = vld [vmem:[%s8 + $0x18] sm:$0xff]
      %v4696 = vld [vmem:[%s8 + $0x20] sm:$0xff]
      %v4697 = vld [vmem:[%s8 + $0x28] sm:$0xff]
      %v4698 = vld [vmem:[%s8 + $0x30] sm:$0xff]
      %v4699 = vld [vmem:[%s8 + $0x38] sm:$0xff]
      %v4700 = vld [vmem:[%s8 + $0x40] sm:$0xff]
      %v4701 = vld [vmem:[%s8 + $0x48] sm:$0xff]
      %v4702 = vld [vmem:[%s8 + $0x50] sm:$0xff]
      %v4703 = vld [vmem:[%s8 + $0x58] sm:$0xff]
      %v4704 = vld [vmem:[%s8 + $0x60] sm:$0xff]
      %v4705 = vld [vmem:[%s8 + $0x68] sm:$0xff]
      %v4706 = vld [vmem:[%s8 + $0x70] sm:$0xff]
      %v4707 = vld [vmem:[%s8 + $0x78] sm:$0xff]
      %v4708 = vld [vmem:[%s8 + $0x80] sm:$0xff]
      %v4709 = vld [vmem:[%s8 + $0x88] sm:$0xff]
      %v4710 = vld [vmem:[%s8 + $0x90] sm:$0xff]
      %v4711 = vld [vmem:[%s8 + $0x98] sm:$0xff]
      %v4712 = vld [vmem:[%s8 + $0xa0] sm:$0xff]
      %v4713 = vld [vmem:[%s8 + $0xa8] sm:$0xff]
      %v4714 = vld [vmem:[%s8 + $0xb0] sm:$0xff]
      %v4715 = vld [vmem:[%s8 + $0xb8] sm:$0xff]
      %v4716 = vld [vmem:[%s8 + $0xc0] sm:$0xff]
      %v4717 = vld [vmem:[%s8 + $0xc8] sm:$0xff]
      %v4718 = vld [vmem:[%s8 + $0xd0] sm:$0xff]
      %v4719 = vld [vmem:[%s8 + $0xd8] sm:$0xff]
      %v4720 = vld [vmem:[%s8 + $0xe0] sm:$0xff]
      %v4721 = vld [vmem:[%s8 + $0xe8] sm:$0xff]
      %v4722 = vld [vmem:[%s8 + $0xf0] sm:$0xff]
      %v4723 = vld [vmem:[%s8 + $0xf8] sm:$0xff]
      %v4724 = vld [vmem:[%s8 + $0x100] sm:$0xff]
      %v4725 = vld [vmem:[%s8 + $0x108] sm:$0xff]
      %v4726 = vld [vmem:[%s8 + $0x110] sm:$0xff]
      %v4727 = vld [vmem:[%s8 + $0x118] sm:$0xff]
      %v4728 = vld [vmem:[%s8 + $0x120] sm:$0xff]
      %v4729 = vld [vmem:[%s8 + $0x128] sm:$0xff]
      %v4730 = vld [vmem:[%s8 + $0x130] sm:$0xff]
      %v4731 = vld [vmem:[%s8 + $0x138] sm:$0xff]
      %v4732 = vld [vmem:[%s8 + $0x140] sm:$0xff]
      %v4733 = vld [vmem:[%s8 + $0x148] sm:$0xff]
      %v4734 = vld [vmem:[%s8 + $0x150] sm:$0xff]
      %v4735 = vld [vmem:[%s8 + $0x158] sm:$0xff]
      %v4736 = vld [vmem:[%s8 + $0x160] sm:$0xff]
      %v4737 = vld [vmem:[%s8 + $0x168] sm:$0xff]
      %v4738 = vld [vmem:[%s8 + $0x170] sm:$0xff]
      %v4739 = vld [vmem:[%s8 + $0x178] sm:$0xff]
      %v4740 = vld [vmem:[%s8 + $0x180] sm:$0xff]
      %v4741 = vld [vmem:[%s8 + $0x188] sm:$0xff]
      %v4742 = vld [vmem:[%s8 + $0x190] sm:$0xff]
      %v4743 = vld [vmem:[%s8 + $0x198] sm:$0xff]
      %v4744 = vld [vmem:[%s8 + $0x1a0] sm:$0xff]
      %v4745 = vld [vmem:[%s8 + $0x1a8] sm:$0xff]
      %v4746 = vld [vmem:[%s8 + $0x1b0] sm:$0xff]
      %v4747 = vld [vmem:[%s8 + $0x1b8] sm:$0xff]
      %v4748 = vld [vmem:[%s8 + $0x1c0] sm:$0xff]
      %v4749 = vld [vmem:[%s8 + $0x1c8] sm:$0xff]
      %v4750 = vld [vmem:[%s8 + $0x1d0] sm:$0xff]
      %v4751 = vld [vmem:[%s8 + $0x1d8] sm:$0xff]
      %v4752 = vld [vmem:[%s8 + $0x1e0] sm:$0xff]
      %v4753 = vld [vmem:[%s8 + $0x1e8] sm:$0xff]
      %v4754 = vld [vmem:[%s8 + $0x1f0] sm:$0xff]
      %v4755 = vld [vmem:[%s8 + $0x1f8] sm:$0xff]
      %v4756 = vld [vmem:[%s8 + $0x200] sm:$0xff]
      %v4757 = vld [vmem:[%s8 + $0x208] sm:$0xff]
      %v4758 = vld [vmem:[%s8 + $0x210] sm:$0xff]
      %v4759 = vld [vmem:[%s8 + $0x218] sm:$0xff]
      %v4760 = vld [vmem:[%s8 + $0x220] sm:$0xff]
      %v4761 = vld [vmem:[%s8 + $0x228] sm:$0xff]
      %v4762 = vld [vmem:[%s8 + $0x230] sm:$0xff]
      %v4763 = vld [vmem:[%s8 + $0x238] sm:$0xff]
      %v4764 = vld [vmem:[%s8 + $0x240] sm:$0xff]
      %v4765 = vld [vmem:[%s8 + $0x248] sm:$0xff]
      %v4766 = vld [vmem:[%s8 + $0x250] sm:$0xff]
      %v4767 = vld [vmem:[%s8 + $0x258] sm:$0xff]
      %v4768 = vld [vmem:[%s8 + $0x260] sm:$0xff]
      %v4769 = vld [vmem:[%s8 + $0x268] sm:$0xff]
      %v4770 = vld [vmem:[%s8 + $0x270] sm:$0xff]
      %v4771 = vld [vmem:[%s8 + $0x278] sm:$0xff]
      %v4772 = vld [vmem:[%s8 + $0x280] sm:$0xff]
      %v4773 = vld [vmem:[%s8 + $0x288] sm:$0xff]
      %v4774 = vld [vmem:[%s8 + $0x290] sm:$0xff]
      %v4775 = vld [vmem:[%s8 + $0x298] sm:$0xff]
      %v4776 = vld [vmem:[%s8 + $0x2a0] sm:$0xff]
      %v4777 = vld [vmem:[%s8 + $0x2a8] sm:$0xff]
      %v4778 = vld [vmem:[%s8 + $0x2b0] sm:$0xff]
      %v4779 = vld [vmem:[%s8 + $0x2b8] sm:$0xff]
      %v4780 = vld [vmem:[%s8 + $0x2c0] sm:$0xff]
      %v4781 = vld [vmem:[%s8 + $0x2c8] sm:$0xff]
      %v4782 = vld [vmem:[%s8 + $0x2d0] sm:$0xff]
      %v4783 = vld [vmem:[%s8 + $0x2d8] sm:$0xff]
      %v4784 = vld [vmem:[%s8 + $0x2e0] sm:$0xff]
      %v4785 = vld [vmem:[%s8 + $0x2e8] sm:$0xff]
      %v4786 = vld [vmem:[%s8 + $0x2f0] sm:$0xff]
      %v4787 = vld [vmem:[%s8 + $0x2f8] sm:$0xff]
      %4788 = vmatpush.msra.mxu0 %v4722
      %4789 = vmatpush.msra.mxu0 %v4720
      %4790 = vmatpush.msra.mxu0 %v4718
      %4791 = vmatpush.msra.mxu0 %v4716
      %4792 = vmatpush.msra.mxu0 %v4714
      %4793 = vmatpush.msra.mxu0 %v4712
      %4794 = vmatpush.msra.mxu0 %v4710
      %4795 = vmatpush.msra.mxu0 %v4708
      %4796 = vmatpush.msra.mxu0 %v4706
      %4797 = vmatpush.msra.mxu0 %v4704
      %4798 = vmatpush.msra.mxu0 %v4702
      %4799 = vmatpush.msra.mxu0 %v4700
      %4800 = vmatpush.msra.mxu0 %v4698
      %4801 = vmatpush.msra.mxu0 %v4696
      %4802 = vmatpush.msra.mxu0 %v4694
      %4803 = vmatpush.msra.mxu0 %v4692
      %4804 = vmatmul.f32.gmra.mxu0 %v4589
      %v4805 = vpop.f32.mrf.mxu0
      %v4806 = vadd.f32 0.0, %v4805
      %4807 = vmatmul.f32.gmra.mxu0 %v4592
      %v4808 = vpop.f32.mrf.mxu0
      %v4809 = vadd.f32 0.0, %v4808
      %4810 = vmatmul.f32.gmra.mxu0 %v4595
      %v4811 = vpop.f32.mrf.mxu0
      %v4812 = vadd.f32 0.0, %v4811
      %4813 = vmatmul.f32.gmra.mxu0 %v4598
      %v4814 = vpop.f32.mrf.mxu0
      %v4815 = vadd.f32 0.0, %v4814
      %4816 = vdwg.mxu0
      %4817 = vmatpush.msra.mxu0 %v4754
      %4818 = vmatpush.msra.mxu0 %v4752
      %4819 = vmatpush.msra.mxu0 %v4750
      %4820 = vmatpush.msra.mxu0 %v4748
      %4821 = vmatpush.msra.mxu0 %v4746
      %4822 = vmatpush.msra.mxu0 %v4744
      %4823 = vmatpush.msra.mxu0 %v4742
      %4824 = vmatpush.msra.mxu0 %v4740
      %4825 = vmatpush.msra.mxu0 %v4738
      %4826 = vmatpush.msra.mxu0 %v4736
      %4827 = vmatpush.msra.mxu0 %v4734
      %4828 = vmatpush.msra.mxu0 %v4732
      %4829 = vmatpush.msra.mxu0 %v4730
      %4830 = vmatpush.msra.mxu0 %v4728
      %4831 = vmatpush.msra.mxu0 %v4726
      %4832 = vmatpush.msra.mxu0 %v4724
      %4833 = vmatmul.f32.gmra.mxu0 %v4635
      %v4834 = vpop.f32.mrf.mxu0
      %v4835 = vadd.f32 %v4806, %v4834
      %4836 = vmatmul.f32.gmra.mxu0 %v4638
      %v4837 = vpop.f32.mrf.mxu0
      %v4838 = vadd.f32 %v4809, %v4837
      %4839 = vmatmul.f32.gmra.mxu0 %v4641
      %v4840 = vpop.f32.mrf.mxu0
      %v4841 = vadd.f32 %v4812, %v4840
      %4842 = vmatmul.f32.gmra.mxu0 %v4644
      %v4843 = vpop.f32.mrf.mxu0
      %v4844 = vadd.f32 %v4815, %v4843
      %4845 = vdwg.mxu0
      %4846 = vmatpush.msra.mxu0 %v4786
      %4847 = vmatpush.msra.mxu0 %v4784
      %4848 = vmatpush.msra.mxu0 %v4782
      %4849 = vmatpush.msra.mxu0 %v4780
      %4850 = vmatpush.msra.mxu0 %v4778
      %4851 = vmatpush.msra.mxu0 %v4776
      %4852 = vmatpush.msra.mxu0 %v4774
      %4853 = vmatpush.msra.mxu0 %v4772
      %4854 = vmatpush.msra.mxu0 %v4770
      %4855 = vmatpush.msra.mxu0 %v4768
      %4856 = vmatpush.msra.mxu0 %v4766
      %4857 = vmatpush.msra.mxu0 %v4764
      %4858 = vmatpush.msra.mxu0 %v4762
      %4859 = vmatpush.msra.mxu0 %v4760
      %4860 = vmatpush.msra.mxu0 %v4758
      %4861 = vmatpush.msra.mxu0 %v4756
      %4862 = vmatmul.f32.gmra.mxu0 %v4681
      %v4863 = vpop.f32.mrf.mxu0
      %v4864 = vadd.f32 %v4835, %v4863
      %4865 = vmatmul.f32.gmra.mxu0 %v4684
      %v4866 = vpop.f32.mrf.mxu0
      %v4867 = vadd.f32 %v4838, %v4866
      %4868 = vmatmul.f32.gmra.mxu0 %v4687
      %v4869 = vpop.f32.mrf.mxu0
      %v4870 = vadd.f32 %v4841, %v4869
      %4871 = vmatmul.f32.gmra.mxu0 %v4690
      %v4872 = vpop.f32.mrf.mxu0
      %v4873 = vadd.f32 %v4844, %v4872
      %4874 = vdwg.mxu0
      %4875 = vmatpush.msra.mxu0 %v4723
      %4876 = vmatpush.msra.mxu0 %v4721
      %4877 = vmatpush.msra.mxu0 %v4719
      %4878 = vmatpush.msra.mxu0 %v4717
      %4879 = vmatpush.msra.mxu0 %v4715
      %4880 = vmatpush.msra.mxu0 %v4713
      %4881 = vmatpush.msra.mxu0 %v4711
      %4882 = vmatpush.msra.mxu0 %v4709
      %4883 = vmatpush.msra.mxu0 %v4707
      %4884 = vmatpush.msra.mxu0 %v4705
      %4885 = vmatpush.msra.mxu0 %v4703
      %4886 = vmatpush.msra.mxu0 %v4701
      %4887 = vmatpush.msra.mxu0 %v4699
      %4888 = vmatpush.msra.mxu0 %v4697
      %4889 = vmatpush.msra.mxu0 %v4695
      %4890 = vmatpush.msra.mxu0 %v4693
      %4891 = vmatmul.f32.gmra.mxu0 %v4589
      %v4892 = vpop.f32.mrf.mxu0
      %v4893 = vadd.f32 0.0, %v4892
      %4894 = vmatmul.f32.gmra.mxu0 %v4592
      %v4895 = vpop.f32.mrf.mxu0
      %v4896 = vadd.f32 0.0, %v4895
      %4897 = vmatmul.f32.gmra.mxu0 %v4595
      %v4898 = vpop.f32.mrf.mxu0
      %v4899 = vadd.f32 0.0, %v4898
      %4900 = vmatmul.f32.gmra.mxu0 %v4598
      %v4901 = vpop.f32.mrf.mxu0
      %v4902 = vadd.f32 0.0, %v4901
      %4903 = vdwg.mxu0
      %4904 = vmatpush.msra.mxu0 %v4755
      %4905 = vmatpush.msra.mxu0 %v4753
      %4906 = vmatpush.msra.mxu0 %v4751
      %4907 = vmatpush.msra.mxu0 %v4749
      %4908 = vmatpush.msra.mxu0 %v4747
      %4909 = vmatpush.msra.mxu0 %v4745
      %4910 = vmatpush.msra.mxu0 %v4743
      %4911 = vmatpush.msra.mxu0 %v4741
      %4912 = vmatpush.msra.mxu0 %v4739
      %4913 = vmatpush.msra.mxu0 %v4737
      %4914 = vmatpush.msra.mxu0 %v4735
      %4915 = vmatpush.msra.mxu0 %v4733
      %4916 = vmatpush.msra.mxu0 %v4731
      %4917 = vmatpush.msra.mxu0 %v4729
      %4918 = vmatpush.msra.mxu0 %v4727
      %4919 = vmatpush.msra.mxu0 %v4725
      %4920 = vmatmul.f32.gmra.mxu0 %v4635
      %v4921 = vpop.f32.mrf.mxu0
      %v4922 = vadd.f32 %v4893, %v4921
      %4923 = vmatmul.f32.gmra.mxu0 %v4638
      %v4924 = vpop.f32.mrf.mxu0
      %v4925 = vadd.f32 %v4896, %v4924
      %4926 = vmatmul.f32.gmra.mxu0 %v4641
      %v4927 = vpop.f32.mrf.mxu0
      %v4928 = vadd.f32 %v4899, %v4927
      %4929 = vmatmul.f32.gmra.mxu0 %v4644
      %v4930 = vpop.f32.mrf.mxu0
      %v4931 = vadd.f32 %v4902, %v4930
      %4932 = vdwg.mxu0
      %4933 = vmatpush.msra.mxu0 %v4787
      %4934 = vmatpush.msra.mxu0 %v4785
      %4935 = vmatpush.msra.mxu0 %v4783
      %4936 = vmatpush.msra.mxu0 %v4781
      %4937 = vmatpush.msra.mxu0 %v4779
      %4938 = vmatpush.msra.mxu0 %v4777
      %4939 = vmatpush.msra.mxu0 %v4775
      %4940 = vmatpush.msra.mxu0 %v4773
      %4941 = vmatpush.msra.mxu0 %v4771
      %4942 = vmatpush.msra.mxu0 %v4769
      %4943 = vmatpush.msra.mxu0 %v4767
      %4944 = vmatpush.msra.mxu0 %v4765
      %4945 = vmatpush.msra.mxu0 %v4763
      %4946 = vmatpush.msra.mxu0 %v4761
      %4947 = vmatpush.msra.mxu0 %v4759
      %4948 = vmatpush.msra.mxu0 %v4757
      %4949 = vmatmul.f32.gmra.mxu0 %v4681
      %v4950 = vpop.f32.mrf.mxu0
      %v4951 = vadd.f32 %v4922, %v4950
      %4952 = vmatmul.f32.gmra.mxu0 %v4684
      %v4953 = vpop.f32.mrf.mxu0
      %v4954 = vadd.f32 %v4925, %v4953
      %4955 = vmatmul.f32.gmra.mxu0 %v4687
      %v4956 = vpop.f32.mrf.mxu0
      %v4957 = vadd.f32 %v4928, %v4956
      %4958 = vmatmul.f32.gmra.mxu0 %v4690
      %v4959 = vpop.f32.mrf.mxu0
      %v4960 = vadd.f32 %v4931, %v4959
      %4961 = vdwg.mxu0
      %v4962 = vmax.f32 %v4864, %v4870
      %v4963 = vmax.f32 %v4951, %v4957
      %v4964 = vmax.f32 %v4867, %v4873
      %v4965 = vmax.f32 %v4954, %v4960
      %v4966 = vmax.f32 %v4962, %v4963
      %v4967 = vmax.f32 %v4964, %v4965
      %v4968 = vld [vmem:[%s9] sm:$0x1]
      %v4970 = vperm.slane %v4968, 0
      %v4972 = vadd.f32 %v4966, %v4970
      %v4973 = vadd.f32 %v4967, %v4970
      %v4974 = vmax.f32 %v4972, 0.0
      %v4975 = vmax.f32 %v4973, 0.0
      %v4976 = vld [vmem:[%s10] sm:$0xff]
      %v4977 = vld [vmem:[%s10 + $0x8] sm:$0xff]
      %v4978 = vld [vmem:[%s10 + $0x10] sm:$0xff]
      %v4979 = vld [vmem:[%s10 + $0x18] sm:$0xff]
      %v4980 = vld [vmem:[%s10 + $0x20] sm:$0xff]
      %v4981 = vld [vmem:[%s10 + $0x28] sm:$0xff]
      %v4982 = vld [vmem:[%s10 + $0x30] sm:$0xff]
      %v4983 = vld [vmem:[%s10 + $0x38] sm:$0xff]
      %v4984 = vld [vmem:[%s10 + $0x40] sm:$0xff]
      %v4985 = vld [vmem:[%s10 + $0x48] sm:$0xff]
      %v4986 = vld [vmem:[%s10 + $0x50] sm:$0xff]
      %v4987 = vld [vmem:[%s10 + $0x58] sm:$0xff]
      %v4988 = vld [vmem:[%s10 + $0x60] sm:$0xff]
      %v4989 = vld [vmem:[%s10 + $0x68] sm:$0xff]
      %v4990 = vld [vmem:[%s10 + $0x70] sm:$0xff]
      %v4991 = vld [vmem:[%s10 + $0x78] sm:$0xff]
      %s4992 = scalar_lea.vmem %s10, 128
      %v4993 = vld [vmem:[%s4992] sm:$0xff]
      %v4994 = vld [vmem:[%s4992 + $0x8] sm:$0xff]
      %v4995 = vld [vmem:[%s4992 + $0x10] sm:$0xff]
      %v4996 = vld [vmem:[%s4992 + $0x18] sm:$0xff]
      %v4997 = vld [vmem:[%s4992 + $0x20] sm:$0xff]
      %v4998 = vld [vmem:[%s4992 + $0x28] sm:$0xff]
      %v4999 = vld [vmem:[%s4992 + $0x30] sm:$0xff]
      %v5000 = vld [vmem:[%s4992 + $0x38] sm:$0xff]
      %v5001 = vld [vmem:[%s4992 + $0x40] sm:$0xff]
      %v5002 = vld [vmem:[%s4992 + $0x48] sm:$0xff]
      %v5003 = vld [vmem:[%s4992 + $0x50] sm:$0xff]
      %v5004 = vld [vmem:[%s4992 + $0x58] sm:$0xff]
      %v5005 = vld [vmem:[%s4992 + $0x60] sm:$0xff]
      %v5006 = vld [vmem:[%s4992 + $0x68] sm:$0xff]
      %v5007 = vld [vmem:[%s4992 + $0x70] sm:$0xff]
      %v5008 = vld [vmem:[%s4992 + $0x78] sm:$0xff]
      %5009 = vmatpush.msra.mxu0 %v5008
      %5010 = vmatpush.msra.mxu0 %v5007
      %5011 = vmatpush.msra.mxu0 %v5006
      %5012 = vmatpush.msra.mxu0 %v5005
      %5013 = vmatpush.msra.mxu0 %v5004
      %5014 = vmatpush.msra.mxu0 %v5003
      %5015 = vmatpush.msra.mxu0 %v5002
      %5016 = vmatpush.msra.mxu0 %v5001
      %5017 = vmatpush.msra.mxu0 %v5000
      %5018 = vmatpush.msra.mxu0 %v4999
      %5019 = vmatpush.msra.mxu0 %v4998
      %5020 = vmatpush.msra.mxu0 %v4997
      %5021 = vmatpush.msra.mxu0 %v4996
      %5022 = vmatpush.msra.mxu0 %v4995
      %5023 = vmatpush.msra.mxu0 %v4994
      %5024 = vmatpush.msra.mxu0 %v4993
      %5025 = vmatmul.f32.gmra.mxu0 %v4975
      %v5026 = vpop.f32.mrf.mxu0
      %v5027 = vadd.f32 0.0, %v5026
      %5028 = vdwg.mxu0
      %5029 = vmatpush.msra.mxu0 %v4991
      %5030 = vmatpush.msra.mxu0 %v4990
      %5031 = vmatpush.msra.mxu0 %v4989
      %5032 = vmatpush.msra.mxu0 %v4988
      %5033 = vmatpush.msra.mxu0 %v4987
      %5034 = vmatpush.msra.mxu0 %v4986
      %5035 = vmatpush.msra.mxu0 %v4985
      %5036 = vmatpush.msra.mxu0 %v4984
      %5037 = vmatpush.msra.mxu0 %v4983
      %5038 = vmatpush.msra.mxu0 %v4982
      %5039 = vmatpush.msra.mxu0 %v4981
      %5040 = vmatpush.msra.mxu0 %v4980
      %5041 = vmatpush.msra.mxu0 %v4979
      %5042 = vmatpush.msra.mxu0 %v4978
      %5043 = vmatpush.msra.mxu0 %v4977
      %5044 = vmatpush.msra.mxu0 %v4976
      %5045 = vmatmul.f32.gmra.mxu0 %v4974
      %v5046 = vpop.f32.mrf.mxu0
      %v5047 = vadd.f32 %v5027, %v5046
      %5048 = vdwg.mxu0
      %v5049 = vld [vmem:[%s11] sm:$0x1]
      %v5051 = vperm.slane %v5049, 0
      %v5053 = vadd.f32 %v5047, %v5051
      %v5054 = vld [vmem:[%s12] sm:$0xff]
      %v5055 = vld [vmem:[%s12 + $0x8] sm:$0xff]
      %v5056 = vld [vmem:[%s12 + $0x10] sm:$0xff]
      %v5057 = vld [vmem:[%s13] sm:$0x1]
      %v5059 = vperm.slane %v5057, 0
      %vm5061 = vcmask 195584
      %v5063 = vsel %vm5061, %v5053, 0
      %5065 = vmatpush.msra.mxu0 0.0
      %5066 = vmatpush.msra.mxu0 0.0
      %5067 = vmatpush.msra.mxu0 0.0
      %5068 = vmatpush.msra.mxu0 0.0
      %5069 = vmatpush.msra.mxu0 0.0
      %5070 = vmatpush.msra.mxu0 0.0
      %5071 = vmatpush.msra.mxu0 0.0
      %5072 = vmatpush.msra.mxu0 0.0
      %5073 = vmatpush.msra.mxu0 0.0
      %5074 = vmatpush.msra.mxu0 0.0
      %5075 = vmatpush.msra.mxu0 0.0
      %5076 = vmatpush.msra.mxu0 0.0
      %5077 = vmatpush.msra.mxu0 0.0
      %5078 = vmatpush.msra.mxu0 %v5056
      %5079 = vmatpush.msra.mxu0 %v5055
      %5080 = vmatpush.msra.mxu0 %v5054
      %5081 = vmatmul.f32.gmra.mxu0 %v5063
      %v5082 = vpop.f32.mrf.mxu0
      %v5083 = vadd.f32 %v5059, %v5082
      %5084 = vdwg.mxu0
      %v5085 = vmax.f32 %v5083, 0.0
      %vm5086 = vcmask 80896
      %5087 = vst.msk [vmem:[%s467] sm:$0xff] %vm5086, %v5085
      %p5088 = scmp.lt.s32.totalorder %s25, 7
      %s5089 = scalar_select %p5088, %s25, 7
      %s5090 = smul.addr %s5089, 8
      %s5091 = scalar_lea.vmem %s14, %s5090
      // Predicated region
      $region77: #{net_forward.1} parent=75 // pred_check
        %p5092 = pneg %p342
      $region78: #{net_forward.1} parent=75 // pred_check_branch
        %5094 = sbr.rel (%p5092) target = $region80
      $region79: #{net_forward.1} parent=75 // pred_region
        _
      $region80: #{net_forward.1} parent=75 // pred_fallthru
        _
    $region76: #{net_forward.1} parent=5 // pred_fallthru
      _
    %p5095 = scmp.le.s32.totalorder 2, %s20
    // Predicated region
    $region81: #{net_forward.1} parent=5 // pred_check
      %p5096 = pneg %p5095
    $region82: #{net_forward.1} parent=5 // pred_check_branch
      %5098 = sbr.rel (%p5096) target = $region84
    $region83: #{net_forward.1} parent=5 // pred_region
      %s5099 = ssub.s32 %s20, 2
      // Predicated region
      $region85: #{net_forward.1} parent=83 // pred_check
        %p5100 = pneg %p348
      $region86: #{net_forward.1} parent=83 // pred_check_branch
        %5102 = sbr.rel (%p5100) target = $region88
      $region87: #{net_forward.1} parent=83 // pred_region
        %p5103 = scmp.lt.s32.totalorder %s26, 7
        %s5104 = scalar_select %p5103, %s26, 7
        %s5105 = smul.addr %s5104, 8
        %s5106 = scalar_lea.vmem %s14, %s5105
      $region88: #{net_forward.1} parent=83 // pred_fallthru
        _
    $region84: #{net_forward.1} parent=5 // pred_fallthru
      _
  $region6: #{net_forward.1} parent=0 // loop_footer
    %s24 = sadd.s32 1, %s20
  $region7: #{net_forward.1} parent=0 // loop_footer_branch
    %19 = sbr.rel target = $region3
  $region8: #{net_forward.1} parent=0 // loop_exit
    _

</llo_original>
